<compile_context>
chip_gen: v5e
topology: v5e:2x2
jax: 0.10.0
libtpu: 0.0.40
codegen_flags: <defaults>
</compile_context>

<pallas_src>
import jax
import jax.numpy as jnp
from jax.experimental import pallas as pl
from jax.experimental.pallas import tpu as pltpu

C_IN, C_MID, C_OUT = 336, 112, 672
C_HALF = C_OUT // 2          # conv2 / BN2 output-channel split per grid step
EPS = 1e-5

# Offsets into the packed [N_PACK, 1] small-params column vector.
OFF_S = 0                      # pre-sigmoid gate  [C_IN]
OFF_G1 = C_IN                  # BN1 gamma         [C_MID]
OFF_B1 = C_IN + C_MID          # BN1 beta          [C_MID]
OFF_G2 = C_IN + 2 * C_MID      # BN2 gamma         [C_OUT]
OFF_B2 = OFF_G2 + C_OUT        # BN2 beta          [C_OUT]
N_PACK = OFF_B2 + C_OUT        # = 1904  (multiple of 8)


def _make_kernel(P):
    inv_p = 1.0 / float(P)

    def kernel(prm_ref, x_ref, w1_ref, w2_ref, out_ref):
        # prm_ref: [N_PACK, 1]   packed gate + BN params (column orientation)
        # x_ref  : [C_IN, P]     activations, native NCHW flattening
        # w1_ref : [C_MID, C_IN] torch-native conv1 weight
        # w2_ref : [C_HALF, C_MID] this step's half of the conv2 weight
        # out_ref: [C_HALF, P]
        half = pl.program_id(0)

        # ---- sigmoid gate * x (per-input-channel, broadcast over lanes) ----
        gate = jax.nn.sigmoid(prm_ref[pl.ds(OFF_S, C_IN), :])       # [C_IN, 1]
        xg = x_ref[...] * gate                                      # [C_IN, P]

        # ---- 1x1 conv #1 on the MXU: [C_MID,C_IN] @ [C_IN,P] ---------------
        y1 = jnp.dot(w1_ref[...], xg,
                     preferred_element_type=jnp.float32)            # [C_MID,P]

        # ---- BN1 (training: biased batch stats), single pass in f32 --------
        m1 = jnp.sum(y1, axis=1, keepdims=True) * inv_p
        v1 = jnp.maximum(
            jnp.sum(y1 * y1, axis=1, keepdims=True) * inv_p - m1 * m1, 0.0)
        g1 = prm_ref[pl.ds(OFF_G1, C_MID), :]
        b1 = prm_ref[pl.ds(OFF_B1, C_MID), :]
        y1 = (y1 - m1) * jax.lax.rsqrt(v1 + EPS) * g1 + b1

        # ---- 1x1 conv #2 (this C_OUT half): [C_HALF,C_MID] @ [C_MID,P] -----
        y2 = jnp.dot(w2_ref[...], y1,
                     preferred_element_type=jnp.float32)            # [C_HALF,P]

        # ---- BN2 (per-channel over P -> exact under the C_OUT split) -------
        m2 = jnp.sum(y2, axis=1, keepdims=True) * inv_p
        v2 = jnp.maximum(
            jnp.sum(y2 * y2, axis=1, keepdims=True) * inv_p - m2 * m2, 0.0)
        g2 = prm_ref[pl.ds(pl.multiple_of(OFF_G2 + half * C_HALF, 8), C_HALF), :]
        b2 = prm_ref[pl.ds(pl.multiple_of(OFF_B2 + half * C_HALF, 8), C_HALF), :]
        out_ref[...] = (y2 - m2) * jax.lax.rsqrt(v2 + EPS) * g2 + b2

    return kernel


def se_conv_bn(x161, x157, w1, g1, b1, w2, g2, b2):
    """x161: [N, C_IN, 1, 1] pre-sigmoid gate; x157: [N, C_IN, H, W]."""
    N, C, H, W = x157.shape
    assert C == C_IN
    # Per-sample gating + the free [C, N*H*W] reshape assume N == 1 (the
    # module's fixed input shape); N > 1 would need per-sample handling.
    assert N == 1, "kernel assumes batch size 1 (per-sample SE gate)"
    P = H * W

    # Free reshapes (contiguous, no transposes) + one tiny ~7.6 KB concat that
    # packs all per-channel vectors into a single pallas operand.
    x_cp = x157.reshape(C_IN, P)                       # [C_IN, P]
    w1_2d = w1.reshape(C_MID, C_IN)                    # torch-native layout
    w2_2d = w2.reshape(C_OUT, C_MID)
    params = jnp.concatenate([
        x161.reshape(C_IN),
        g1.reshape(C_MID), b1.reshape(C_MID),
        g2.reshape(C_OUT), b2.reshape(C_OUT),
    ]).astype(jnp.float32).reshape(N_PACK, 1)

    # conv1 is recomputed on both grid steps (cheap) to keep steps independent.
    flops = 2 * P * (2 * C_MID * C_IN + C_OUT * C_MID)
    bytes_accessed = 4 * (C_IN * P + C_MID * C_IN + C_OUT * C_MID
                          + C_OUT * P + N_PACK)
    cost = pl.CostEstimate(flops=flops,
                           transcendentals=C_IN + 2 * C_MID + C_OUT,
                           bytes_accessed=bytes_accessed)

    out_cp = pl.pallas_call(
        _make_kernel(P),
        out_shape=jax.ShapeDtypeStruct((C_OUT, P), jnp.float32),
        grid=(2,),
        in_specs=[
            pl.BlockSpec((N_PACK, 1), lambda i: (0, 0)),       # packed params
            pl.BlockSpec((C_IN, P), lambda i: (0, 0)),         # activations
            pl.BlockSpec((C_MID, C_IN), lambda i: (0, 0)),     # conv1 weight
            pl.BlockSpec((C_HALF, C_MID), lambda i: (i, 0)),   # conv2 half
        ],
        out_specs=pl.BlockSpec((C_HALF, P), lambda i: (i, 0)),
        compiler_params=pltpu.CompilerParams(
            dimension_semantics=("parallel",)),
        cost_estimate=cost,
    )(params, x_cp, w1_2d, w2_2d)

    # [C_OUT, P] -> [1, C_OUT, H, W]  (free reshape, NCHW already)
    return out_cp.reshape(N, C_OUT, H, W)


def _reference(x161, x157, w1, g1, b1, w2, g2, b2):
    """Pure-JAX mirror of the PyTorch forward (training-mode BN)."""
    dn = ("NCHW", "OIHW", "NCHW")

    def bn(y, g, b):
        m = jnp.mean(y, axis=(0, 2, 3), keepdims=True)
        v = jnp.mean((y - m) ** 2, axis=(0, 2, 3), keepdims=True)
        return ((y - m) * jax.lax.rsqrt(v + EPS) * g.reshape(1, -1, 1, 1)
                + b.reshape(1, -1, 1, 1))

    xg = jax.nn.sigmoid(x161) * x157
    y1 = jax.lax.conv_general_dilated(xg, w1, (1, 1), "VALID",
                                      dimension_numbers=dn)
    y1 = bn(y1, g1, b1)
    y2 = jax.lax.conv_general_dilated(y1, w2, (1, 1), "VALID",
                                      dimension_numbers=dn)
    return bn(y2, g2, b2)


if __name__ == "__main__":
    key = jax.random.PRNGKey(0)
    k = jax.random.split(key, 8)

    # Inputs (shapes fixed by the module's forward)
    x157 = jax.random.normal(k[0], (1, C_IN, 14, 14), dtype=jnp.float32)
    x161 = jax.random.normal(k[1], (1, C_IN, 1, 1), dtype=jnp.float32)

    # Deterministic synthetic parameters (torch-native layouts)
    w1 = 0.05 * jax.random.normal(k[2], (C_MID, C_IN, 1, 1), dtype=jnp.float32)
    g1 = 1.0 + 0.1 * jax.random.normal(k[3], (C_MID,), dtype=jnp.float32)
    b1 = 0.1 * jax.random.normal(k[4], (C_MID,), dtype=jnp.float32)
    w2 = 0.05 * jax.random.normal(k[5], (C_OUT, C_MID, 1, 1), dtype=jnp.float32)
    g2 = 1.0 + 0.1 * jax.random.normal(k[6], (C_OUT,), dtype=jnp.float32)
    b2 = 0.1 * jax.random.normal(k[7], (C_OUT,), dtype=jnp.float32)

    out = se_conv_bn(x161, x157, w1, g1, b1, w2, g2, b2)
    jax.block_until_ready(out)
    assert out.shape == (1, C_OUT, 14, 14), out.shape

    # Quiet self-check against the pure-JAX reference (loose f32 tolerance).
    ref = _reference(x161, x157, w1, g1, b1, w2, g2, b2)
    assert bool(jnp.all(jnp.isfinite(out)))
    max_err = float(jnp.max(jnp.abs(out - ref)))
    assert max_err < 5e-2, f"max abs error vs reference: {max_err}"

    print("KERNEL_OK")
</pallas_src>

<mosaic_0001>
module attributes {stable_mosaic.version = 11 : i64} {
  func.func @kernel(%arg0: i32, %arg1: memref<1904x1xf32, #tpu.memory_space<vmem>>, %arg2: memref<336x196xf32, #tpu.memory_space<vmem>>, %arg3: memref<112x336xf32, #tpu.memory_space<vmem>>, %arg4: memref<336x112xf32, #tpu.memory_space<vmem>>, %arg5: memref<336x196xf32, #tpu.memory_space<vmem>>) attributes {dimension_semantics = [#tpu.dimension_semantics<parallel>], iteration_bounds = array<i64: 2>, scalar_prefetch = 0 : i64, scratch_operands = 0 : i64, tpu.core_type = #tpu.core_type<tc>, window_params = [{pipeline_mode = #tpu.pipeline_mode<synchronous>, transform_indices = @transform_0, window_bounds = array<i64: 1904, 1>}, {pipeline_mode = #tpu.pipeline_mode<synchronous>, transform_indices = @transform_1, window_bounds = array<i64: 336, 196>}, {pipeline_mode = #tpu.pipeline_mode<synchronous>, transform_indices = @transform_2, window_bounds = array<i64: 112, 336>}, {transform_indices = @transform_3, window_bounds = array<i64: 336, 112>}, {transform_indices = @transform_4, window_bounds = array<i64: 336, 196>}]} {
    %c0 = arith.constant 0 : index
    %c0_0 = arith.constant 0 : index
    %0 = vector.load %arg1[%c0, %c0_0] : memref<1904x1xf32, #tpu.memory_space<vmem>>, vector<336x1xf32>
    %1 = arith.negf %0 : vector<336x1xf32>
    %2 = math.exp %1 : vector<336x1xf32>
    %cst = arith.constant 1.000000e+00 : f32
    %3 = vector.broadcast %cst : f32 to vector<336x1xf32>
    %4 = arith.addf %3, %2 : vector<336x1xf32>
    %5 = arith.divf %3, %4 : vector<336x1xf32>
    %c0_1 = arith.constant 0 : index
    %c0_2 = arith.constant 0 : index
    %6 = vector.load %arg2[%c0_1, %c0_2] : memref<336x196xf32, #tpu.memory_space<vmem>>, vector<336x196xf32>
    %7 = vector.broadcast %5 : vector<336x1xf32> to vector<336x196xf32>
    %8 = arith.mulf %6, %7 : vector<336x196xf32>
    %c0_3 = arith.constant 0 : index
    %c0_4 = arith.constant 0 : index
    %9 = vector.load %arg3[%c0_3, %c0_4] : memref<112x336xf32, #tpu.memory_space<vmem>>, vector<112x336xf32>
    %cst_5 = arith.constant dense<0.000000e+00> : vector<112x196xf32>
    %10 = tpu.matmul %9, %8, %cst_5 {dimension_numbers = #tpu.dot_dimension_numbers<[1], [0], [0], [1], [0, 0, 1, 1], [], []>} : vector<112x336xf32>, vector<336x196xf32>, vector<112x196xf32> -> vector<112x196xf32>
    %cst_6 = arith.constant dense<0.000000e+00> : vector<112xf32>
    %11 = vector.multi_reduction <add>, %10, %cst_6 [1] : vector<112x196xf32> to vector<112xf32>
    %12 = vector.shape_cast %11 : vector<112xf32> to vector<112x1xf32>
    %cst_7 = arith.constant 0.00510204071 : f32
    %13 = vector.broadcast %cst_7 : f32 to vector<112x1xf32>
    %14 = arith.mulf %12, %13 : vector<112x1xf32>
    %15 = arith.mulf %10, %10 : vector<112x196xf32>
    %cst_8 = arith.constant dense<0.000000e+00> : vector<112xf32>
    %16 = vector.multi_reduction <add>, %15, %cst_8 [1] : vector<112x196xf32> to vector<112xf32>
    %17 = vector.shape_cast %16 : vector<112xf32> to vector<112x1xf32>
    %cst_9 = arith.constant 0.00510204071 : f32
    %18 = vector.broadcast %cst_9 : f32 to vector<112x1xf32>
    %19 = arith.mulf %17, %18 : vector<112x1xf32>
    %20 = arith.mulf %14, %14 : vector<112x1xf32>
    %21 = arith.subf %19, %20 : vector<112x1xf32>
    %cst_10 = arith.constant 0.000000e+00 : f32
    %22 = vector.broadcast %cst_10 : f32 to vector<112x1xf32>
    %23 = arith.maximumf %21, %22 : vector<112x1xf32>
    %c336 = arith.constant 336 : index
    %c0_11 = arith.constant 0 : index
    %24 = vector.load %arg1[%c336, %c0_11] : memref<1904x1xf32, #tpu.memory_space<vmem>>, vector<112x1xf32>
    %c448 = arith.constant 448 : index
    %c0_12 = arith.constant 0 : index
    %25 = vector.load %arg1[%c448, %c0_12] : memref<1904x1xf32, #tpu.memory_space<vmem>>, vector<112x1xf32>
    %26 = vector.broadcast %14 : vector<112x1xf32> to vector<112x196xf32>
    %27 = arith.subf %10, %26 : vector<112x196xf32>
    %cst_13 = arith.constant 9.99999974E-6 : f32
    %28 = vector.broadcast %cst_13 : f32 to vector<112x1xf32>
    %29 = arith.addf %23, %28 : vector<112x1xf32>
    %30 = math.rsqrt %29 : vector<112x1xf32>
    %31 = vector.broadcast %30 : vector<112x1xf32> to vector<112x196xf32>
    %32 = arith.mulf %27, %31 : vector<112x196xf32>
    %33 = vector.broadcast %24 : vector<112x1xf32> to vector<112x196xf32>
    %34 = arith.mulf %32, %33 : vector<112x196xf32>
    %35 = vector.broadcast %25 : vector<112x1xf32> to vector<112x196xf32>
    %36 = arith.addf %34, %35 : vector<112x196xf32>
    %c0_14 = arith.constant 0 : index
    %c0_15 = arith.constant 0 : index
    %37 = vector.load %arg4[%c0_14, %c0_15] : memref<336x112xf32, #tpu.memory_space<vmem>>, vector<336x112xf32>
    %cst_16 = arith.constant dense<0.000000e+00> : vector<336x196xf32>
    %38 = tpu.matmul %37, %36, %cst_16 {dimension_numbers = #tpu.dot_dimension_numbers<[1], [0], [0], [1], [0, 0, 1, 1], [], []>} : vector<336x112xf32>, vector<112x196xf32>, vector<336x196xf32> -> vector<336x196xf32>
    %cst_17 = arith.constant dense<0.000000e+00> : vector<336xf32>
    %39 = vector.multi_reduction <add>, %38, %cst_17 [1] : vector<336x196xf32> to vector<336xf32>
    %40 = vector.shape_cast %39 : vector<336xf32> to vector<336x1xf32>
    %cst_18 = arith.constant 0.00510204071 : f32
    %41 = vector.broadcast %cst_18 : f32 to vector<336x1xf32>
    %42 = arith.mulf %40, %41 : vector<336x1xf32>
    %43 = arith.mulf %38, %38 : vector<336x196xf32>
    %cst_19 = arith.constant dense<0.000000e+00> : vector<336xf32>
    %44 = vector.multi_reduction <add>, %43, %cst_19 [1] : vector<336x196xf32> to vector<336xf32>
    %45 = vector.shape_cast %44 : vector<336xf32> to vector<336x1xf32>
    %cst_20 = arith.constant 0.00510204071 : f32
    %46 = vector.broadcast %cst_20 : f32 to vector<336x1xf32>
    %47 = arith.mulf %45, %46 : vector<336x1xf32>
    %48 = arith.mulf %42, %42 : vector<336x1xf32>
    %49 = arith.subf %47, %48 : vector<336x1xf32>
    %cst_21 = arith.constant 0.000000e+00 : f32
    %50 = vector.broadcast %cst_21 : f32 to vector<336x1xf32>
    %51 = arith.maximumf %49, %50 : vector<336x1xf32>
    %c336_i32 = arith.constant 336 : i32
    %52 = arith.muli %arg0, %c336_i32 : i32
    %c560_i32 = arith.constant 560 : i32
    %53 = arith.addi %c560_i32, %52 : i32
    %54 = tpu.assume_multiple %53, 8 : i32
    %55 = arith.index_cast %54 : i32 to index
    %c0_22 = arith.constant 0 : index
    %56 = vector.load %arg1[%55, %c0_22] : memref<1904x1xf32, #tpu.memory_space<vmem>>, vector<336x1xf32>
    %c336_i32_23 = arith.constant 336 : i32
    %57 = arith.muli %arg0, %c336_i32_23 : i32
    %c1232_i32 = arith.constant 1232 : i32
    %58 = arith.addi %c1232_i32, %57 : i32
    %59 = tpu.assume_multiple %58, 8 : i32
    %60 = arith.index_cast %59 : i32 to index
    %c0_24 = arith.constant 0 : index
    %61 = vector.load %arg1[%60, %c0_24] : memref<1904x1xf32, #tpu.memory_space<vmem>>, vector<336x1xf32>
    %62 = vector.broadcast %42 : vector<336x1xf32> to vector<336x196xf32>
    %63 = arith.subf %38, %62 : vector<336x196xf32>
    %cst_25 = arith.constant 9.99999974E-6 : f32
    %64 = vector.broadcast %cst_25 : f32 to vector<336x1xf32>
    %65 = arith.addf %51, %64 : vector<336x1xf32>
    %66 = math.rsqrt %65 : vector<336x1xf32>
    %67 = vector.broadcast %66 : vector<336x1xf32> to vector<336x196xf32>
    %68 = arith.mulf %63, %67 : vector<336x196xf32>
    %69 = vector.broadcast %56 : vector<336x1xf32> to vector<336x196xf32>
    %70 = arith.mulf %68, %69 : vector<336x196xf32>
    %71 = vector.broadcast %61 : vector<336x1xf32> to vector<336x196xf32>
    %72 = arith.addf %70, %71 : vector<336x196xf32>
    %c0_26 = arith.constant 0 : index
    %c0_27 = arith.constant 0 : index
    %73 = vector.load %arg5[%c0_26, %c0_27] : memref<336x196xf32, #tpu.memory_space<vmem>>, vector<336x196xf32>
    tpu.vector_store %arg5[%c0_26, %c0_27], %72 {strides = array<i32>} : memref<336x196xf32, #tpu.memory_space<vmem>>, vector<336x196xf32>,
    return
  }
  func.func @transform_0(%arg0: i32) -> (i32, i32) {
    %c0_i32 = arith.constant 0 : i32
    %c0_i32_0 = arith.constant 0 : i32
    %c0_i32_1 = arith.constant 0 : i32
    return %c0_i32, %c0_i32_0 : i32, i32
  }
  func.func @transform_1(%arg0: i32) -> (i32, i32) {
    %c0_i32 = arith.constant 0 : i32
    %c0_i32_0 = arith.constant 0 : i32
    %c0_i32_1 = arith.constant 0 : i32
    return %c0_i32, %c0_i32_0 : i32, i32
  }
  func.func @transform_2(%arg0: i32) -> (i32, i32) {
    %c0_i32 = arith.constant 0 : i32
    %c0_i32_0 = arith.constant 0 : i32
    %c0_i32_1 = arith.constant 0 : i32
    return %c0_i32, %c0_i32_0 : i32, i32
  }
  func.func @transform_3(%arg0: i32) -> (i32, i32) {
    %c0_i32 = arith.constant 0 : i32
    %c0_i32_0 = arith.constant 0 : i32
    return %arg0, %c0_i32 : i32, i32
  }
  func.func @transform_4(%arg0: i32) -> (i32, i32) {
    %c0_i32 = arith.constant 0 : i32
    %c0_i32_0 = arith.constant 0 : i32
    return %arg0, %c0_i32 : i32, i32
  }
}

</mosaic_0001>

<llo_original>
// kernel: tpu_custom_call.1
$region0: #{tpu_custom_call.1}
  #allocation0 [shape = 'u32[]', space=smem, size = 0x4, offset = 0x4, fixed_abs, tag = 'smem constant byte address 0x4 - core index']
  #allocation1 [shape = 'u32[72,128]{1,0:T(1,128)}', space=vmem, size = 0x9000, scoped, tag = 'internal scratch']
  %s0 = inlined_call_operand.vmem [shape: f32[1904,1], index: 0, kind: input, shape index: {}]
  %s1 = inlined_call_operand.vmem [shape: f32[336,196], index: 1, kind: input, shape index: {}]
  %s2 = inlined_call_operand.vmem [shape: f32[112,336], index: 2, kind: input, shape index: {}]
  %s3 = inlined_call_operand.vmem [shape: f32[672,112], index: 3, kind: input, shape index: {}]
  %s4 = inlined_call_operand.vmem [shape: f32[672,196], index: 4, kind: output, shape index: {}]
  %s5 = sld [smem:[#allocation0]]
  $region49: #{tpu_custom_call.1} parent=0
    _
  %s7 = ssub.s32 1, %s5
  %s8 = scalar_select 0, %s7, %s5
  loop: start=0, step=1, limit=4
  $region2: #{tpu_custom_call.1} parent=0 // loop_pre_header
    _
  $region3: #{tpu_custom_call.1} parent=0 // loop_header
    %s10 = sphi 0, %s14
    %p11 = scmp.ge.s32.totalorder %s10, 4
    %s18 = sphi 0, %s18
    %s20 = sphi 0, %s18
    %s21 = sphi 0, %s20
    %s35 = sphi 0, %s21
    %s39 = sphi 0, %s39
    %s41 = sphi 0, %s39
    %s42 = sphi 0, %s41
    %s56 = sphi 0, %s42
    %s60 = sphi 0, %s60
    %s62 = sphi 0, %s60
    %s63 = sphi 0, %s62
    %s77 = sphi 0, %s63
    %s83 = sphi 0, %s85
    %s86 = sphi 0, %s83
    %s87 = sphi 0, %s86
    %s103 = sphi 0, %s87
    %s109 = sphi 0, %s111
    %s112 = sphi 0, %s109
    %s113 = sphi 0, %s112
    %s129 = sphi 0, %s113
  $region4: #{tpu_custom_call.1} parent=0 // loop_header_branch
    %13 = sbr.rel (%p11) target = $region8
  $region5: #{tpu_custom_call.1} parent=0 // loop_body
    %s15 = ssub.s32 %s10, 1
    %s16 = ssub.s32 %s10, 2
    %s17 = sadd.s32 %s10, 1
    %s19 = sadd.s32 %s18, 1
    %p22 = scmp.eq.s32.totalorder %s10, 1
    %p23 = scmp.ne.s32.totalorder %s18, %s20
    %p24 = scmp.eq.s32.totalorder %s10, 0
    %p25 = por %p23, %p24
    %p26 = scmp.ne.s32.totalorder %s18, %s20
    %p27 = scmp.eq.s32.totalorder %s15, 1
    %p28 = por %p26, %p27
    %p29 = scmp.ne.s32.totalorder %s20, %s21
    %p30 = scmp.eq.s32.totalorder %s15, 0
    %p31 = por %p29, %p30
    %p32 = scmp.ne.s32.totalorder %s20, %s21
    %p33 = scmp.eq.s32.totalorder %s16, 1
    %p34 = por %p32, %p33
    %p36 = scmp.ne.s32.totalorder %s21, %s35
    %p37 = scmp.eq.s32.totalorder %s16, 0
    %p38 = por %p36, %p37
    %s40 = sadd.s32 %s39, 1
    %p43 = scmp.eq.s32.totalorder %s10, 1
    %p44 = scmp.ne.s32.totalorder %s39, %s41
    %p45 = scmp.eq.s32.totalorder %s10, 0
    %p46 = por %p44, %p45
    %p47 = scmp.ne.s32.totalorder %s39, %s41
    %p48 = scmp.eq.s32.totalorder %s15, 1
    %p49 = por %p47, %p48
    %p50 = scmp.ne.s32.totalorder %s41, %s42
    %p51 = scmp.eq.s32.totalorder %s15, 0
    %p52 = por %p50, %p51
    %p53 = scmp.ne.s32.totalorder %s41, %s42
    %p54 = scmp.eq.s32.totalorder %s16, 1
    %p55 = por %p53, %p54
    %p57 = scmp.ne.s32.totalorder %s42, %s56
    %p58 = scmp.eq.s32.totalorder %s16, 0
    %p59 = por %p57, %p58
    %s61 = sadd.s32 %s60, 1
    %p64 = scmp.eq.s32.totalorder %s10, 1
    %p65 = scmp.ne.s32.totalorder %s60, %s62
    %p66 = scmp.eq.s32.totalorder %s10, 0
    %p67 = por %p65, %p66
    %p68 = scmp.ne.s32.totalorder %s60, %s62
    %p69 = scmp.eq.s32.totalorder %s15, 1
    %p70 = por %p68, %p69
    %p71 = scmp.ne.s32.totalorder %s62, %s63
    %p72 = scmp.eq.s32.totalorder %s15, 0
    %p73 = por %p71, %p72
    %p74 = scmp.ne.s32.totalorder %s62, %s63
    %p75 = scmp.eq.s32.totalorder %s16, 1
    %p76 = por %p74, %p75
    %p78 = scmp.ne.s32.totalorder %s63, %s77
    %p79 = scmp.eq.s32.totalorder %s16, 0
    %p80 = por %p78, %p79
    %s81 = ssub.s32 %s10, %s17
    %p82 = scmp.eq.s32.totalorder %s81, 0
    %s84 = sadd.s32 %s83, 1
    %s85 = scalar_select %p82, %s83, %s84
    %p88 = pneg %p82
    %p89 = scmp.eq.s32.totalorder %s10, 1
    %p90 = por %p88, %p89
    %p91 = scmp.ne.s32.totalorder %s83, %s86
    %p92 = scmp.eq.s32.totalorder %s10, 0
    %p93 = por %p91, %p92
    %p94 = scmp.ne.s32.totalorder %s83, %s86
    %p95 = scmp.eq.s32.totalorder %s15, 1
    %p96 = por %p94, %p95
    %p97 = scmp.ne.s32.totalorder %s86, %s87
    %p98 = scmp.eq.s32.totalorder %s15, 0
    %p99 = por %p97, %p98
    %p100 = scmp.ne.s32.totalorder %s86, %s87
    %p101 = scmp.eq.s32.totalorder %s16, 1
    %p102 = por %p100, %p101
    %p104 = scmp.ne.s32.totalorder %s87, %s103
    %p105 = scmp.eq.s32.totalorder %s16, 0
    %p106 = por %p104, %p105
    %s107 = ssub.s32 %s10, %s17
    %p108 = scmp.eq.s32.totalorder %s107, 0
    %s110 = sadd.s32 %s109, 1
    %s111 = scalar_select %p108, %s109, %s110
    %p114 = pneg %p108
    %p115 = scmp.eq.s32.totalorder %s10, 1
    %p116 = por %p114, %p115
    %p117 = scmp.ne.s32.totalorder %s109, %s112
    %p118 = scmp.eq.s32.totalorder %s10, 0
    %p119 = por %p117, %p118
    %p120 = scmp.ne.s32.totalorder %s109, %s112
    %p121 = scmp.eq.s32.totalorder %s15, 1
    %p122 = por %p120, %p121
    %p123 = scmp.ne.s32.totalorder %s112, %s113
    %p124 = scmp.eq.s32.totalorder %s15, 0
    %p125 = por %p123, %p124
    %p126 = scmp.ne.s32.totalorder %s112, %s113
    %p127 = scmp.eq.s32.totalorder %s16, 1
    %p128 = por %p126, %p127
    %p130 = scmp.ne.s32.totalorder %s113, %s129
    %p131 = scmp.eq.s32.totalorder %s16, 0
    %p132 = por %p130, %p131
    %p133 = scmp.le.s32.totalorder 1, %s10
    %p134 = scmp.lt.s32.totalorder %s10, 3
    %p135 = pnand %p133, %p134
    %p136 = pneg %p135
    // Predicated region
    $region9: #{tpu_custom_call.1} parent=5 // pred_check
      _
    $region10: #{tpu_custom_call.1} parent=5 // pred_check_branch
      %138 = sbr.rel (%p135) target = $region12
    $region11: #{tpu_custom_call.1} parent=5 // pred_region
      %s139 = ssub.s32 %s10, 1
      // Predicated region
      $region13: #{tpu_custom_call.1} parent=11 // pred_check
        %p140 = pneg %p31
      $region14: #{tpu_custom_call.1} parent=11 // pred_check_branch
        %142 = sbr.rel (%p140) target = $region16
      $region15: #{tpu_custom_call.1} parent=11 // pred_region
        _
      $region16: #{tpu_custom_call.1} parent=11 // pred_fallthru
        _
      // Predicated region
      $region17: #{tpu_custom_call.1} parent=11 // pred_check
        %p143 = pneg %p52
      $region18: #{tpu_custom_call.1} parent=11 // pred_check_branch
        %145 = sbr.rel (%p143) target = $region20
      $region19: #{tpu_custom_call.1} parent=11 // pred_region
        _
      $region20: #{tpu_custom_call.1} parent=11 // pred_fallthru
        _
      // Predicated region
      $region21: #{tpu_custom_call.1} parent=11 // pred_check
        %p146 = pneg %p73
      $region22: #{tpu_custom_call.1} parent=11 // pred_check_branch
        %148 = sbr.rel (%p146) target = $region24
      $region23: #{tpu_custom_call.1} parent=11 // pred_region
        _
      $region24: #{tpu_custom_call.1} parent=11 // pred_fallthru
        _
    $region12: #{tpu_custom_call.1} parent=5 // pred_fallthru
      _
    %p149 = scmp.lt.s32.totalorder %s10, 2
    // Predicated region
    $region25: #{tpu_custom_call.1} parent=5 // pred_check
      %p150 = pneg %p149
    $region26: #{tpu_custom_call.1} parent=5 // pred_check_branch
      %152 = sbr.rel (%p150) target = $region28
    $region27: #{tpu_custom_call.1} parent=5 // pred_region
      // Predicated region
      $region29: #{tpu_custom_call.1} parent=27 // pred_check
        %p153 = pneg %p93
      $region30: #{tpu_custom_call.1} parent=27 // pred_check_branch
        %155 = sbr.rel (%p153) target = $region32
      $region31: #{tpu_custom_call.1} parent=27 // pred_region
        %s156 = smul.u32 42, %s10
        %p157 = scmp.lt.s32.totalorder %s156, 83
        %s158 = scalar_select %p157, %s156, 83
        %s159 = smul.addr %s158, 8
        %s160 = scalar_lea.vmem %s3, %s159
        %s161 = smul.u32 42, %s10
      $region32: #{tpu_custom_call.1} parent=27 // pred_fallthru
        _
    $region28: #{tpu_custom_call.1} parent=5 // pred_fallthru
      _
    %p162 = scmp.le.s32.totalorder 1, %s10
    %p163 = scmp.lt.s32.totalorder %s10, 3
    %p164 = pnand %p162, %p163
    %p165 = pneg %p164
    // Predicated region
    $region33: #{tpu_custom_call.1} parent=5 // pred_check
      _
    $region34: #{tpu_custom_call.1} parent=5 // pred_check_branch
      %167 = sbr.rel (%p164) target = $region36
    $region35: #{tpu_custom_call.1} parent=5 // pred_region
      %s168 = ssub.s32 %s10, 1
      %p169 = pneg %p31
      %p170 = pneg %p28
      %p171 = pneg %p52
      %p172 = pneg %p49
      %p173 = pneg %p73
      %p174 = pneg %p70
      %s175 = smul.u32 42, %s15
      %p176 = scmp.lt.s32.totalorder %s175, 83
      %s177 = scalar_select %p176, %s175, 83
      %s178 = smul.addr %s177, 8
      %s179 = scalar_lea.vmem %s3, %s178
      %p180 = pneg %p99
      %p181 = pneg %p96
      %p182 = pneg %p125
      %p183 = pneg %p122
      %s184 = smul.u32 42, %s15
      %p185 = scmp.lt.s32.totalorder %s184, 83
      %s186 = scalar_select %p185, %s184, 83
      %s187 = smul.addr %s186, 2
      %s188 = smul.addr %s187, 8
      %s189 = scalar_lea.vmem %s4, %s188
      %s190 = smul.u32 42, %s15
      %p191 = scmp.lt.s32.totalorder %s190, 83
      %s192 = scalar_select %p191, %s190, 83
      %s193 = smul.addr %s192, 8
      %s194 = scalar_lea.vmem %s3, %s193
      %s195 = smul.u32 42, %s15
      %s196 = smul.u32 42, %s15
      %p197 = scmp.lt.s32.totalorder %s196, 83
      %s198 = scalar_select %p197, %s196, 83
      %s199 = smul.addr %s198, 2
      %s200 = smul.addr %s199, 8
      %s201 = scalar_lea.vmem %s4, %s200
      %s202 = smul.u32 42, %s15
      %v203 = vld [vmem:[%s0] sm:$0xff]
      %v204 = vld [vmem:[%s0 + $0x8] sm:$0xff]
      %v205 = vld [vmem:[%s0 + $0x10] sm:$0xff]
      %v206 = vld [vmem:[%s0 + $0x18] sm:$0xff]
      %v207 = vld [vmem:[%s0 + $0x20] sm:$0xff]
      %v208 = vld [vmem:[%s0 + $0x28] sm:$0xff]
      %v209 = vld [vmem:[%s0 + $0x30] sm:$0xff]
      %v210 = vld [vmem:[%s0 + $0x38] sm:$0xff]
      %v211 = vld [vmem:[%s0 + $0x40] sm:$0xff]
      %v212 = vld [vmem:[%s0 + $0x48] sm:$0xff]
      %v213 = vld [vmem:[%s0 + $0x50] sm:$0xff]
      %v214 = vld [vmem:[%s0 + $0x58] sm:$0xff]
      %v215 = vld [vmem:[%s0 + $0x60] sm:$0xff]
      %v216 = vld [vmem:[%s0 + $0x68] sm:$0xff]
      %v217 = vld [vmem:[%s0 + $0x70] sm:$0xff]
      %v218 = vld [vmem:[%s0 + $0x78] sm:$0xff]
      %v219 = vld [vmem:[%s0 + $0x80] sm:$0xff]
      %v220 = vld [vmem:[%s0 + $0x88] sm:$0xff]
      %v221 = vld [vmem:[%s0 + $0x90] sm:$0xff]
      %v222 = vld [vmem:[%s0 + $0x98] sm:$0xff]
      %v223 = vld [vmem:[%s0 + $0xa0] sm:$0xff]
      %v224 = vld [vmem:[%s0 + $0xa8] sm:$0xff]
      %v225 = vld [vmem:[%s0 + $0xb0] sm:$0xff]
      %v226 = vld [vmem:[%s0 + $0xb8] sm:$0xff]
      %v227 = vld [vmem:[%s0 + $0xc0] sm:$0xff]
      %v228 = vld [vmem:[%s0 + $0xc8] sm:$0xff]
      %v229 = vld [vmem:[%s0 + $0xd0] sm:$0xff]
      %v230 = vld [vmem:[%s0 + $0xd8] sm:$0xff]
      %v231 = vld [vmem:[%s0 + $0xe0] sm:$0xff]
      %v232 = vld [vmem:[%s0 + $0xe8] sm:$0xff]
      %v233 = vld [vmem:[%s0 + $0xf0] sm:$0xff]
      %v234 = vld [vmem:[%s0 + $0xf8] sm:$0xff]
      %v235 = vld [vmem:[%s0 + $0x100] sm:$0xff]
      %v236 = vld [vmem:[%s0 + $0x108] sm:$0xff]
      %v237 = vld [vmem:[%s0 + $0x110] sm:$0xff]
      %v238 = vld [vmem:[%s0 + $0x118] sm:$0xff]
      %v239 = vld [vmem:[%s0 + $0x120] sm:$0xff]
      %v240 = vld [vmem:[%s0 + $0x128] sm:$0xff]
      %v241 = vld [vmem:[%s0 + $0x130] sm:$0xff]
      %v242 = vld [vmem:[%s0 + $0x138] sm:$0xff]
      %v243 = vld [vmem:[%s0 + $0x140] sm:$0xff]
      %v244 = vld [vmem:[%s0 + $0x148] sm:$0xff]
      %v245 = vxor.u32 %v203, 2147483648
      %v246 = vxor.u32 %v204, 2147483648
      %v247 = vxor.u32 %v205, 2147483648
      %v248 = vxor.u32 %v206, 2147483648
      %v249 = vxor.u32 %v207, 2147483648
      %v250 = vxor.u32 %v208, 2147483648
      %v251 = vxor.u32 %v209, 2147483648
      %v252 = vxor.u32 %v210, 2147483648
      %v253 = vxor.u32 %v211, 2147483648
      %v254 = vxor.u32 %v212, 2147483648
      %v255 = vxor.u32 %v213, 2147483648
      %v256 = vxor.u32 %v214, 2147483648
      %v257 = vxor.u32 %v215, 2147483648
      %v258 = vxor.u32 %v216, 2147483648
      %v259 = vxor.u32 %v217, 2147483648
      %v260 = vxor.u32 %v218, 2147483648
      %v261 = vxor.u32 %v219, 2147483648
      %v262 = vxor.u32 %v220, 2147483648
      %v263 = vxor.u32 %v221, 2147483648
      %v264 = vxor.u32 %v222, 2147483648
      %v265 = vxor.u32 %v223, 2147483648
      %v266 = vxor.u32 %v224, 2147483648
      %v267 = vxor.u32 %v225, 2147483648
      %v268 = vxor.u32 %v226, 2147483648
      %v269 = vxor.u32 %v227, 2147483648
      %v270 = vxor.u32 %v228, 2147483648
      %v271 = vxor.u32 %v229, 2147483648
      %v272 = vxor.u32 %v230, 2147483648
      %v273 = vxor.u32 %v231, 2147483648
      %v274 = vxor.u32 %v232, 2147483648
      %v275 = vxor.u32 %v233, 2147483648
      %v276 = vxor.u32 %v234, 2147483648
      %v277 = vxor.u32 %v235, 2147483648
      %v278 = vxor.u32 %v236, 2147483648
      %v279 = vxor.u32 %v237, 2147483648
      %v280 = vxor.u32 %v238, 2147483648
      %v281 = vxor.u32 %v239, 2147483648
      %v282 = vxor.u32 %v240, 2147483648
      %v283 = vxor.u32 %v241, 2147483648
      %v284 = vxor.u32 %v242, 2147483648
      %v285 = vxor.u32 %v243, 2147483648
      %v286 = vxor.u32 %v244, 2147483648
      %v287 = vmul.f32 %v245, 1.442695
      %v288 = vpow.pop %v287
      %v289 = vmul.f32 %v246, 1.442695
      %v290 = vpow.pop %v289
      %v291 = vmul.f32 %v247, 1.442695
      %v292 = vpow.pop %v291
      %v293 = vmul.f32 %v248, 1.442695
      %v294 = vpow.pop %v293
      %v295 = vmul.f32 %v249, 1.442695
      %v296 = vpow.pop %v295
      %v297 = vmul.f32 %v250, 1.442695
      %v298 = vpow.pop %v297
      %v299 = vmul.f32 %v251, 1.442695
      %v300 = vpow.pop %v299
      %v301 = vmul.f32 %v252, 1.442695
      %v302 = vpow.pop %v301
      %v303 = vmul.f32 %v253, 1.442695
      %v304 = vpow.pop %v303
      %v305 = vmul.f32 %v254, 1.442695
      %v306 = vpow.pop %v305
      %v307 = vmul.f32 %v255, 1.442695
      %v308 = vpow.pop %v307
      %v309 = vmul.f32 %v256, 1.442695
      %v310 = vpow.pop %v309
      %v311 = vmul.f32 %v257, 1.442695
      %v312 = vpow.pop %v311
      %v313 = vmul.f32 %v258, 1.442695
      %v314 = vpow.pop %v313
      %v315 = vmul.f32 %v259, 1.442695
      %v316 = vpow.pop %v315
      %v317 = vmul.f32 %v260, 1.442695
      %v318 = vpow.pop %v317
      %v319 = vmul.f32 %v261, 1.442695
      %v320 = vpow.pop %v319
      %v321 = vmul.f32 %v262, 1.442695
      %v322 = vpow.pop %v321
      %v323 = vmul.f32 %v263, 1.442695
      %v324 = vpow.pop %v323
      %v325 = vmul.f32 %v264, 1.442695
      %v326 = vpow.pop %v325
      %v327 = vmul.f32 %v265, 1.442695
      %v328 = vpow.pop %v327
      %v329 = vmul.f32 %v266, 1.442695
      %v330 = vpow.pop %v329
      %v331 = vmul.f32 %v267, 1.442695
      %v332 = vpow.pop %v331
      %v333 = vmul.f32 %v268, 1.442695
      %v334 = vpow.pop %v333
      %v335 = vmul.f32 %v269, 1.442695
      %v336 = vpow.pop %v335
      %v337 = vmul.f32 %v270, 1.442695
      %v338 = vpow.pop %v337
      %v339 = vmul.f32 %v271, 1.442695
      %v340 = vpow.pop %v339
      %v341 = vmul.f32 %v272, 1.442695
      %v342 = vpow.pop %v341
      %v343 = vmul.f32 %v273, 1.442695
      %v344 = vpow.pop %v343
      %v345 = vmul.f32 %v274, 1.442695
      %v346 = vpow.pop %v345
      %v347 = vmul.f32 %v275, 1.442695
      %v348 = vpow.pop %v347
      %v349 = vmul.f32 %v276, 1.442695
      %v350 = vpow.pop %v349
      %v351 = vmul.f32 %v277, 1.442695
      %v352 = vpow.pop %v351
      %v353 = vmul.f32 %v278, 1.442695
      %v354 = vpow.pop %v353
      %v355 = vmul.f32 %v279, 1.442695
      %v356 = vpow.pop %v355
      %v357 = vmul.f32 %v280, 1.442695
      %v358 = vpow.pop %v357
      %v359 = vmul.f32 %v281, 1.442695
      %v360 = vpow.pop %v359
      %v361 = vmul.f32 %v282, 1.442695
      %v362 = vpow.pop %v361
      %v363 = vmul.f32 %v283, 1.442695
      %v364 = vpow.pop %v363
      %v365 = vmul.f32 %v284, 1.442695
      %v366 = vpow.pop %v365
      %v367 = vmul.f32 %v285, 1.442695
      %v368 = vpow.pop %v367
      %v369 = vmul.f32 %v286, 1.442695
      %v370 = vpow.pop %v369
      %v371 = vadd.f32 %v288, 1.0
      %v372 = vadd.f32 %v290, 1.0
      %v373 = vadd.f32 %v292, 1.0
      %v374 = vadd.f32 %v294, 1.0
      %v375 = vadd.f32 %v296, 1.0
      %v376 = vadd.f32 %v298, 1.0
      %v377 = vadd.f32 %v300, 1.0
      %v378 = vadd.f32 %v302, 1.0
      %v379 = vadd.f32 %v304, 1.0
      %v380 = vadd.f32 %v306, 1.0
      %v381 = vadd.f32 %v308, 1.0
      %v382 = vadd.f32 %v310, 1.0
      %v383 = vadd.f32 %v312, 1.0
      %v384 = vadd.f32 %v314, 1.0
      %v385 = vadd.f32 %v316, 1.0
      %v386 = vadd.f32 %v318, 1.0
      %v387 = vadd.f32 %v320, 1.0
      %v388 = vadd.f32 %v322, 1.0
      %v389 = vadd.f32 %v324, 1.0
      %v390 = vadd.f32 %v326, 1.0
      %v391 = vadd.f32 %v328, 1.0
      %v392 = vadd.f32 %v330, 1.0
      %v393 = vadd.f32 %v332, 1.0
      %v394 = vadd.f32 %v334, 1.0
      %v395 = vadd.f32 %v336, 1.0
      %v396 = vadd.f32 %v338, 1.0
      %v397 = vadd.f32 %v340, 1.0
      %v398 = vadd.f32 %v342, 1.0
      %v399 = vadd.f32 %v344, 1.0
      %v400 = vadd.f32 %v346, 1.0
      %v401 = vadd.f32 %v348, 1.0
      %v402 = vadd.f32 %v350, 1.0
      %v403 = vadd.f32 %v352, 1.0
      %v404 = vadd.f32 %v354, 1.0
      %v405 = vadd.f32 %v356, 1.0
      %v406 = vadd.f32 %v358, 1.0
      %v407 = vadd.f32 %v360, 1.0
      %v408 = vadd.f32 %v362, 1.0
      %v409 = vadd.f32 %v364, 1.0
      %v410 = vadd.f32 %v366, 1.0
      %v411 = vadd.f32 %v368, 1.0
      %v412 = vadd.f32 %v370, 1.0
      %v413 = vrcp.pop %v371
      %v414 = vmul.f32 %v371, %v413
      %v415 = vsub.f32 1.0, %v414
      %v416 = vmul.f32 %v413, %v415
      %v417 = vadd.f32 %v413, %v416
      %vm418 = vweird.f32 %v371
      %vm419 = vweird.f32 %v413
      %vm420 = vmor %vm418, %vm419
      %v421 = vsel %vm420, %v413, %v417
      %v422 = vand.u32 2147483647, %v371
      %vm423 = vcmp.eq.f32.partialorder %v422, 8.507059e+37
      %v424 = vand.u32 %v371, 2147483648
      %v425 = vor.u32 1.1754944e-38, %v424
      %v426 = vsel %vm423, %v425, %v421
      %v427 = vmul.f32 1.0, %v426
      %v428 = vrcp.pop %v372
      %v429 = vmul.f32 %v372, %v428
      %v430 = vsub.f32 1.0, %v429
      %v431 = vmul.f32 %v428, %v430
      %v432 = vadd.f32 %v428, %v431
      %vm433 = vweird.f32 %v372
      %vm434 = vweird.f32 %v428
      %vm435 = vmor %vm433, %vm434
      %v436 = vsel %vm435, %v428, %v432
      %v437 = vand.u32 2147483647, %v372
      %vm438 = vcmp.eq.f32.partialorder %v437, 8.507059e+37
      %v439 = vand.u32 %v372, 2147483648
      %v440 = vor.u32 1.1754944e-38, %v439
      %v441 = vsel %vm438, %v440, %v436
      %v442 = vmul.f32 1.0, %v441
      %v443 = vrcp.pop %v373
      %v444 = vmul.f32 %v373, %v443
      %v445 = vsub.f32 1.0, %v444
      %v446 = vmul.f32 %v443, %v445
      %v447 = vadd.f32 %v443, %v446
      %vm448 = vweird.f32 %v373
      %vm449 = vweird.f32 %v443
      %vm450 = vmor %vm448, %vm449
      %v451 = vsel %vm450, %v443, %v447
      %v452 = vand.u32 2147483647, %v373
      %vm453 = vcmp.eq.f32.partialorder %v452, 8.507059e+37
      %v454 = vand.u32 %v373, 2147483648
      %v455 = vor.u32 1.1754944e-38, %v454
      %v456 = vsel %vm453, %v455, %v451
      %v457 = vmul.f32 1.0, %v456
      %v458 = vrcp.pop %v374
      %v459 = vmul.f32 %v374, %v458
      %v460 = vsub.f32 1.0, %v459
      %v461 = vmul.f32 %v458, %v460
      %v462 = vadd.f32 %v458, %v461
      %vm463 = vweird.f32 %v374
      %vm464 = vweird.f32 %v458
      %vm465 = vmor %vm463, %vm464
      %v466 = vsel %vm465, %v458, %v462
      %v467 = vand.u32 2147483647, %v374
      %vm468 = vcmp.eq.f32.partialorder %v467, 8.507059e+37
      %v469 = vand.u32 %v374, 2147483648
      %v470 = vor.u32 1.1754944e-38, %v469
      %v471 = vsel %vm468, %v470, %v466
      %v472 = vmul.f32 1.0, %v471
      %v473 = vrcp.pop %v375
      %v474 = vmul.f32 %v375, %v473
      %v475 = vsub.f32 1.0, %v474
      %v476 = vmul.f32 %v473, %v475
      %v477 = vadd.f32 %v473, %v476
      %vm478 = vweird.f32 %v375
      %vm479 = vweird.f32 %v473
      %vm480 = vmor %vm478, %vm479
      %v481 = vsel %vm480, %v473, %v477
      %v482 = vand.u32 2147483647, %v375
      %vm483 = vcmp.eq.f32.partialorder %v482, 8.507059e+37
      %v484 = vand.u32 %v375, 2147483648
      %v485 = vor.u32 1.1754944e-38, %v484
      %v486 = vsel %vm483, %v485, %v481
      %v487 = vmul.f32 1.0, %v486
      %v488 = vrcp.pop %v376
      %v489 = vmul.f32 %v376, %v488
      %v490 = vsub.f32 1.0, %v489
      %v491 = vmul.f32 %v488, %v490
      %v492 = vadd.f32 %v488, %v491
      %vm493 = vweird.f32 %v376
      %vm494 = vweird.f32 %v488
      %vm495 = vmor %vm493, %vm494
      %v496 = vsel %vm495, %v488, %v492
      %v497 = vand.u32 2147483647, %v376
      %vm498 = vcmp.eq.f32.partialorder %v497, 8.507059e+37
      %v499 = vand.u32 %v376, 2147483648
      %v500 = vor.u32 1.1754944e-38, %v499
      %v501 = vsel %vm498, %v500, %v496
      %v502 = vmul.f32 1.0, %v501
      %v503 = vrcp.pop %v377
      %v504 = vmul.f32 %v377, %v503
      %v505 = vsub.f32 1.0, %v504
      %v506 = vmul.f32 %v503, %v505
      %v507 = vadd.f32 %v503, %v506
      %vm508 = vweird.f32 %v377
      %vm509 = vweird.f32 %v503
      %vm510 = vmor %vm508, %vm509
      %v511 = vsel %vm510, %v503, %v507
      %v512 = vand.u32 2147483647, %v377
      %vm513 = vcmp.eq.f32.partialorder %v512, 8.507059e+37
      %v514 = vand.u32 %v377, 2147483648
      %v515 = vor.u32 1.1754944e-38, %v514
      %v516 = vsel %vm513, %v515, %v511
      %v517 = vmul.f32 1.0, %v516
      %v518 = vrcp.pop %v378
      %v519 = vmul.f32 %v378, %v518
      %v520 = vsub.f32 1.0, %v519
      %v521 = vmul.f32 %v518, %v520
      %v522 = vadd.f32 %v518, %v521
      %vm523 = vweird.f32 %v378
      %vm524 = vweird.f32 %v518
      %vm525 = vmor %vm523, %vm524
      %v526 = vsel %vm525, %v518, %v522
      %v527 = vand.u32 2147483647, %v378
      %vm528 = vcmp.eq.f32.partialorder %v527, 8.507059e+37
      %v529 = vand.u32 %v378, 2147483648
      %v530 = vor.u32 1.1754944e-38, %v529
      %v531 = vsel %vm528, %v530, %v526
      %v532 = vmul.f32 1.0, %v531
      %v533 = vrcp.pop %v379
      %v534 = vmul.f32 %v379, %v533
      %v535 = vsub.f32 1.0, %v534
      %v536 = vmul.f32 %v533, %v535
      %v537 = vadd.f32 %v533, %v536
      %vm538 = vweird.f32 %v379
      %vm539 = vweird.f32 %v533
      %vm540 = vmor %vm538, %vm539
      %v541 = vsel %vm540, %v533, %v537
      %v542 = vand.u32 2147483647, %v379
      %vm543 = vcmp.eq.f32.partialorder %v542, 8.507059e+37
      %v544 = vand.u32 %v379, 2147483648
      %v545 = vor.u32 1.1754944e-38, %v544
      %v546 = vsel %vm543, %v545, %v541
      %v547 = vmul.f32 1.0, %v546
      %v548 = vrcp.pop %v380
      %v549 = vmul.f32 %v380, %v548
      %v550 = vsub.f32 1.0, %v549
      %v551 = vmul.f32 %v548, %v550
      %v552 = vadd.f32 %v548, %v551
      %vm553 = vweird.f32 %v380
      %vm554 = vweird.f32 %v548
      %vm555 = vmor %vm553, %vm554
      %v556 = vsel %vm555, %v548, %v552
      %v557 = vand.u32 2147483647, %v380
      %vm558 = vcmp.eq.f32.partialorder %v557, 8.507059e+37
      %v559 = vand.u32 %v380, 2147483648
      %v560 = vor.u32 1.1754944e-38, %v559
      %v561 = vsel %vm558, %v560, %v556
      %v562 = vmul.f32 1.0, %v561
      %v563 = vrcp.pop %v381
      %v564 = vmul.f32 %v381, %v563
      %v565 = vsub.f32 1.0, %v564
      %v566 = vmul.f32 %v563, %v565
      %v567 = vadd.f32 %v563, %v566
      %vm568 = vweird.f32 %v381
      %vm569 = vweird.f32 %v563
      %vm570 = vmor %vm568, %vm569
      %v571 = vsel %vm570, %v563, %v567
      %v572 = vand.u32 2147483647, %v381
      %vm573 = vcmp.eq.f32.partialorder %v572, 8.507059e+37
      %v574 = vand.u32 %v381, 2147483648
      %v575 = vor.u32 1.1754944e-38, %v574
      %v576 = vsel %vm573, %v575, %v571
      %v577 = vmul.f32 1.0, %v576
      %v578 = vrcp.pop %v382
      %v579 = vmul.f32 %v382, %v578
      %v580 = vsub.f32 1.0, %v579
      %v581 = vmul.f32 %v578, %v580
      %v582 = vadd.f32 %v578, %v581
      %vm583 = vweird.f32 %v382
      %vm584 = vweird.f32 %v578
      %vm585 = vmor %vm583, %vm584
      %v586 = vsel %vm585, %v578, %v582
      %v587 = vand.u32 2147483647, %v382
      %vm588 = vcmp.eq.f32.partialorder %v587, 8.507059e+37
      %v589 = vand.u32 %v382, 2147483648
      %v590 = vor.u32 1.1754944e-38, %v589
      %v591 = vsel %vm588, %v590, %v586
      %v592 = vmul.f32 1.0, %v591
      %v593 = vrcp.pop %v383
      %v594 = vmul.f32 %v383, %v593
      %v595 = vsub.f32 1.0, %v594
      %v596 = vmul.f32 %v593, %v595
      %v597 = vadd.f32 %v593, %v596
      %vm598 = vweird.f32 %v383
      %vm599 = vweird.f32 %v593
      %vm600 = vmor %vm598, %vm599
      %v601 = vsel %vm600, %v593, %v597
      %v602 = vand.u32 2147483647, %v383
      %vm603 = vcmp.eq.f32.partialorder %v602, 8.507059e+37
      %v604 = vand.u32 %v383, 2147483648
      %v605 = vor.u32 1.1754944e-38, %v604
      %v606 = vsel %vm603, %v605, %v601
      %v607 = vmul.f32 1.0, %v606
      %v608 = vrcp.pop %v384
      %v609 = vmul.f32 %v384, %v608
      %v610 = vsub.f32 1.0, %v609
      %v611 = vmul.f32 %v608, %v610
      %v612 = vadd.f32 %v608, %v611
      %vm613 = vweird.f32 %v384
      %vm614 = vweird.f32 %v608
      %vm615 = vmor %vm613, %vm614
      %v616 = vsel %vm615, %v608, %v612
      %v617 = vand.u32 2147483647, %v384
      %vm618 = vcmp.eq.f32.partialorder %v617, 8.507059e+37
      %v619 = vand.u32 %v384, 2147483648
      %v620 = vor.u32 1.1754944e-38, %v619
      %v621 = vsel %vm618, %v620, %v616
      %v622 = vmul.f32 1.0, %v621
      %v623 = vrcp.pop %v385
      %v624 = vmul.f32 %v385, %v623
      %v625 = vsub.f32 1.0, %v624
      %v626 = vmul.f32 %v623, %v625
      %v627 = vadd.f32 %v623, %v626
      %vm628 = vweird.f32 %v385
      %vm629 = vweird.f32 %v623
      %vm630 = vmor %vm628, %vm629
      %v631 = vsel %vm630, %v623, %v627
      %v632 = vand.u32 2147483647, %v385
      %vm633 = vcmp.eq.f32.partialorder %v632, 8.507059e+37
      %v634 = vand.u32 %v385, 2147483648
      %v635 = vor.u32 1.1754944e-38, %v634
      %v636 = vsel %vm633, %v635, %v631
      %v637 = vmul.f32 1.0, %v636
      %v638 = vrcp.pop %v386
      %v639 = vmul.f32 %v386, %v638
      %v640 = vsub.f32 1.0, %v639
      %v641 = vmul.f32 %v638, %v640
      %v642 = vadd.f32 %v638, %v641
      %vm643 = vweird.f32 %v386
      %vm644 = vweird.f32 %v638
      %vm645 = vmor %vm643, %vm644
      %v646 = vsel %vm645, %v638, %v642
      %v647 = vand.u32 2147483647, %v386
      %vm648 = vcmp.eq.f32.partialorder %v647, 8.507059e+37
      %v649 = vand.u32 %v386, 2147483648
      %v650 = vor.u32 1.1754944e-38, %v649
      %v651 = vsel %vm648, %v650, %v646
      %v652 = vmul.f32 1.0, %v651
      %v653 = vrcp.pop %v387
      %v654 = vmul.f32 %v387, %v653
      %v655 = vsub.f32 1.0, %v654
      %v656 = vmul.f32 %v653, %v655
      %v657 = vadd.f32 %v653, %v656
      %vm658 = vweird.f32 %v387
      %vm659 = vweird.f32 %v653
      %vm660 = vmor %vm658, %vm659
      %v661 = vsel %vm660, %v653, %v657
      %v662 = vand.u32 2147483647, %v387
      %vm663 = vcmp.eq.f32.partialorder %v662, 8.507059e+37
      %v664 = vand.u32 %v387, 2147483648
      %v665 = vor.u32 1.1754944e-38, %v664
      %v666 = vsel %vm663, %v665, %v661
      %v667 = vmul.f32 1.0, %v666
      %v668 = vrcp.pop %v388
      %v669 = vmul.f32 %v388, %v668
      %v670 = vsub.f32 1.0, %v669
      %v671 = vmul.f32 %v668, %v670
      %v672 = vadd.f32 %v668, %v671
      %vm673 = vweird.f32 %v388
      %vm674 = vweird.f32 %v668
      %vm675 = vmor %vm673, %vm674
      %v676 = vsel %vm675, %v668, %v672
      %v677 = vand.u32 2147483647, %v388
      %vm678 = vcmp.eq.f32.partialorder %v677, 8.507059e+37
      %v679 = vand.u32 %v388, 2147483648
      %v680 = vor.u32 1.1754944e-38, %v679
      %v681 = vsel %vm678, %v680, %v676
      %v682 = vmul.f32 1.0, %v681
      %v683 = vrcp.pop %v389
      %v684 = vmul.f32 %v389, %v683
      %v685 = vsub.f32 1.0, %v684
      %v686 = vmul.f32 %v683, %v685
      %v687 = vadd.f32 %v683, %v686
      %vm688 = vweird.f32 %v389
      %vm689 = vweird.f32 %v683
      %vm690 = vmor %vm688, %vm689
      %v691 = vsel %vm690, %v683, %v687
      %v692 = vand.u32 2147483647, %v389
      %vm693 = vcmp.eq.f32.partialorder %v692, 8.507059e+37
      %v694 = vand.u32 %v389, 2147483648
      %v695 = vor.u32 1.1754944e-38, %v694
      %v696 = vsel %vm693, %v695, %v691
      %v697 = vmul.f32 1.0, %v696
      %v698 = vrcp.pop %v390
      %v699 = vmul.f32 %v390, %v698
      %v700 = vsub.f32 1.0, %v699
      %v701 = vmul.f32 %v698, %v700
      %v702 = vadd.f32 %v698, %v701
      %vm703 = vweird.f32 %v390
      %vm704 = vweird.f32 %v698
      %vm705 = vmor %vm703, %vm704
      %v706 = vsel %vm705, %v698, %v702
      %v707 = vand.u32 2147483647, %v390
      %vm708 = vcmp.eq.f32.partialorder %v707, 8.507059e+37
      %v709 = vand.u32 %v390, 2147483648
      %v710 = vor.u32 1.1754944e-38, %v709
      %v711 = vsel %vm708, %v710, %v706
      %v712 = vmul.f32 1.0, %v711
      %v713 = vrcp.pop %v391
      %v714 = vmul.f32 %v391, %v713
      %v715 = vsub.f32 1.0, %v714
      %v716 = vmul.f32 %v713, %v715
      %v717 = vadd.f32 %v713, %v716
      %vm718 = vweird.f32 %v391
      %vm719 = vweird.f32 %v713
      %vm720 = vmor %vm718, %vm719
      %v721 = vsel %vm720, %v713, %v717
      %v722 = vand.u32 2147483647, %v391
      %vm723 = vcmp.eq.f32.partialorder %v722, 8.507059e+37
      %v724 = vand.u32 %v391, 2147483648
      %v725 = vor.u32 1.1754944e-38, %v724
      %v726 = vsel %vm723, %v725, %v721
      %v727 = vmul.f32 1.0, %v726
      %v728 = vrcp.pop %v392
      %v729 = vmul.f32 %v392, %v728
      %v730 = vsub.f32 1.0, %v729
      %v731 = vmul.f32 %v728, %v730
      %v732 = vadd.f32 %v728, %v731
      %vm733 = vweird.f32 %v392
      %vm734 = vweird.f32 %v728
      %vm735 = vmor %vm733, %vm734
      %v736 = vsel %vm735, %v728, %v732
      %v737 = vand.u32 2147483647, %v392
      %vm738 = vcmp.eq.f32.partialorder %v737, 8.507059e+37
      %v739 = vand.u32 %v392, 2147483648
      %v740 = vor.u32 1.1754944e-38, %v739
      %v741 = vsel %vm738, %v740, %v736
      %v742 = vmul.f32 1.0, %v741
      %v743 = vrcp.pop %v393
      %v744 = vmul.f32 %v393, %v743
      %v745 = vsub.f32 1.0, %v744
      %v746 = vmul.f32 %v743, %v745
      %v747 = vadd.f32 %v743, %v746
      %vm748 = vweird.f32 %v393
      %vm749 = vweird.f32 %v743
      %vm750 = vmor %vm748, %vm749
      %v751 = vsel %vm750, %v743, %v747
      %v752 = vand.u32 2147483647, %v393
      %vm753 = vcmp.eq.f32.partialorder %v752, 8.507059e+37
      %v754 = vand.u32 %v393, 2147483648
      %v755 = vor.u32 1.1754944e-38, %v754
      %v756 = vsel %vm753, %v755, %v751
      %v757 = vmul.f32 1.0, %v756
      %v758 = vrcp.pop %v394
      %v759 = vmul.f32 %v394, %v758
      %v760 = vsub.f32 1.0, %v759
      %v761 = vmul.f32 %v758, %v760
      %v762 = vadd.f32 %v758, %v761
      %vm763 = vweird.f32 %v394
      %vm764 = vweird.f32 %v758
      %vm765 = vmor %vm763, %vm764
      %v766 = vsel %vm765, %v758, %v762
      %v767 = vand.u32 2147483647, %v394
      %vm768 = vcmp.eq.f32.partialorder %v767, 8.507059e+37
      %v769 = vand.u32 %v394, 2147483648
      %v770 = vor.u32 1.1754944e-38, %v769
      %v771 = vsel %vm768, %v770, %v766
      %v772 = vmul.f32 1.0, %v771
      %v773 = vrcp.pop %v395
      %v774 = vmul.f32 %v395, %v773
      %v775 = vsub.f32 1.0, %v774
      %v776 = vmul.f32 %v773, %v775
      %v777 = vadd.f32 %v773, %v776
      %vm778 = vweird.f32 %v395
      %vm779 = vweird.f32 %v773
      %vm780 = vmor %vm778, %vm779
      %v781 = vsel %vm780, %v773, %v777
      %v782 = vand.u32 2147483647, %v395
      %vm783 = vcmp.eq.f32.partialorder %v782, 8.507059e+37
      %v784 = vand.u32 %v395, 2147483648
      %v785 = vor.u32 1.1754944e-38, %v784
      %v786 = vsel %vm783, %v785, %v781
      %v787 = vmul.f32 1.0, %v786
      %v788 = vrcp.pop %v396
      %v789 = vmul.f32 %v396, %v788
      %v790 = vsub.f32 1.0, %v789
      %v791 = vmul.f32 %v788, %v790
      %v792 = vadd.f32 %v788, %v791
      %vm793 = vweird.f32 %v396
      %vm794 = vweird.f32 %v788
      %vm795 = vmor %vm793, %vm794
      %v796 = vsel %vm795, %v788, %v792
      %v797 = vand.u32 2147483647, %v396
      %vm798 = vcmp.eq.f32.partialorder %v797, 8.507059e+37
      %v799 = vand.u32 %v396, 2147483648
      %v800 = vor.u32 1.1754944e-38, %v799
      %v801 = vsel %vm798, %v800, %v796
      %v802 = vmul.f32 1.0, %v801
      %v803 = vrcp.pop %v397
      %v804 = vmul.f32 %v397, %v803
      %v805 = vsub.f32 1.0, %v804
      %v806 = vmul.f32 %v803, %v805
      %v807 = vadd.f32 %v803, %v806
      %vm808 = vweird.f32 %v397
      %vm809 = vweird.f32 %v803
      %vm810 = vmor %vm808, %vm809
      %v811 = vsel %vm810, %v803, %v807
      %v812 = vand.u32 2147483647, %v397
      %vm813 = vcmp.eq.f32.partialorder %v812, 8.507059e+37
      %v814 = vand.u32 %v397, 2147483648
      %v815 = vor.u32 1.1754944e-38, %v814
      %v816 = vsel %vm813, %v815, %v811
      %v817 = vmul.f32 1.0, %v816
      %v818 = vrcp.pop %v398
      %v819 = vmul.f32 %v398, %v818
      %v820 = vsub.f32 1.0, %v819
      %v821 = vmul.f32 %v818, %v820
      %v822 = vadd.f32 %v818, %v821
      %vm823 = vweird.f32 %v398
      %vm824 = vweird.f32 %v818
      %vm825 = vmor %vm823, %vm824
      %v826 = vsel %vm825, %v818, %v822
      %v827 = vand.u32 2147483647, %v398
      %vm828 = vcmp.eq.f32.partialorder %v827, 8.507059e+37
      %v829 = vand.u32 %v398, 2147483648
      %v830 = vor.u32 1.1754944e-38, %v829
      %v831 = vsel %vm828, %v830, %v826
      %v832 = vmul.f32 1.0, %v831
      %v833 = vrcp.pop %v399
      %v834 = vmul.f32 %v399, %v833
      %v835 = vsub.f32 1.0, %v834
      %v836 = vmul.f32 %v833, %v835
      %v837 = vadd.f32 %v833, %v836
      %vm838 = vweird.f32 %v399
      %vm839 = vweird.f32 %v833
      %vm840 = vmor %vm838, %vm839
      %v841 = vsel %vm840, %v833, %v837
      %v842 = vand.u32 2147483647, %v399
      %vm843 = vcmp.eq.f32.partialorder %v842, 8.507059e+37
      %v844 = vand.u32 %v399, 2147483648
      %v845 = vor.u32 1.1754944e-38, %v844
      %v846 = vsel %vm843, %v845, %v841
      %v847 = vmul.f32 1.0, %v846
      %v848 = vrcp.pop %v400
      %v849 = vmul.f32 %v400, %v848
      %v850 = vsub.f32 1.0, %v849
      %v851 = vmul.f32 %v848, %v850
      %v852 = vadd.f32 %v848, %v851
      %vm853 = vweird.f32 %v400
      %vm854 = vweird.f32 %v848
      %vm855 = vmor %vm853, %vm854
      %v856 = vsel %vm855, %v848, %v852
      %v857 = vand.u32 2147483647, %v400
      %vm858 = vcmp.eq.f32.partialorder %v857, 8.507059e+37
      %v859 = vand.u32 %v400, 2147483648
      %v860 = vor.u32 1.1754944e-38, %v859
      %v861 = vsel %vm858, %v860, %v856
      %v862 = vmul.f32 1.0, %v861
      %v863 = vrcp.pop %v401
      %v864 = vmul.f32 %v401, %v863
      %v865 = vsub.f32 1.0, %v864
      %v866 = vmul.f32 %v863, %v865
      %v867 = vadd.f32 %v863, %v866
      %vm868 = vweird.f32 %v401
      %vm869 = vweird.f32 %v863
      %vm870 = vmor %vm868, %vm869
      %v871 = vsel %vm870, %v863, %v867
      %v872 = vand.u32 2147483647, %v401
      %vm873 = vcmp.eq.f32.partialorder %v872, 8.507059e+37
      %v874 = vand.u32 %v401, 2147483648
      %v875 = vor.u32 1.1754944e-38, %v874
      %v876 = vsel %vm873, %v875, %v871
      %v877 = vmul.f32 1.0, %v876
      %v878 = vrcp.pop %v402
      %v879 = vmul.f32 %v402, %v878
      %v880 = vsub.f32 1.0, %v879
      %v881 = vmul.f32 %v878, %v880
      %v882 = vadd.f32 %v878, %v881
      %vm883 = vweird.f32 %v402
      %vm884 = vweird.f32 %v878
      %vm885 = vmor %vm883, %vm884
      %v886 = vsel %vm885, %v878, %v882
      %v887 = vand.u32 2147483647, %v402
      %vm888 = vcmp.eq.f32.partialorder %v887, 8.507059e+37
      %v889 = vand.u32 %v402, 2147483648
      %v890 = vor.u32 1.1754944e-38, %v889
      %v891 = vsel %vm888, %v890, %v886
      %v892 = vmul.f32 1.0, %v891
      %v893 = vrcp.pop %v403
      %v894 = vmul.f32 %v403, %v893
      %v895 = vsub.f32 1.0, %v894
      %v896 = vmul.f32 %v893, %v895
      %v897 = vadd.f32 %v893, %v896
      %vm898 = vweird.f32 %v403
      %vm899 = vweird.f32 %v893
      %vm900 = vmor %vm898, %vm899
      %v901 = vsel %vm900, %v893, %v897
      %v902 = vand.u32 2147483647, %v403
      %vm903 = vcmp.eq.f32.partialorder %v902, 8.507059e+37
      %v904 = vand.u32 %v403, 2147483648
      %v905 = vor.u32 1.1754944e-38, %v904
      %v906 = vsel %vm903, %v905, %v901
      %v907 = vmul.f32 1.0, %v906
      %v908 = vrcp.pop %v404
      %v909 = vmul.f32 %v404, %v908
      %v910 = vsub.f32 1.0, %v909
      %v911 = vmul.f32 %v908, %v910
      %v912 = vadd.f32 %v908, %v911
      %vm913 = vweird.f32 %v404
      %vm914 = vweird.f32 %v908
      %vm915 = vmor %vm913, %vm914
      %v916 = vsel %vm915, %v908, %v912
      %v917 = vand.u32 2147483647, %v404
      %vm918 = vcmp.eq.f32.partialorder %v917, 8.507059e+37
      %v919 = vand.u32 %v404, 2147483648
      %v920 = vor.u32 1.1754944e-38, %v919
      %v921 = vsel %vm918, %v920, %v916
      %v922 = vmul.f32 1.0, %v921
      %v923 = vrcp.pop %v405
      %v924 = vmul.f32 %v405, %v923
      %v925 = vsub.f32 1.0, %v924
      %v926 = vmul.f32 %v923, %v925
      %v927 = vadd.f32 %v923, %v926
      %vm928 = vweird.f32 %v405
      %vm929 = vweird.f32 %v923
      %vm930 = vmor %vm928, %vm929
      %v931 = vsel %vm930, %v923, %v927
      %v932 = vand.u32 2147483647, %v405
      %vm933 = vcmp.eq.f32.partialorder %v932, 8.507059e+37
      %v934 = vand.u32 %v405, 2147483648
      %v935 = vor.u32 1.1754944e-38, %v934
      %v936 = vsel %vm933, %v935, %v931
      %v937 = vmul.f32 1.0, %v936
      %v938 = vrcp.pop %v406
      %v939 = vmul.f32 %v406, %v938
      %v940 = vsub.f32 1.0, %v939
      %v941 = vmul.f32 %v938, %v940
      %v942 = vadd.f32 %v938, %v941
      %vm943 = vweird.f32 %v406
      %vm944 = vweird.f32 %v938
      %vm945 = vmor %vm943, %vm944
      %v946 = vsel %vm945, %v938, %v942
      %v947 = vand.u32 2147483647, %v406
      %vm948 = vcmp.eq.f32.partialorder %v947, 8.507059e+37
      %v949 = vand.u32 %v406, 2147483648
      %v950 = vor.u32 1.1754944e-38, %v949
      %v951 = vsel %vm948, %v950, %v946
      %v952 = vmul.f32 1.0, %v951
      %v953 = vrcp.pop %v407
      %v954 = vmul.f32 %v407, %v953
      %v955 = vsub.f32 1.0, %v954
      %v956 = vmul.f32 %v953, %v955
      %v957 = vadd.f32 %v953, %v956
      %vm958 = vweird.f32 %v407
      %vm959 = vweird.f32 %v953
      %vm960 = vmor %vm958, %vm959
      %v961 = vsel %vm960, %v953, %v957
      %v962 = vand.u32 2147483647, %v407
      %vm963 = vcmp.eq.f32.partialorder %v962, 8.507059e+37
      %v964 = vand.u32 %v407, 2147483648
      %v965 = vor.u32 1.1754944e-38, %v964
      %v966 = vsel %vm963, %v965, %v961
      %v967 = vmul.f32 1.0, %v966
      %v968 = vrcp.pop %v408
      %v969 = vmul.f32 %v408, %v968
      %v970 = vsub.f32 1.0, %v969
      %v971 = vmul.f32 %v968, %v970
      %v972 = vadd.f32 %v968, %v971
      %vm973 = vweird.f32 %v408
      %vm974 = vweird.f32 %v968
      %vm975 = vmor %vm973, %vm974
      %v976 = vsel %vm975, %v968, %v972
      %v977 = vand.u32 2147483647, %v408
      %vm978 = vcmp.eq.f32.partialorder %v977, 8.507059e+37
      %v979 = vand.u32 %v408, 2147483648
      %v980 = vor.u32 1.1754944e-38, %v979
      %v981 = vsel %vm978, %v980, %v976
      %v982 = vmul.f32 1.0, %v981
      %v983 = vrcp.pop %v409
      %v984 = vmul.f32 %v409, %v983
      %v985 = vsub.f32 1.0, %v984
      %v986 = vmul.f32 %v983, %v985
      %v987 = vadd.f32 %v983, %v986
      %vm988 = vweird.f32 %v409
      %vm989 = vweird.f32 %v983
      %vm990 = vmor %vm988, %vm989
      %v991 = vsel %vm990, %v983, %v987
      %v992 = vand.u32 2147483647, %v409
      %vm993 = vcmp.eq.f32.partialorder %v992, 8.507059e+37
      %v994 = vand.u32 %v409, 2147483648
      %v995 = vor.u32 1.1754944e-38, %v994
      %v996 = vsel %vm993, %v995, %v991
      %v997 = vmul.f32 1.0, %v996
      %v998 = vrcp.pop %v410
      %v999 = vmul.f32 %v410, %v998
      %v1000 = vsub.f32 1.0, %v999
      %v1001 = vmul.f32 %v998, %v1000
      %v1002 = vadd.f32 %v998, %v1001
      %vm1003 = vweird.f32 %v410
      %vm1004 = vweird.f32 %v998
      %vm1005 = vmor %vm1003, %vm1004
      %v1006 = vsel %vm1005, %v998, %v1002
      %v1007 = vand.u32 2147483647, %v410
      %vm1008 = vcmp.eq.f32.partialorder %v1007, 8.507059e+37
      %v1009 = vand.u32 %v410, 2147483648
      %v1010 = vor.u32 1.1754944e-38, %v1009
      %v1011 = vsel %vm1008, %v1010, %v1006
      %v1012 = vmul.f32 1.0, %v1011
      %v1013 = vrcp.pop %v411
      %v1014 = vmul.f32 %v411, %v1013
      %v1015 = vsub.f32 1.0, %v1014
      %v1016 = vmul.f32 %v1013, %v1015
      %v1017 = vadd.f32 %v1013, %v1016
      %vm1018 = vweird.f32 %v411
      %vm1019 = vweird.f32 %v1013
      %vm1020 = vmor %vm1018, %vm1019
      %v1021 = vsel %vm1020, %v1013, %v1017
      %v1022 = vand.u32 2147483647, %v411
      %vm1023 = vcmp.eq.f32.partialorder %v1022, 8.507059e+37
      %v1024 = vand.u32 %v411, 2147483648
      %v1025 = vor.u32 1.1754944e-38, %v1024
      %v1026 = vsel %vm1023, %v1025, %v1021
      %v1027 = vmul.f32 1.0, %v1026
      %v1028 = vrcp.pop %v412
      %v1029 = vmul.f32 %v412, %v1028
      %v1030 = vsub.f32 1.0, %v1029
      %v1031 = vmul.f32 %v1028, %v1030
      %v1032 = vadd.f32 %v1028, %v1031
      %vm1033 = vweird.f32 %v412
      %vm1034 = vweird.f32 %v1028
      %vm1035 = vmor %vm1033, %vm1034
      %v1036 = vsel %vm1035, %v1028, %v1032
      %v1037 = vand.u32 2147483647, %v412
      %vm1038 = vcmp.eq.f32.partialorder %v1037, 8.507059e+37
      %v1039 = vand.u32 %v412, 2147483648
      %v1040 = vor.u32 1.1754944e-38, %v1039
      %v1041 = vsel %vm1038, %v1040, %v1036
      %v1042 = vmul.f32 1.0, %v1041
      %v1043 = vld [vmem:[%s1] sm:$0xff]
      %v1044 = vld [vmem:[%s1 + $0x8] sm:$0xff]
      %v1045 = vld [vmem:[%s1 + $0x10] sm:$0xff]
      %v1046 = vld [vmem:[%s1 + $0x18] sm:$0xff]
      %v1047 = vld [vmem:[%s1 + $0x20] sm:$0xff]
      %v1048 = vld [vmem:[%s1 + $0x28] sm:$0xff]
      %v1049 = vld [vmem:[%s1 + $0x30] sm:$0xff]
      %v1050 = vld [vmem:[%s1 + $0x38] sm:$0xff]
      %v1051 = vld [vmem:[%s1 + $0x40] sm:$0xff]
      %v1052 = vld [vmem:[%s1 + $0x48] sm:$0xff]
      %v1053 = vld [vmem:[%s1 + $0x50] sm:$0xff]
      %v1054 = vld [vmem:[%s1 + $0x58] sm:$0xff]
      %v1055 = vld [vmem:[%s1 + $0x60] sm:$0xff]
      %v1056 = vld [vmem:[%s1 + $0x68] sm:$0xff]
      %v1057 = vld [vmem:[%s1 + $0x70] sm:$0xff]
      %v1058 = vld [vmem:[%s1 + $0x78] sm:$0xff]
      %v1059 = vld [vmem:[%s1 + $0x80] sm:$0xff]
      %v1060 = vld [vmem:[%s1 + $0x88] sm:$0xff]
      %v1061 = vld [vmem:[%s1 + $0x90] sm:$0xff]
      %v1062 = vld [vmem:[%s1 + $0x98] sm:$0xff]
      %v1063 = vld [vmem:[%s1 + $0xa0] sm:$0xff]
      %v1064 = vld [vmem:[%s1 + $0xa8] sm:$0xff]
      %v1065 = vld [vmem:[%s1 + $0xb0] sm:$0xff]
      %v1066 = vld [vmem:[%s1 + $0xb8] sm:$0xff]
      %v1067 = vld [vmem:[%s1 + $0xc0] sm:$0xff]
      %v1068 = vld [vmem:[%s1 + $0xc8] sm:$0xff]
      %v1069 = vld [vmem:[%s1 + $0xd0] sm:$0xff]
      %v1070 = vld [vmem:[%s1 + $0xd8] sm:$0xff]
      %v1071 = vld [vmem:[%s1 + $0xe0] sm:$0xff]
      %v1072 = vld [vmem:[%s1 + $0xe8] sm:$0xff]
      %v1073 = vld [vmem:[%s1 + $0xf0] sm:$0xff]
      %v1074 = vld [vmem:[%s1 + $0xf8] sm:$0xff]
      %v1075 = vld [vmem:[%s1 + $0x100] sm:$0xff]
      %v1076 = vld [vmem:[%s1 + $0x108] sm:$0xff]
      %v1077 = vld [vmem:[%s1 + $0x110] sm:$0xff]
      %v1078 = vld [vmem:[%s1 + $0x118] sm:$0xff]
      %v1079 = vld [vmem:[%s1 + $0x120] sm:$0xff]
      %v1080 = vld [vmem:[%s1 + $0x128] sm:$0xff]
      %v1081 = vld [vmem:[%s1 + $0x130] sm:$0xff]
      %v1082 = vld [vmem:[%s1 + $0x138] sm:$0xff]
      %v1083 = vld [vmem:[%s1 + $0x140] sm:$0xff]
      %v1084 = vld [vmem:[%s1 + $0x148] sm:$0xff]
      %v1085 = vld [vmem:[%s1 + $0x150] sm:$0xff]
      %v1086 = vld [vmem:[%s1 + $0x158] sm:$0xff]
      %v1087 = vld [vmem:[%s1 + $0x160] sm:$0xff]
      %v1088 = vld [vmem:[%s1 + $0x168] sm:$0xff]
      %v1089 = vld [vmem:[%s1 + $0x170] sm:$0xff]
      %v1090 = vld [vmem:[%s1 + $0x178] sm:$0xff]
      %v1091 = vld [vmem:[%s1 + $0x180] sm:$0xff]
      %v1092 = vld [vmem:[%s1 + $0x188] sm:$0xff]
      %v1093 = vld [vmem:[%s1 + $0x190] sm:$0xff]
      %v1094 = vld [vmem:[%s1 + $0x198] sm:$0xff]
      %v1095 = vld [vmem:[%s1 + $0x1a0] sm:$0xff]
      %v1096 = vld [vmem:[%s1 + $0x1a8] sm:$0xff]
      %v1097 = vld [vmem:[%s1 + $0x1b0] sm:$0xff]
      %v1098 = vld [vmem:[%s1 + $0x1b8] sm:$0xff]
      %v1099 = vld [vmem:[%s1 + $0x1c0] sm:$0xff]
      %v1100 = vld [vmem:[%s1 + $0x1c8] sm:$0xff]
      %v1101 = vld [vmem:[%s1 + $0x1d0] sm:$0xff]
      %v1102 = vld [vmem:[%s1 + $0x1d8] sm:$0xff]
      %v1103 = vld [vmem:[%s1 + $0x1e0] sm:$0xff]
      %v1104 = vld [vmem:[%s1 + $0x1e8] sm:$0xff]
      %v1105 = vld [vmem:[%s1 + $0x1f0] sm:$0xff]
      %v1106 = vld [vmem:[%s1 + $0x1f8] sm:$0xff]
      %v1107 = vld [vmem:[%s1 + $0x200] sm:$0xff]
      %v1108 = vld [vmem:[%s1 + $0x208] sm:$0xff]
      %v1109 = vld [vmem:[%s1 + $0x210] sm:$0xff]
      %v1110 = vld [vmem:[%s1 + $0x218] sm:$0xff]
      %v1111 = vld [vmem:[%s1 + $0x220] sm:$0xff]
      %v1112 = vld [vmem:[%s1 + $0x228] sm:$0xff]
      %v1113 = vld [vmem:[%s1 + $0x230] sm:$0xff]
      %v1114 = vld [vmem:[%s1 + $0x238] sm:$0xff]
      %v1115 = vld [vmem:[%s1 + $0x240] sm:$0xff]
      %v1116 = vld [vmem:[%s1 + $0x248] sm:$0xff]
      %v1117 = vld [vmem:[%s1 + $0x250] sm:$0xff]
      %v1118 = vld [vmem:[%s1 + $0x258] sm:$0xff]
      %v1119 = vld [vmem:[%s1 + $0x260] sm:$0xff]
      %v1120 = vld [vmem:[%s1 + $0x268] sm:$0xff]
      %v1121 = vld [vmem:[%s1 + $0x270] sm:$0xff]
      %v1122 = vld [vmem:[%s1 + $0x278] sm:$0xff]
      %v1123 = vld [vmem:[%s1 + $0x280] sm:$0xff]
      %v1124 = vld [vmem:[%s1 + $0x288] sm:$0xff]
      %v1125 = vld [vmem:[%s1 + $0x290] sm:$0xff]
      %v1126 = vld [vmem:[%s1 + $0x298] sm:$0xff]
      %1128 = vset.pattern.permute.xlu0 0
      %1129 = vperm.xlu0 %1128, %v427
      %v1130 = vpop.permute.xlu0 %1129
      %1133 = vset.pattern.permute.xlu0 0
      %1134 = vperm.xlu0 %1133, %v442
      %v1135 = vpop.permute.xlu0 %1134
      %1138 = vset.pattern.permute.xlu0 0
      %1139 = vperm.xlu0 %1138, %v457
      %v1140 = vpop.permute.xlu0 %1139
      %1143 = vset.pattern.permute.xlu0 0
      %1144 = vperm.xlu0 %1143, %v472
      %v1145 = vpop.permute.xlu0 %1144
      %1148 = vset.pattern.permute.xlu0 0
      %1149 = vperm.xlu0 %1148, %v487
      %v1150 = vpop.permute.xlu0 %1149
      %1153 = vset.pattern.permute.xlu0 0
      %1154 = vperm.xlu0 %1153, %v502
      %v1155 = vpop.permute.xlu0 %1154
      %1158 = vset.pattern.permute.xlu0 0
      %1159 = vperm.xlu0 %1158, %v517
      %v1160 = vpop.permute.xlu0 %1159
      %1163 = vset.pattern.permute.xlu0 0
      %1164 = vperm.xlu0 %1163, %v532
      %v1165 = vpop.permute.xlu0 %1164
      %1168 = vset.pattern.permute.xlu0 0
      %1169 = vperm.xlu0 %1168, %v547
      %v1170 = vpop.permute.xlu0 %1169
      %1173 = vset.pattern.permute.xlu0 0
      %1174 = vperm.xlu0 %1173, %v562
      %v1175 = vpop.permute.xlu0 %1174
      %1178 = vset.pattern.permute.xlu0 0
      %1179 = vperm.xlu0 %1178, %v577
      %v1180 = vpop.permute.xlu0 %1179
      %1183 = vset.pattern.permute.xlu0 0
      %1184 = vperm.xlu0 %1183, %v592
      %v1185 = vpop.permute.xlu0 %1184
      %1188 = vset.pattern.permute.xlu0 0
      %1189 = vperm.xlu0 %1188, %v607
      %v1190 = vpop.permute.xlu0 %1189
      %1193 = vset.pattern.permute.xlu0 0
      %1194 = vperm.xlu0 %1193, %v622
      %v1195 = vpop.permute.xlu0 %1194
      %1198 = vset.pattern.permute.xlu0 0
      %1199 = vperm.xlu0 %1198, %v637
      %v1200 = vpop.permute.xlu0 %1199
      %1203 = vset.pattern.permute.xlu0 0
      %1204 = vperm.xlu0 %1203, %v652
      %v1205 = vpop.permute.xlu0 %1204
      %1208 = vset.pattern.permute.xlu0 0
      %1209 = vperm.xlu0 %1208, %v667
      %v1210 = vpop.permute.xlu0 %1209
      %1213 = vset.pattern.permute.xlu0 0
      %1214 = vperm.xlu0 %1213, %v682
      %v1215 = vpop.permute.xlu0 %1214
      %1218 = vset.pattern.permute.xlu0 0
      %1219 = vperm.xlu0 %1218, %v697
      %v1220 = vpop.permute.xlu0 %1219
      %1223 = vset.pattern.permute.xlu0 0
      %1224 = vperm.xlu0 %1223, %v712
      %v1225 = vpop.permute.xlu0 %1224
      %1228 = vset.pattern.permute.xlu0 0
      %1229 = vperm.xlu0 %1228, %v727
      %v1230 = vpop.permute.xlu0 %1229
      %1233 = vset.pattern.permute.xlu0 0
      %1234 = vperm.xlu0 %1233, %v742
      %v1235 = vpop.permute.xlu0 %1234
      %1238 = vset.pattern.permute.xlu0 0
      %1239 = vperm.xlu0 %1238, %v757
      %v1240 = vpop.permute.xlu0 %1239
      %1243 = vset.pattern.permute.xlu0 0
      %1244 = vperm.xlu0 %1243, %v772
      %v1245 = vpop.permute.xlu0 %1244
      %1248 = vset.pattern.permute.xlu0 0
      %1249 = vperm.xlu0 %1248, %v787
      %v1250 = vpop.permute.xlu0 %1249
      %1253 = vset.pattern.permute.xlu0 0
      %1254 = vperm.xlu0 %1253, %v802
      %v1255 = vpop.permute.xlu0 %1254
      %1258 = vset.pattern.permute.xlu0 0
      %1259 = vperm.xlu0 %1258, %v817
      %v1260 = vpop.permute.xlu0 %1259
      %1263 = vset.pattern.permute.xlu0 0
      %1264 = vperm.xlu0 %1263, %v832
      %v1265 = vpop.permute.xlu0 %1264
      %1268 = vset.pattern.permute.xlu0 0
      %1269 = vperm.xlu0 %1268, %v847
      %v1270 = vpop.permute.xlu0 %1269
      %1273 = vset.pattern.permute.xlu0 0
      %1274 = vperm.xlu0 %1273, %v862
      %v1275 = vpop.permute.xlu0 %1274
      %1278 = vset.pattern.permute.xlu0 0
      %1279 = vperm.xlu0 %1278, %v877
      %v1280 = vpop.permute.xlu0 %1279
      %1283 = vset.pattern.permute.xlu0 0
      %1284 = vperm.xlu0 %1283, %v892
      %v1285 = vpop.permute.xlu0 %1284
      %1288 = vset.pattern.permute.xlu0 0
      %1289 = vperm.xlu0 %1288, %v907
      %v1290 = vpop.permute.xlu0 %1289
      %1293 = vset.pattern.permute.xlu0 0
      %1294 = vperm.xlu0 %1293, %v922
      %v1295 = vpop.permute.xlu0 %1294
      %1298 = vset.pattern.permute.xlu0 0
      %1299 = vperm.xlu0 %1298, %v937
      %v1300 = vpop.permute.xlu0 %1299
      %1303 = vset.pattern.permute.xlu0 0
      %1304 = vperm.xlu0 %1303, %v952
      %v1305 = vpop.permute.xlu0 %1304
      %1308 = vset.pattern.permute.xlu0 0
      %1309 = vperm.xlu0 %1308, %v967
      %v1310 = vpop.permute.xlu0 %1309
      %1313 = vset.pattern.permute.xlu0 0
      %1314 = vperm.xlu0 %1313, %v982
      %v1315 = vpop.permute.xlu0 %1314
      %1318 = vset.pattern.permute.xlu0 0
      %1319 = vperm.xlu0 %1318, %v997
      %v1320 = vpop.permute.xlu0 %1319
      %1323 = vset.pattern.permute.xlu0 0
      %1324 = vperm.xlu0 %1323, %v1012
      %v1325 = vpop.permute.xlu0 %1324
      %1328 = vset.pattern.permute.xlu0 0
      %1329 = vperm.xlu0 %1328, %v1027
      %v1330 = vpop.permute.xlu0 %1329
      %1333 = vset.pattern.permute.xlu0 0
      %1334 = vperm.xlu0 %1333, %v1042
      %v1335 = vpop.permute.xlu0 %1334
      %v1337 = vmul.f32 %v1043, %v1130
      %v1338 = vmul.f32 %v1044, %v1130
      %v1339 = vmul.f32 %v1045, %v1135
      %v1340 = vmul.f32 %v1046, %v1135
      %v1341 = vmul.f32 %v1047, %v1140
      %v1342 = vmul.f32 %v1048, %v1140
      %v1343 = vmul.f32 %v1049, %v1145
      %v1344 = vmul.f32 %v1050, %v1145
      %v1345 = vmul.f32 %v1051, %v1150
      %v1346 = vmul.f32 %v1052, %v1150
      %v1347 = vmul.f32 %v1053, %v1155
      %v1348 = vmul.f32 %v1054, %v1155
      %v1349 = vmul.f32 %v1055, %v1160
      %v1350 = vmul.f32 %v1056, %v1160
      %v1351 = vmul.f32 %v1057, %v1165
      %v1352 = vmul.f32 %v1058, %v1165
      %v1353 = vmul.f32 %v1059, %v1170
      %v1354 = vmul.f32 %v1060, %v1170
      %v1355 = vmul.f32 %v1061, %v1175
      %v1356 = vmul.f32 %v1062, %v1175
      %v1357 = vmul.f32 %v1063, %v1180
      %v1358 = vmul.f32 %v1064, %v1180
      %v1359 = vmul.f32 %v1065, %v1185
      %v1360 = vmul.f32 %v1066, %v1185
      %v1361 = vmul.f32 %v1067, %v1190
      %v1362 = vmul.f32 %v1068, %v1190
      %v1363 = vmul.f32 %v1069, %v1195
      %v1364 = vmul.f32 %v1070, %v1195
      %v1365 = vmul.f32 %v1071, %v1200
      %v1366 = vmul.f32 %v1072, %v1200
      %v1367 = vmul.f32 %v1073, %v1205
      %v1368 = vmul.f32 %v1074, %v1205
      %v1369 = vmul.f32 %v1075, %v1210
      %v1370 = vmul.f32 %v1076, %v1210
      %v1371 = vmul.f32 %v1077, %v1215
      %v1372 = vmul.f32 %v1078, %v1215
      %v1373 = vmul.f32 %v1079, %v1220
      %v1374 = vmul.f32 %v1080, %v1220
      %v1375 = vmul.f32 %v1081, %v1225
      %v1376 = vmul.f32 %v1082, %v1225
      %v1377 = vmul.f32 %v1083, %v1230
      %v1378 = vmul.f32 %v1084, %v1230
      %v1379 = vmul.f32 %v1085, %v1235
      %v1380 = vmul.f32 %v1086, %v1235
      %v1381 = vmul.f32 %v1087, %v1240
      %v1382 = vmul.f32 %v1088, %v1240
      %v1383 = vmul.f32 %v1089, %v1245
      %v1384 = vmul.f32 %v1090, %v1245
      %v1385 = vmul.f32 %v1091, %v1250
      %v1386 = vmul.f32 %v1092, %v1250
      %v1387 = vmul.f32 %v1093, %v1255
      %v1388 = vmul.f32 %v1094, %v1255
      %v1389 = vmul.f32 %v1095, %v1260
      %v1390 = vmul.f32 %v1096, %v1260
      %v1391 = vmul.f32 %v1097, %v1265
      %v1392 = vmul.f32 %v1098, %v1265
      %v1393 = vmul.f32 %v1099, %v1270
      %v1394 = vmul.f32 %v1100, %v1270
      %v1395 = vmul.f32 %v1101, %v1275
      %v1396 = vmul.f32 %v1102, %v1275
      %v1397 = vmul.f32 %v1103, %v1280
      %v1398 = vmul.f32 %v1104, %v1280
      %v1399 = vmul.f32 %v1105, %v1285
      %v1400 = vmul.f32 %v1106, %v1285
      %v1401 = vmul.f32 %v1107, %v1290
      %v1402 = vmul.f32 %v1108, %v1290
      %v1403 = vmul.f32 %v1109, %v1295
      %v1404 = vmul.f32 %v1110, %v1295
      %v1405 = vmul.f32 %v1111, %v1300
      %v1406 = vmul.f32 %v1112, %v1300
      %v1407 = vmul.f32 %v1113, %v1305
      %v1408 = vmul.f32 %v1114, %v1305
      %v1409 = vmul.f32 %v1115, %v1310
      %v1410 = vmul.f32 %v1116, %v1310
      %v1411 = vmul.f32 %v1117, %v1315
      %v1412 = vmul.f32 %v1118, %v1315
      %v1413 = vmul.f32 %v1119, %v1320
      %v1414 = vmul.f32 %v1120, %v1320
      %v1415 = vmul.f32 %v1121, %v1325
      %v1416 = vmul.f32 %v1122, %v1325
      %v1417 = vmul.f32 %v1123, %v1330
      %v1418 = vmul.f32 %v1124, %v1330
      %v1419 = vmul.f32 %v1125, %v1335
      %v1420 = vmul.f32 %v1126, %v1335
      %v1421 = vld [vmem:[%s2] sm:$0xff]
      %v1422 = vld [vmem:[%s2 + $0x8] sm:$0xff]
      %v1423 = vld [vmem:[%s2 + $0x10] sm:$0xff]
      %v1424 = vld [vmem:[%s2 + $0x18] sm:$0xff]
      %v1425 = vld [vmem:[%s2 + $0x20] sm:$0xff]
      %v1426 = vld [vmem:[%s2 + $0x28] sm:$0xff]
      %v1427 = vld [vmem:[%s2 + $0x30] sm:$0xff]
      %v1428 = vld [vmem:[%s2 + $0x38] sm:$0xff]
      %v1429 = vld [vmem:[%s2 + $0x40] sm:$0xff]
      %v1430 = vld [vmem:[%s2 + $0x48] sm:$0xff]
      %v1431 = vld [vmem:[%s2 + $0x50] sm:$0xff]
      %v1432 = vld [vmem:[%s2 + $0x58] sm:$0xff]
      %v1433 = vld [vmem:[%s2 + $0x60] sm:$0xff]
      %v1434 = vld [vmem:[%s2 + $0x68] sm:$0xff]
      %v1435 = vld [vmem:[%s2 + $0x70] sm:$0xff]
      %v1436 = vld [vmem:[%s2 + $0x78] sm:$0xff]
      %v1437 = vld [vmem:[%s2 + $0x80] sm:$0xff]
      %v1438 = vld [vmem:[%s2 + $0x88] sm:$0xff]
      %v1439 = vld [vmem:[%s2 + $0x90] sm:$0xff]
      %v1440 = vld [vmem:[%s2 + $0x98] sm:$0xff]
      %v1441 = vld [vmem:[%s2 + $0xa0] sm:$0xff]
      %v1442 = vld [vmem:[%s2 + $0xa8] sm:$0xff]
      %v1443 = vld [vmem:[%s2 + $0xb0] sm:$0xff]
      %v1444 = vld [vmem:[%s2 + $0xb8] sm:$0xff]
      %v1445 = vld [vmem:[%s2 + $0xc0] sm:$0xff]
      %v1446 = vld [vmem:[%s2 + $0xc8] sm:$0xff]
      %v1447 = vld [vmem:[%s2 + $0xd0] sm:$0xff]
      %v1448 = vld [vmem:[%s2 + $0xd8] sm:$0xff]
      %v1449 = vld [vmem:[%s2 + $0xe0] sm:$0xff]
      %v1450 = vld [vmem:[%s2 + $0xe8] sm:$0xff]
      %v1451 = vld [vmem:[%s2 + $0xf0] sm:$0xff]
      %v1452 = vld [vmem:[%s2 + $0xf8] sm:$0xff]
      %v1453 = vld [vmem:[%s2 + $0x100] sm:$0xff]
      %v1454 = vld [vmem:[%s2 + $0x108] sm:$0xff]
      %v1455 = vld [vmem:[%s2 + $0x110] sm:$0xff]
      %v1456 = vld [vmem:[%s2 + $0x118] sm:$0xff]
      %v1457 = vld [vmem:[%s2 + $0x120] sm:$0xff]
      %v1458 = vld [vmem:[%s2 + $0x128] sm:$0xff]
      %v1459 = vld [vmem:[%s2 + $0x130] sm:$0xff]
      %v1460 = vld [vmem:[%s2 + $0x138] sm:$0xff]
      %v1461 = vld [vmem:[%s2 + $0x140] sm:$0xff]
      %v1462 = vld [vmem:[%s2 + $0x148] sm:$0xff]
      %vm1463 = vcmask 654336
      %v1465 = vsel %vm1463, %v1423, 0
      %v1468 = vsel %vm1463, %v1426, 0
      %v1471 = vsel %vm1463, %v1429, 0
      %v1474 = vsel %vm1463, %v1432, 0
      %v1477 = vsel %vm1463, %v1435, 0
      %v1480 = vsel %vm1463, %v1438, 0
      %v1483 = vsel %vm1463, %v1441, 0
      %v1486 = vsel %vm1463, %v1444, 0
      %v1489 = vsel %vm1463, %v1447, 0
      %v1492 = vsel %vm1463, %v1450, 0
      %v1495 = vsel %vm1463, %v1453, 0
      %v1498 = vsel %vm1463, %v1456, 0
      %v1501 = vsel %vm1463, %v1459, 0
      %v1504 = vsel %vm1463, %v1462, 0
      %1506 = vmatpush.msra.mxu0 %v1367
      %1507 = vmatpush.msra.mxu0 %v1365
      %1508 = vmatpush.msra.mxu0 %v1363
      %1509 = vmatpush.msra.mxu0 %v1361
      %1510 = vmatpush.msra.mxu0 %v1359
      %1511 = vmatpush.msra.mxu0 %v1357
      %1512 = vmatpush.msra.mxu0 %v1355
      %1513 = vmatpush.msra.mxu0 %v1353
      %1514 = vmatpush.msra.mxu0 %v1351
      %1515 = vmatpush.msra.mxu0 %v1349
      %1516 = vmatpush.msra.mxu0 %v1347
      %1517 = vmatpush.msra.mxu0 %v1345
      %1518 = vmatpush.msra.mxu0 %v1343
      %1519 = vmatpush.msra.mxu0 %v1341
      %1520 = vmatpush.msra.mxu0 %v1339
      %1521 = vmatpush.msra.mxu0 %v1337
      %1522 = vmatmul.f32.gmra.mxu0 %v1421
      %v1523 = vpop.f32.mrf.mxu0
      %v1524 = vadd.f32 0.0, %v1523
      %1525 = vmatmul.f32.gmra.mxu0 %v1424
      %v1526 = vpop.f32.mrf.mxu0
      %v1527 = vadd.f32 0.0, %v1526
      %1528 = vmatmul.f32.gmra.mxu0 %v1427
      %v1529 = vpop.f32.mrf.mxu0
      %v1530 = vadd.f32 0.0, %v1529
      %1531 = vmatmul.f32.gmra.mxu0 %v1430
      %v1532 = vpop.f32.mrf.mxu0
      %v1533 = vadd.f32 0.0, %v1532
      %1534 = vmatmul.f32.gmra.mxu0 %v1433
      %v1535 = vpop.f32.mrf.mxu0
      %v1536 = vadd.f32 0.0, %v1535
      %1537 = vmatmul.f32.gmra.mxu0 %v1436
      %v1538 = vpop.f32.mrf.mxu0
      %v1539 = vadd.f32 0.0, %v1538
      %1540 = vmatmul.f32.gmra.mxu0 %v1439
      %v1541 = vpop.f32.mrf.mxu0
      %v1542 = vadd.f32 0.0, %v1541
      %1543 = vmatmul.f32.gmra.mxu0 %v1442
      %v1544 = vpop.f32.mrf.mxu0
      %v1545 = vadd.f32 0.0, %v1544
      %1546 = vmatmul.f32.gmra.mxu0 %v1445
      %v1547 = vpop.f32.mrf.mxu0
      %v1548 = vadd.f32 0.0, %v1547
      %1549 = vmatmul.f32.gmra.mxu0 %v1448
      %v1550 = vpop.f32.mrf.mxu0
      %v1551 = vadd.f32 0.0, %v1550
      %1552 = vmatmul.f32.gmra.mxu0 %v1451
      %v1553 = vpop.f32.mrf.mxu0
      %v1554 = vadd.f32 0.0, %v1553
      %1555 = vmatmul.f32.gmra.mxu0 %v1454
      %v1556 = vpop.f32.mrf.mxu0
      %v1557 = vadd.f32 0.0, %v1556
      %1558 = vmatmul.f32.gmra.mxu0 %v1457
      %v1559 = vpop.f32.mrf.mxu0
      %v1560 = vadd.f32 0.0, %v1559
      %1561 = vmatmul.f32.gmra.mxu0 %v1460
      %v1562 = vpop.f32.mrf.mxu0
      %v1563 = vadd.f32 0.0, %v1562
      %1564 = vdwg.mxu0
      %1565 = vmatpush.msra.mxu0 %v1399
      %1566 = vmatpush.msra.mxu0 %v1397
      %1567 = vmatpush.msra.mxu0 %v1395
      %1568 = vmatpush.msra.mxu0 %v1393
      %1569 = vmatpush.msra.mxu0 %v1391
      %1570 = vmatpush.msra.mxu0 %v1389
      %1571 = vmatpush.msra.mxu0 %v1387
      %1572 = vmatpush.msra.mxu0 %v1385
      %1573 = vmatpush.msra.mxu0 %v1383
      %1574 = vmatpush.msra.mxu0 %v1381
      %1575 = vmatpush.msra.mxu0 %v1379
      %1576 = vmatpush.msra.mxu0 %v1377
      %1577 = vmatpush.msra.mxu0 %v1375
      %1578 = vmatpush.msra.mxu0 %v1373
      %1579 = vmatpush.msra.mxu0 %v1371
      %1580 = vmatpush.msra.mxu0 %v1369
      %1581 = vmatmul.f32.gmra.mxu0 %v1422
      %v1582 = vpop.f32.mrf.mxu0
      %v1583 = vadd.f32 %v1524, %v1582
      %1584 = vmatmul.f32.gmra.mxu0 %v1425
      %v1585 = vpop.f32.mrf.mxu0
      %v1586 = vadd.f32 %v1527, %v1585
      %1587 = vmatmul.f32.gmra.mxu0 %v1428
      %v1588 = vpop.f32.mrf.mxu0
      %v1589 = vadd.f32 %v1530, %v1588
      %1590 = vmatmul.f32.gmra.mxu0 %v1431
      %v1591 = vpop.f32.mrf.mxu0
      %v1592 = vadd.f32 %v1533, %v1591
      %1593 = vmatmul.f32.gmra.mxu0 %v1434
      %v1594 = vpop.f32.mrf.mxu0
      %v1595 = vadd.f32 %v1536, %v1594
      %1596 = vmatmul.f32.gmra.mxu0 %v1437
      %v1597 = vpop.f32.mrf.mxu0
      %v1598 = vadd.f32 %v1539, %v1597
      %1599 = vmatmul.f32.gmra.mxu0 %v1440
      %v1600 = vpop.f32.mrf.mxu0
      %v1601 = vadd.f32 %v1542, %v1600
      %1602 = vmatmul.f32.gmra.mxu0 %v1443
      %v1603 = vpop.f32.mrf.mxu0
      %v1604 = vadd.f32 %v1545, %v1603
      %1605 = vmatmul.f32.gmra.mxu0 %v1446
      %v1606 = vpop.f32.mrf.mxu0
      %v1607 = vadd.f32 %v1548, %v1606
      %1608 = vmatmul.f32.gmra.mxu0 %v1449
      %v1609 = vpop.f32.mrf.mxu0
      %v1610 = vadd.f32 %v1551, %v1609
      %1611 = vmatmul.f32.gmra.mxu0 %v1452
      %v1612 = vpop.f32.mrf.mxu0
      %v1613 = vadd.f32 %v1554, %v1612
      %1614 = vmatmul.f32.gmra.mxu0 %v1455
      %v1615 = vpop.f32.mrf.mxu0
      %v1616 = vadd.f32 %v1557, %v1615
      %1617 = vmatmul.f32.gmra.mxu0 %v1458
      %v1618 = vpop.f32.mrf.mxu0
      %v1619 = vadd.f32 %v1560, %v1618
      %1620 = vmatmul.f32.gmra.mxu0 %v1461
      %v1621 = vpop.f32.mrf.mxu0
      %v1622 = vadd.f32 %v1563, %v1621
      %1623 = vdwg.mxu0
      %1624 = vmatpush.msra.mxu0 0.0
      %1625 = vmatpush.msra.mxu0 0.0
      %1626 = vmatpush.msra.mxu0 0.0
      %1627 = vmatpush.msra.mxu0 0.0
      %1628 = vmatpush.msra.mxu0 0.0
      %1629 = vmatpush.msra.mxu0 0.0
      %1630 = vmatpush.msra.mxu0 %v1419
      %1631 = vmatpush.msra.mxu0 %v1417
      %1632 = vmatpush.msra.mxu0 %v1415
      %1633 = vmatpush.msra.mxu0 %v1413
      %1634 = vmatpush.msra.mxu0 %v1411
      %1635 = vmatpush.msra.mxu0 %v1409
      %1636 = vmatpush.msra.mxu0 %v1407
      %1637 = vmatpush.msra.mxu0 %v1405
      %1638 = vmatpush.msra.mxu0 %v1403
      %1639 = vmatpush.msra.mxu0 %v1401
      %1640 = vmatmul.f32.gmra.mxu0 %v1465
      %v1641 = vpop.f32.mrf.mxu0
      %v1642 = vadd.f32 %v1583, %v1641
      %1643 = vmatmul.f32.gmra.mxu0 %v1468
      %v1644 = vpop.f32.mrf.mxu0
      %v1645 = vadd.f32 %v1586, %v1644
      %1646 = vmatmul.f32.gmra.mxu0 %v1471
      %v1647 = vpop.f32.mrf.mxu0
      %v1648 = vadd.f32 %v1589, %v1647
      %1649 = vmatmul.f32.gmra.mxu0 %v1474
      %v1650 = vpop.f32.mrf.mxu0
      %v1651 = vadd.f32 %v1592, %v1650
      %1652 = vmatmul.f32.gmra.mxu0 %v1477
      %v1653 = vpop.f32.mrf.mxu0
      %v1654 = vadd.f32 %v1595, %v1653
      %1655 = vmatmul.f32.gmra.mxu0 %v1480
      %v1656 = vpop.f32.mrf.mxu0
      %v1657 = vadd.f32 %v1598, %v1656
      %1658 = vmatmul.f32.gmra.mxu0 %v1483
      %v1659 = vpop.f32.mrf.mxu0
      %v1660 = vadd.f32 %v1601, %v1659
      %1661 = vmatmul.f32.gmra.mxu0 %v1486
      %v1662 = vpop.f32.mrf.mxu0
      %v1663 = vadd.f32 %v1604, %v1662
      %1664 = vmatmul.f32.gmra.mxu0 %v1489
      %v1665 = vpop.f32.mrf.mxu0
      %v1666 = vadd.f32 %v1607, %v1665
      %1667 = vmatmul.f32.gmra.mxu0 %v1492
      %v1668 = vpop.f32.mrf.mxu0
      %v1669 = vadd.f32 %v1610, %v1668
      %1670 = vmatmul.f32.gmra.mxu0 %v1495
      %v1671 = vpop.f32.mrf.mxu0
      %v1672 = vadd.f32 %v1613, %v1671
      %1673 = vmatmul.f32.gmra.mxu0 %v1498
      %v1674 = vpop.f32.mrf.mxu0
      %v1675 = vadd.f32 %v1616, %v1674
      %1676 = vmatmul.f32.gmra.mxu0 %v1501
      %v1677 = vpop.f32.mrf.mxu0
      %v1678 = vadd.f32 %v1619, %v1677
      %1679 = vmatmul.f32.gmra.mxu0 %v1504
      %v1680 = vpop.f32.mrf.mxu0
      %v1681 = vadd.f32 %v1622, %v1680
      %1682 = vdwg.mxu0
      %1683 = vmatpush.msra.mxu0 %v1368
      %1684 = vmatpush.msra.mxu0 %v1366
      %1685 = vmatpush.msra.mxu0 %v1364
      %1686 = vmatpush.msra.mxu0 %v1362
      %1687 = vmatpush.msra.mxu0 %v1360
      %1688 = vmatpush.msra.mxu0 %v1358
      %1689 = vmatpush.msra.mxu0 %v1356
      %1690 = vmatpush.msra.mxu0 %v1354
      %1691 = vmatpush.msra.mxu0 %v1352
      %1692 = vmatpush.msra.mxu0 %v1350
      %1693 = vmatpush.msra.mxu0 %v1348
      %1694 = vmatpush.msra.mxu0 %v1346
      %1695 = vmatpush.msra.mxu0 %v1344
      %1696 = vmatpush.msra.mxu0 %v1342
      %1697 = vmatpush.msra.mxu0 %v1340
      %1698 = vmatpush.msra.mxu0 %v1338
      %1699 = vmatmul.f32.gmra.mxu0 %v1421
      %v1700 = vpop.f32.mrf.mxu0
      %v1701 = vadd.f32 0.0, %v1700
      %1702 = vmatmul.f32.gmra.mxu0 %v1424
      %v1703 = vpop.f32.mrf.mxu0
      %v1704 = vadd.f32 0.0, %v1703
      %1705 = vmatmul.f32.gmra.mxu0 %v1427
      %v1706 = vpop.f32.mrf.mxu0
      %v1707 = vadd.f32 0.0, %v1706
      %1708 = vmatmul.f32.gmra.mxu0 %v1430
      %v1709 = vpop.f32.mrf.mxu0
      %v1710 = vadd.f32 0.0, %v1709
      %1711 = vmatmul.f32.gmra.mxu0 %v1433
      %v1712 = vpop.f32.mrf.mxu0
      %v1713 = vadd.f32 0.0, %v1712
      %1714 = vmatmul.f32.gmra.mxu0 %v1436
      %v1715 = vpop.f32.mrf.mxu0
      %v1716 = vadd.f32 0.0, %v1715
      %1717 = vmatmul.f32.gmra.mxu0 %v1439
      %v1718 = vpop.f32.mrf.mxu0
      %v1719 = vadd.f32 0.0, %v1718
      %1720 = vmatmul.f32.gmra.mxu0 %v1442
      %v1721 = vpop.f32.mrf.mxu0
      %v1722 = vadd.f32 0.0, %v1721
      %1723 = vmatmul.f32.gmra.mxu0 %v1445
      %v1724 = vpop.f32.mrf.mxu0
      %v1725 = vadd.f32 0.0, %v1724
      %1726 = vmatmul.f32.gmra.mxu0 %v1448
      %v1727 = vpop.f32.mrf.mxu0
      %v1728 = vadd.f32 0.0, %v1727
      %1729 = vmatmul.f32.gmra.mxu0 %v1451
      %v1730 = vpop.f32.mrf.mxu0
      %v1731 = vadd.f32 0.0, %v1730
      %1732 = vmatmul.f32.gmra.mxu0 %v1454
      %v1733 = vpop.f32.mrf.mxu0
      %v1734 = vadd.f32 0.0, %v1733
      %1735 = vmatmul.f32.gmra.mxu0 %v1457
      %v1736 = vpop.f32.mrf.mxu0
      %v1737 = vadd.f32 0.0, %v1736
      %1738 = vmatmul.f32.gmra.mxu0 %v1460
      %v1739 = vpop.f32.mrf.mxu0
      %v1740 = vadd.f32 0.0, %v1739
      %1741 = vdwg.mxu0
      %1742 = vmatpush.msra.mxu0 %v1400
      %1743 = vmatpush.msra.mxu0 %v1398
      %1744 = vmatpush.msra.mxu0 %v1396
      %1745 = vmatpush.msra.mxu0 %v1394
      %1746 = vmatpush.msra.mxu0 %v1392
      %1747 = vmatpush.msra.mxu0 %v1390
      %1748 = vmatpush.msra.mxu0 %v1388
      %1749 = vmatpush.msra.mxu0 %v1386
      %1750 = vmatpush.msra.mxu0 %v1384
      %1751 = vmatpush.msra.mxu0 %v1382
      %1752 = vmatpush.msra.mxu0 %v1380
      %1753 = vmatpush.msra.mxu0 %v1378
      %1754 = vmatpush.msra.mxu0 %v1376
      %1755 = vmatpush.msra.mxu0 %v1374
      %1756 = vmatpush.msra.mxu0 %v1372
      %1757 = vmatpush.msra.mxu0 %v1370
      %1758 = vmatmul.f32.gmra.mxu0 %v1422
      %v1759 = vpop.f32.mrf.mxu0
      %v1760 = vadd.f32 %v1701, %v1759
      %1761 = vmatmul.f32.gmra.mxu0 %v1425
      %v1762 = vpop.f32.mrf.mxu0
      %v1763 = vadd.f32 %v1704, %v1762
      %1764 = vmatmul.f32.gmra.mxu0 %v1428
      %v1765 = vpop.f32.mrf.mxu0
      %v1766 = vadd.f32 %v1707, %v1765
      %1767 = vmatmul.f32.gmra.mxu0 %v1431
      %v1768 = vpop.f32.mrf.mxu0
      %v1769 = vadd.f32 %v1710, %v1768
      %1770 = vmatmul.f32.gmra.mxu0 %v1434
      %v1771 = vpop.f32.mrf.mxu0
      %v1772 = vadd.f32 %v1713, %v1771
      %1773 = vmatmul.f32.gmra.mxu0 %v1437
      %v1774 = vpop.f32.mrf.mxu0
      %v1775 = vadd.f32 %v1716, %v1774
      %1776 = vmatmul.f32.gmra.mxu0 %v1440
      %v1777 = vpop.f32.mrf.mxu0
      %v1778 = vadd.f32 %v1719, %v1777
      %1779 = vmatmul.f32.gmra.mxu0 %v1443
      %v1780 = vpop.f32.mrf.mxu0
      %v1781 = vadd.f32 %v1722, %v1780
      %1782 = vmatmul.f32.gmra.mxu0 %v1446
      %v1783 = vpop.f32.mrf.mxu0
      %v1784 = vadd.f32 %v1725, %v1783
      %1785 = vmatmul.f32.gmra.mxu0 %v1449
      %v1786 = vpop.f32.mrf.mxu0
      %v1787 = vadd.f32 %v1728, %v1786
      %1788 = vmatmul.f32.gmra.mxu0 %v1452
      %v1789 = vpop.f32.mrf.mxu0
      %v1790 = vadd.f32 %v1731, %v1789
      %1791 = vmatmul.f32.gmra.mxu0 %v1455
      %v1792 = vpop.f32.mrf.mxu0
      %v1793 = vadd.f32 %v1734, %v1792
      %1794 = vmatmul.f32.gmra.mxu0 %v1458
      %v1795 = vpop.f32.mrf.mxu0
      %v1796 = vadd.f32 %v1737, %v1795
      %1797 = vmatmul.f32.gmra.mxu0 %v1461
      %v1798 = vpop.f32.mrf.mxu0
      %v1799 = vadd.f32 %v1740, %v1798
      %1800 = vdwg.mxu0
      %1801 = vmatpush.msra.mxu0 0.0
      %1802 = vmatpush.msra.mxu0 0.0
      %1803 = vmatpush.msra.mxu0 0.0
      %1804 = vmatpush.msra.mxu0 0.0
      %1805 = vmatpush.msra.mxu0 0.0
      %1806 = vmatpush.msra.mxu0 0.0
      %1807 = vmatpush.msra.mxu0 %v1420
      %1808 = vmatpush.msra.mxu0 %v1418
      %1809 = vmatpush.msra.mxu0 %v1416
      %1810 = vmatpush.msra.mxu0 %v1414
      %1811 = vmatpush.msra.mxu0 %v1412
      %1812 = vmatpush.msra.mxu0 %v1410
      %1813 = vmatpush.msra.mxu0 %v1408
      %1814 = vmatpush.msra.mxu0 %v1406
      %1815 = vmatpush.msra.mxu0 %v1404
      %1816 = vmatpush.msra.mxu0 %v1402
      %1817 = vmatmul.f32.gmra.mxu0 %v1465
      %v1818 = vpop.f32.mrf.mxu0
      %v1819 = vadd.f32 %v1760, %v1818
      %1820 = vmatmul.f32.gmra.mxu0 %v1468
      %v1821 = vpop.f32.mrf.mxu0
      %v1822 = vadd.f32 %v1763, %v1821
      %1823 = vmatmul.f32.gmra.mxu0 %v1471
      %v1824 = vpop.f32.mrf.mxu0
      %v1825 = vadd.f32 %v1766, %v1824
      %1826 = vmatmul.f32.gmra.mxu0 %v1474
      %v1827 = vpop.f32.mrf.mxu0
      %v1828 = vadd.f32 %v1769, %v1827
      %1829 = vmatmul.f32.gmra.mxu0 %v1477
      %v1830 = vpop.f32.mrf.mxu0
      %v1831 = vadd.f32 %v1772, %v1830
      %1832 = vmatmul.f32.gmra.mxu0 %v1480
      %v1833 = vpop.f32.mrf.mxu0
      %v1834 = vadd.f32 %v1775, %v1833
      %1835 = vmatmul.f32.gmra.mxu0 %v1483
      %v1836 = vpop.f32.mrf.mxu0
      %v1837 = vadd.f32 %v1778, %v1836
      %1838 = vmatmul.f32.gmra.mxu0 %v1486
      %v1839 = vpop.f32.mrf.mxu0
      %v1840 = vadd.f32 %v1781, %v1839
      %1841 = vmatmul.f32.gmra.mxu0 %v1489
      %v1842 = vpop.f32.mrf.mxu0
      %v1843 = vadd.f32 %v1784, %v1842
      %1844 = vmatmul.f32.gmra.mxu0 %v1492
      %v1845 = vpop.f32.mrf.mxu0
      %v1846 = vadd.f32 %v1787, %v1845
      %1847 = vmatmul.f32.gmra.mxu0 %v1495
      %v1848 = vpop.f32.mrf.mxu0
      %v1849 = vadd.f32 %v1790, %v1848
      %1850 = vmatmul.f32.gmra.mxu0 %v1498
      %v1851 = vpop.f32.mrf.mxu0
      %v1852 = vadd.f32 %v1793, %v1851
      %1853 = vmatmul.f32.gmra.mxu0 %v1501
      %v1854 = vpop.f32.mrf.mxu0
      %v1855 = vadd.f32 %v1796, %v1854
      %1856 = vmatmul.f32.gmra.mxu0 %v1504
      %v1857 = vpop.f32.mrf.mxu0
      %v1858 = vadd.f32 %v1799, %v1857
      %1859 = vdwg.mxu0
      %vm1860 = vcmask 556032
      %v1861 = vsel %vm1860, %v1819, 0.0
      %v1862 = vadd.f32 %v1642, %v1861
      %1863 = vadd.xlane.f32.xlu0 %v1862
      %v1864 = vpop.xlane.xlu0 %1863
      %v1865 = vsel %vm1860, %v1822, 0.0
      %v1866 = vadd.f32 %v1645, %v1865
      %1867 = vadd.xlane.f32.xlu0 %v1866
      %v1868 = vpop.xlane.xlu0 %1867
      %v1869 = vsel %vm1860, %v1825, 0.0
      %v1870 = vadd.f32 %v1648, %v1869
      %1871 = vadd.xlane.f32.xlu0 %v1870
      %v1872 = vpop.xlane.xlu0 %1871
      %v1873 = vsel %vm1860, %v1828, 0.0
      %v1874 = vadd.f32 %v1651, %v1873
      %1875 = vadd.xlane.f32.xlu0 %v1874
      %v1876 = vpop.xlane.xlu0 %1875
      %v1877 = vsel %vm1860, %v1831, 0.0
      %v1878 = vadd.f32 %v1654, %v1877
      %1879 = vadd.xlane.f32.xlu0 %v1878
      %v1880 = vpop.xlane.xlu0 %1879
      %v1881 = vsel %vm1860, %v1834, 0.0
      %v1882 = vadd.f32 %v1657, %v1881
      %1883 = vadd.xlane.f32.xlu0 %v1882
      %v1884 = vpop.xlane.xlu0 %1883
      %v1885 = vsel %vm1860, %v1837, 0.0
      %v1886 = vadd.f32 %v1660, %v1885
      %1887 = vadd.xlane.f32.xlu0 %v1886
      %v1888 = vpop.xlane.xlu0 %1887
      %v1889 = vsel %vm1860, %v1840, 0.0
      %v1890 = vadd.f32 %v1663, %v1889
      %1891 = vadd.xlane.f32.xlu0 %v1890
      %v1892 = vpop.xlane.xlu0 %1891
      %v1893 = vsel %vm1860, %v1843, 0.0
      %v1894 = vadd.f32 %v1666, %v1893
      %1895 = vadd.xlane.f32.xlu0 %v1894
      %v1896 = vpop.xlane.xlu0 %1895
      %v1897 = vsel %vm1860, %v1846, 0.0
      %v1898 = vadd.f32 %v1669, %v1897
      %1899 = vadd.xlane.f32.xlu0 %v1898
      %v1900 = vpop.xlane.xlu0 %1899
      %v1901 = vsel %vm1860, %v1849, 0.0
      %v1902 = vadd.f32 %v1672, %v1901
      %1903 = vadd.xlane.f32.xlu0 %v1902
      %v1904 = vpop.xlane.xlu0 %1903
      %v1905 = vsel %vm1860, %v1852, 0.0
      %v1906 = vadd.f32 %v1675, %v1905
      %1907 = vadd.xlane.f32.xlu0 %v1906
      %v1908 = vpop.xlane.xlu0 %1907
      %v1909 = vsel %vm1860, %v1855, 0.0
      %v1910 = vadd.f32 %v1678, %v1909
      %1911 = vadd.xlane.f32.xlu0 %v1910
      %v1912 = vpop.xlane.xlu0 %1911
      %v1913 = vsel %vm1860, %v1858, 0.0
      %v1914 = vadd.f32 %v1681, %v1913
      %1915 = vadd.xlane.f32.xlu0 %v1914
      %v1916 = vpop.xlane.xlu0 %1915
      %v1917 = vmul.f32 %v1864, 0.0051020407
      %v1918 = vmul.f32 %v1868, 0.0051020407
      %v1919 = vmul.f32 %v1872, 0.0051020407
      %v1920 = vmul.f32 %v1876, 0.0051020407
      %v1921 = vmul.f32 %v1880, 0.0051020407
      %v1922 = vmul.f32 %v1884, 0.0051020407
      %v1923 = vmul.f32 %v1888, 0.0051020407
      %v1924 = vmul.f32 %v1892, 0.0051020407
      %v1925 = vmul.f32 %v1896, 0.0051020407
      %v1926 = vmul.f32 %v1900, 0.0051020407
      %v1927 = vmul.f32 %v1904, 0.0051020407
      %v1928 = vmul.f32 %v1908, 0.0051020407
      %v1929 = vmul.f32 %v1912, 0.0051020407
      %v1930 = vmul.f32 %v1916, 0.0051020407
      %v1931 = vmul.f32 %v1642, %v1642
      %v1932 = vmul.f32 %v1819, %v1819
      %v1933 = vmul.f32 %v1645, %v1645
      %v1934 = vmul.f32 %v1822, %v1822
      %v1935 = vmul.f32 %v1648, %v1648
      %v1936 = vmul.f32 %v1825, %v1825
      %v1937 = vmul.f32 %v1651, %v1651
      %v1938 = vmul.f32 %v1828, %v1828
      %v1939 = vmul.f32 %v1654, %v1654
      %v1940 = vmul.f32 %v1831, %v1831
      %v1941 = vmul.f32 %v1657, %v1657
      %v1942 = vmul.f32 %v1834, %v1834
      %v1943 = vmul.f32 %v1660, %v1660
      %v1944 = vmul.f32 %v1837, %v1837
      %v1945 = vmul.f32 %v1663, %v1663
      %v1946 = vmul.f32 %v1840, %v1840
      %v1947 = vmul.f32 %v1666, %v1666
      %v1948 = vmul.f32 %v1843, %v1843
      %v1949 = vmul.f32 %v1669, %v1669
      %v1950 = vmul.f32 %v1846, %v1846
      %v1951 = vmul.f32 %v1672, %v1672
      %v1952 = vmul.f32 %v1849, %v1849
      %v1953 = vmul.f32 %v1675, %v1675
      %v1954 = vmul.f32 %v1852, %v1852
      %v1955 = vmul.f32 %v1678, %v1678
      %v1956 = vmul.f32 %v1855, %v1855
      %v1957 = vmul.f32 %v1681, %v1681
      %v1958 = vmul.f32 %v1858, %v1858
      %v1959 = vsel %vm1860, %v1932, 0.0
      %v1960 = vadd.f32 %v1931, %v1959
      %1961 = vadd.xlane.f32.xlu0 %v1960
      %v1962 = vpop.xlane.xlu0 %1961
      %v1963 = vsel %vm1860, %v1934, 0.0
      %v1964 = vadd.f32 %v1933, %v1963
      %1965 = vadd.xlane.f32.xlu0 %v1964
      %v1966 = vpop.xlane.xlu0 %1965
      %v1967 = vsel %vm1860, %v1936, 0.0
      %v1968 = vadd.f32 %v1935, %v1967
      %1969 = vadd.xlane.f32.xlu0 %v1968
      %v1970 = vpop.xlane.xlu0 %1969
      %v1971 = vsel %vm1860, %v1938, 0.0
      %v1972 = vadd.f32 %v1937, %v1971
      %1973 = vadd.xlane.f32.xlu0 %v1972
      %v1974 = vpop.xlane.xlu0 %1973
      %v1975 = vsel %vm1860, %v1940, 0.0
      %v1976 = vadd.f32 %v1939, %v1975
      %1977 = vadd.xlane.f32.xlu0 %v1976
      %v1978 = vpop.xlane.xlu0 %1977
      %v1979 = vsel %vm1860, %v1942, 0.0
      %v1980 = vadd.f32 %v1941, %v1979
      %1981 = vadd.xlane.f32.xlu0 %v1980
      %v1982 = vpop.xlane.xlu0 %1981
      %v1983 = vsel %vm1860, %v1944, 0.0
      %v1984 = vadd.f32 %v1943, %v1983
      %1985 = vadd.xlane.f32.xlu0 %v1984
      %v1986 = vpop.xlane.xlu0 %1985
      %v1987 = vsel %vm1860, %v1946, 0.0
      %v1988 = vadd.f32 %v1945, %v1987
      %1989 = vadd.xlane.f32.xlu0 %v1988
      %v1990 = vpop.xlane.xlu0 %1989
      %v1991 = vsel %vm1860, %v1948, 0.0
      %v1992 = vadd.f32 %v1947, %v1991
      %1993 = vadd.xlane.f32.xlu0 %v1992
      %v1994 = vpop.xlane.xlu0 %1993
      %v1995 = vsel %vm1860, %v1950, 0.0
      %v1996 = vadd.f32 %v1949, %v1995
      %1997 = vadd.xlane.f32.xlu0 %v1996
      %v1998 = vpop.xlane.xlu0 %1997
      %v1999 = vsel %vm1860, %v1952, 0.0
      %v2000 = vadd.f32 %v1951, %v1999
      %2001 = vadd.xlane.f32.xlu0 %v2000
      %v2002 = vpop.xlane.xlu0 %2001
      %v2003 = vsel %vm1860, %v1954, 0.0
      %v2004 = vadd.f32 %v1953, %v2003
      %2005 = vadd.xlane.f32.xlu0 %v2004
      %v2006 = vpop.xlane.xlu0 %2005
      %v2007 = vsel %vm1860, %v1956, 0.0
      %v2008 = vadd.f32 %v1955, %v2007
      %2009 = vadd.xlane.f32.xlu0 %v2008
      %v2010 = vpop.xlane.xlu0 %2009
      %v2011 = vsel %vm1860, %v1958, 0.0
      %v2012 = vadd.f32 %v1957, %v2011
      %2013 = vadd.xlane.f32.xlu0 %v2012
      %v2014 = vpop.xlane.xlu0 %2013
      %v2015 = vmul.f32 %v1962, 0.0051020407
      %v2016 = vmul.f32 %v1966, 0.0051020407
      %v2017 = vmul.f32 %v1970, 0.0051020407
      %v2018 = vmul.f32 %v1974, 0.0051020407
      %v2019 = vmul.f32 %v1978, 0.0051020407
      %v2020 = vmul.f32 %v1982, 0.0051020407
      %v2021 = vmul.f32 %v1986, 0.0051020407
      %v2022 = vmul.f32 %v1990, 0.0051020407
      %v2023 = vmul.f32 %v1994, 0.0051020407
      %v2024 = vmul.f32 %v1998, 0.0051020407
      %v2025 = vmul.f32 %v2002, 0.0051020407
      %v2026 = vmul.f32 %v2006, 0.0051020407
      %v2027 = vmul.f32 %v2010, 0.0051020407
      %v2028 = vmul.f32 %v2014, 0.0051020407
      %v2029 = vmul.f32 %v1917, %v1917
      %v2030 = vmul.f32 %v1918, %v1918
      %v2031 = vmul.f32 %v1919, %v1919
      %v2032 = vmul.f32 %v1920, %v1920
      %v2033 = vmul.f32 %v1921, %v1921
      %v2034 = vmul.f32 %v1922, %v1922
      %v2035 = vmul.f32 %v1923, %v1923
      %v2036 = vmul.f32 %v1924, %v1924
      %v2037 = vmul.f32 %v1925, %v1925
      %v2038 = vmul.f32 %v1926, %v1926
      %v2039 = vmul.f32 %v1927, %v1927
      %v2040 = vmul.f32 %v1928, %v1928
      %v2041 = vmul.f32 %v1929, %v1929
      %v2042 = vmul.f32 %v1930, %v1930
      %v2043 = vsub.f32 %v2015, %v2029
      %v2044 = vsub.f32 %v2016, %v2030
      %v2045 = vsub.f32 %v2017, %v2031
      %v2046 = vsub.f32 %v2018, %v2032
      %v2047 = vsub.f32 %v2019, %v2033
      %v2048 = vsub.f32 %v2020, %v2034
      %v2049 = vsub.f32 %v2021, %v2035
      %v2050 = vsub.f32 %v2022, %v2036
      %v2051 = vsub.f32 %v2023, %v2037
      %v2052 = vsub.f32 %v2024, %v2038
      %v2053 = vsub.f32 %v2025, %v2039
      %v2054 = vsub.f32 %v2026, %v2040
      %v2055 = vsub.f32 %v2027, %v2041
      %v2056 = vsub.f32 %v2028, %v2042
      %v2057 = vmax.f32 %v2043, 0.0
      %v2058 = vmax.f32 %v2044, 0.0
      %v2059 = vmax.f32 %v2045, 0.0
      %v2060 = vmax.f32 %v2046, 0.0
      %v2061 = vmax.f32 %v2047, 0.0
      %v2062 = vmax.f32 %v2048, 0.0
      %v2063 = vmax.f32 %v2049, 0.0
      %v2064 = vmax.f32 %v2050, 0.0
      %v2065 = vmax.f32 %v2051, 0.0
      %v2066 = vmax.f32 %v2052, 0.0
      %v2067 = vmax.f32 %v2053, 0.0
      %v2068 = vmax.f32 %v2054, 0.0
      %v2069 = vmax.f32 %v2055, 0.0
      %v2070 = vmax.f32 %v2056, 0.0
      %v2071 = vld [vmem:[%s0 + $0x150] sm:$0xff]
      %v2072 = vld [vmem:[%s0 + $0x158] sm:$0xff]
      %v2073 = vld [vmem:[%s0 + $0x160] sm:$0xff]
      %v2074 = vld [vmem:[%s0 + $0x168] sm:$0xff]
      %v2075 = vld [vmem:[%s0 + $0x170] sm:$0xff]
      %v2076 = vld [vmem:[%s0 + $0x178] sm:$0xff]
      %v2077 = vld [vmem:[%s0 + $0x180] sm:$0xff]
      %v2078 = vld [vmem:[%s0 + $0x188] sm:$0xff]
      %v2079 = vld [vmem:[%s0 + $0x190] sm:$0xff]
      %v2080 = vld [vmem:[%s0 + $0x198] sm:$0xff]
      %v2081 = vld [vmem:[%s0 + $0x1a0] sm:$0xff]
      %v2082 = vld [vmem:[%s0 + $0x1a8] sm:$0xff]
      %v2083 = vld [vmem:[%s0 + $0x1b0] sm:$0xff]
      %v2084 = vld [vmem:[%s0 + $0x1b8] sm:$0xff]
      %v2085 = vld [vmem:[%s0 + $0x1c0] sm:$0xff]
      %v2086 = vld [vmem:[%s0 + $0x1c8] sm:$0xff]
      %v2087 = vld [vmem:[%s0 + $0x1d0] sm:$0xff]
      %v2088 = vld [vmem:[%s0 + $0x1d8] sm:$0xff]
      %v2089 = vld [vmem:[%s0 + $0x1e0] sm:$0xff]
      %v2090 = vld [vmem:[%s0 + $0x1e8] sm:$0xff]
      %v2091 = vld [vmem:[%s0 + $0x1f0] sm:$0xff]
      %v2092 = vld [vmem:[%s0 + $0x1f8] sm:$0xff]
      %v2093 = vld [vmem:[%s0 + $0x200] sm:$0xff]
      %v2094 = vld [vmem:[%s0 + $0x208] sm:$0xff]
      %v2095 = vld [vmem:[%s0 + $0x210] sm:$0xff]
      %v2096 = vld [vmem:[%s0 + $0x218] sm:$0xff]
      %v2097 = vld [vmem:[%s0 + $0x220] sm:$0xff]
      %v2098 = vld [vmem:[%s0 + $0x228] sm:$0xff]
      %v2099 = vsub.f32 %v1642, %v1917
      %v2100 = vsub.f32 %v1819, %v1917
      %v2101 = vsub.f32 %v1645, %v1918
      %v2102 = vsub.f32 %v1822, %v1918
      %v2103 = vsub.f32 %v1648, %v1919
      %v2104 = vsub.f32 %v1825, %v1919
      %v2105 = vsub.f32 %v1651, %v1920
      %v2106 = vsub.f32 %v1828, %v1920
      %v2107 = vsub.f32 %v1654, %v1921
      %v2108 = vsub.f32 %v1831, %v1921
      %v2109 = vsub.f32 %v1657, %v1922
      %v2110 = vsub.f32 %v1834, %v1922
      %v2111 = vsub.f32 %v1660, %v1923
      %v2112 = vsub.f32 %v1837, %v1923
      %v2113 = vsub.f32 %v1663, %v1924
      %v2114 = vsub.f32 %v1840, %v1924
      %v2115 = vsub.f32 %v1666, %v1925
      %v2116 = vsub.f32 %v1843, %v1925
      %v2117 = vsub.f32 %v1669, %v1926
      %v2118 = vsub.f32 %v1846, %v1926
      %v2119 = vsub.f32 %v1672, %v1927
      %v2120 = vsub.f32 %v1849, %v1927
      %v2121 = vsub.f32 %v1675, %v1928
      %v2122 = vsub.f32 %v1852, %v1928
      %v2123 = vsub.f32 %v1678, %v1929
      %v2124 = vsub.f32 %v1855, %v1929
      %v2125 = vsub.f32 %v1681, %v1930
      %v2126 = vsub.f32 %v1858, %v1930
      %v2127 = vadd.f32 %v2057, 1e-05
      %v2128 = vadd.f32 %v2058, 1e-05
      %v2129 = vadd.f32 %v2059, 1e-05
      %v2130 = vadd.f32 %v2060, 1e-05
      %v2131 = vadd.f32 %v2061, 1e-05
      %v2132 = vadd.f32 %v2062, 1e-05
      %v2133 = vadd.f32 %v2063, 1e-05
      %v2134 = vadd.f32 %v2064, 1e-05
      %v2135 = vadd.f32 %v2065, 1e-05
      %v2136 = vadd.f32 %v2066, 1e-05
      %v2137 = vadd.f32 %v2067, 1e-05
      %v2138 = vadd.f32 %v2068, 1e-05
      %v2139 = vadd.f32 %v2069, 1e-05
      %v2140 = vadd.f32 %v2070, 1e-05
      %v2141 = vrsqrt.pop %v2127
      %v2142 = vmul.f32 %v2141, %v2127
      %v2143 = vmul.f32 %v2142, %v2141
      %v2144 = vmul.f32 0.5, %v2143
      %v2145 = vsub.f32 1.5, %v2144
      %v2146 = vmul.f32 %v2141, %v2145
      %vm2147 = vweird.f32 %v2127
      %vm2148 = vweird.f32 %v2141
      %vm2149 = vmor %vm2147, %vm2148
      %v2150 = vsel %vm2149, %v2141, %v2146
      %v2151 = vrsqrt.pop %v2128
      %v2152 = vmul.f32 %v2151, %v2128
      %v2153 = vmul.f32 %v2152, %v2151
      %v2154 = vmul.f32 0.5, %v2153
      %v2155 = vsub.f32 1.5, %v2154
      %v2156 = vmul.f32 %v2151, %v2155
      %vm2157 = vweird.f32 %v2128
      %vm2158 = vweird.f32 %v2151
      %vm2159 = vmor %vm2157, %vm2158
      %v2160 = vsel %vm2159, %v2151, %v2156
      %v2161 = vrsqrt.pop %v2129
      %v2162 = vmul.f32 %v2161, %v2129
      %v2163 = vmul.f32 %v2162, %v2161
      %v2164 = vmul.f32 0.5, %v2163
      %v2165 = vsub.f32 1.5, %v2164
      %v2166 = vmul.f32 %v2161, %v2165
      %vm2167 = vweird.f32 %v2129
      %vm2168 = vweird.f32 %v2161
      %vm2169 = vmor %vm2167, %vm2168
      %v2170 = vsel %vm2169, %v2161, %v2166
      %v2171 = vrsqrt.pop %v2130
      %v2172 = vmul.f32 %v2171, %v2130
      %v2173 = vmul.f32 %v2172, %v2171
      %v2174 = vmul.f32 0.5, %v2173
      %v2175 = vsub.f32 1.5, %v2174
      %v2176 = vmul.f32 %v2171, %v2175
      %vm2177 = vweird.f32 %v2130
      %vm2178 = vweird.f32 %v2171
      %vm2179 = vmor %vm2177, %vm2178
      %v2180 = vsel %vm2179, %v2171, %v2176
      %v2181 = vrsqrt.pop %v2131
      %v2182 = vmul.f32 %v2181, %v2131
      %v2183 = vmul.f32 %v2182, %v2181
      %v2184 = vmul.f32 0.5, %v2183
      %v2185 = vsub.f32 1.5, %v2184
      %v2186 = vmul.f32 %v2181, %v2185
      %vm2187 = vweird.f32 %v2131
      %vm2188 = vweird.f32 %v2181
      %vm2189 = vmor %vm2187, %vm2188
      %v2190 = vsel %vm2189, %v2181, %v2186
      %v2191 = vrsqrt.pop %v2132
      %v2192 = vmul.f32 %v2191, %v2132
      %v2193 = vmul.f32 %v2192, %v2191
      %v2194 = vmul.f32 0.5, %v2193
      %v2195 = vsub.f32 1.5, %v2194
      %v2196 = vmul.f32 %v2191, %v2195
      %vm2197 = vweird.f32 %v2132
      %vm2198 = vweird.f32 %v2191
      %vm2199 = vmor %vm2197, %vm2198
      %v2200 = vsel %vm2199, %v2191, %v2196
      %v2201 = vrsqrt.pop %v2133
      %v2202 = vmul.f32 %v2201, %v2133
      %v2203 = vmul.f32 %v2202, %v2201
      %v2204 = vmul.f32 0.5, %v2203
      %v2205 = vsub.f32 1.5, %v2204
      %v2206 = vmul.f32 %v2201, %v2205
      %vm2207 = vweird.f32 %v2133
      %vm2208 = vweird.f32 %v2201
      %vm2209 = vmor %vm2207, %vm2208
      %v2210 = vsel %vm2209, %v2201, %v2206
      %v2211 = vrsqrt.pop %v2134
      %v2212 = vmul.f32 %v2211, %v2134
      %v2213 = vmul.f32 %v2212, %v2211
      %v2214 = vmul.f32 0.5, %v2213
      %v2215 = vsub.f32 1.5, %v2214
      %v2216 = vmul.f32 %v2211, %v2215
      %vm2217 = vweird.f32 %v2134
      %vm2218 = vweird.f32 %v2211
      %vm2219 = vmor %vm2217, %vm2218
      %v2220 = vsel %vm2219, %v2211, %v2216
      %v2221 = vrsqrt.pop %v2135
      %v2222 = vmul.f32 %v2221, %v2135
      %v2223 = vmul.f32 %v2222, %v2221
      %v2224 = vmul.f32 0.5, %v2223
      %v2225 = vsub.f32 1.5, %v2224
      %v2226 = vmul.f32 %v2221, %v2225
      %vm2227 = vweird.f32 %v2135
      %vm2228 = vweird.f32 %v2221
      %vm2229 = vmor %vm2227, %vm2228
      %v2230 = vsel %vm2229, %v2221, %v2226
      %v2231 = vrsqrt.pop %v2136
      %v2232 = vmul.f32 %v2231, %v2136
      %v2233 = vmul.f32 %v2232, %v2231
      %v2234 = vmul.f32 0.5, %v2233
      %v2235 = vsub.f32 1.5, %v2234
      %v2236 = vmul.f32 %v2231, %v2235
      %vm2237 = vweird.f32 %v2136
      %vm2238 = vweird.f32 %v2231
      %vm2239 = vmor %vm2237, %vm2238
      %v2240 = vsel %vm2239, %v2231, %v2236
      %v2241 = vrsqrt.pop %v2137
      %v2242 = vmul.f32 %v2241, %v2137
      %v2243 = vmul.f32 %v2242, %v2241
      %v2244 = vmul.f32 0.5, %v2243
      %v2245 = vsub.f32 1.5, %v2244
      %v2246 = vmul.f32 %v2241, %v2245
      %vm2247 = vweird.f32 %v2137
      %vm2248 = vweird.f32 %v2241
      %vm2249 = vmor %vm2247, %vm2248
      %v2250 = vsel %vm2249, %v2241, %v2246
      %v2251 = vrsqrt.pop %v2138
      %v2252 = vmul.f32 %v2251, %v2138
      %v2253 = vmul.f32 %v2252, %v2251
      %v2254 = vmul.f32 0.5, %v2253
      %v2255 = vsub.f32 1.5, %v2254
      %v2256 = vmul.f32 %v2251, %v2255
      %vm2257 = vweird.f32 %v2138
      %vm2258 = vweird.f32 %v2251
      %vm2259 = vmor %vm2257, %vm2258
      %v2260 = vsel %vm2259, %v2251, %v2256
      %v2261 = vrsqrt.pop %v2139
      %v2262 = vmul.f32 %v2261, %v2139
      %v2263 = vmul.f32 %v2262, %v2261
      %v2264 = vmul.f32 0.5, %v2263
      %v2265 = vsub.f32 1.5, %v2264
      %v2266 = vmul.f32 %v2261, %v2265
      %vm2267 = vweird.f32 %v2139
      %vm2268 = vweird.f32 %v2261
      %vm2269 = vmor %vm2267, %vm2268
      %v2270 = vsel %vm2269, %v2261, %v2266
      %v2271 = vrsqrt.pop %v2140
      %v2272 = vmul.f32 %v2271, %v2140
      %v2273 = vmul.f32 %v2272, %v2271
      %v2274 = vmul.f32 0.5, %v2273
      %v2275 = vsub.f32 1.5, %v2274
      %v2276 = vmul.f32 %v2271, %v2275
      %vm2277 = vweird.f32 %v2140
      %vm2278 = vweird.f32 %v2271
      %vm2279 = vmor %vm2277, %vm2278
      %v2280 = vsel %vm2279, %v2271, %v2276
      %v2281 = vmul.f32 %v2099, %v2150
      %v2282 = vmul.f32 %v2100, %v2150
      %v2283 = vmul.f32 %v2101, %v2160
      %v2284 = vmul.f32 %v2102, %v2160
      %v2285 = vmul.f32 %v2103, %v2170
      %v2286 = vmul.f32 %v2104, %v2170
      %v2287 = vmul.f32 %v2105, %v2180
      %v2288 = vmul.f32 %v2106, %v2180
      %v2289 = vmul.f32 %v2107, %v2190
      %v2290 = vmul.f32 %v2108, %v2190
      %v2291 = vmul.f32 %v2109, %v2200
      %v2292 = vmul.f32 %v2110, %v2200
      %v2293 = vmul.f32 %v2111, %v2210
      %v2294 = vmul.f32 %v2112, %v2210
      %v2295 = vmul.f32 %v2113, %v2220
      %v2296 = vmul.f32 %v2114, %v2220
      %v2297 = vmul.f32 %v2115, %v2230
      %v2298 = vmul.f32 %v2116, %v2230
      %v2299 = vmul.f32 %v2117, %v2240
      %v2300 = vmul.f32 %v2118, %v2240
      %v2301 = vmul.f32 %v2119, %v2250
      %v2302 = vmul.f32 %v2120, %v2250
      %v2303 = vmul.f32 %v2121, %v2260
      %v2304 = vmul.f32 %v2122, %v2260
      %v2305 = vmul.f32 %v2123, %v2270
      %v2306 = vmul.f32 %v2124, %v2270
      %v2307 = vmul.f32 %v2125, %v2280
      %v2308 = vmul.f32 %v2126, %v2280
      %2310 = vset.pattern.permute.xlu0 0
      %2311 = vperm.xlu0 %2310, %v2071
      %v2312 = vpop.permute.xlu0 %2311
      %2315 = vset.pattern.permute.xlu0 0
      %2316 = vperm.xlu0 %2315, %v2072
      %v2317 = vpop.permute.xlu0 %2316
      %2320 = vset.pattern.permute.xlu0 0
      %2321 = vperm.xlu0 %2320, %v2073
      %v2322 = vpop.permute.xlu0 %2321
      %2325 = vset.pattern.permute.xlu0 0
      %2326 = vperm.xlu0 %2325, %v2074
      %v2327 = vpop.permute.xlu0 %2326
      %2330 = vset.pattern.permute.xlu0 0
      %2331 = vperm.xlu0 %2330, %v2075
      %v2332 = vpop.permute.xlu0 %2331
      %2335 = vset.pattern.permute.xlu0 0
      %2336 = vperm.xlu0 %2335, %v2076
      %v2337 = vpop.permute.xlu0 %2336
      %2340 = vset.pattern.permute.xlu0 0
      %2341 = vperm.xlu0 %2340, %v2077
      %v2342 = vpop.permute.xlu0 %2341
      %2345 = vset.pattern.permute.xlu0 0
      %2346 = vperm.xlu0 %2345, %v2078
      %v2347 = vpop.permute.xlu0 %2346
      %2350 = vset.pattern.permute.xlu0 0
      %2351 = vperm.xlu0 %2350, %v2079
      %v2352 = vpop.permute.xlu0 %2351
      %2355 = vset.pattern.permute.xlu0 0
      %2356 = vperm.xlu0 %2355, %v2080
      %v2357 = vpop.permute.xlu0 %2356
      %2360 = vset.pattern.permute.xlu0 0
      %2361 = vperm.xlu0 %2360, %v2081
      %v2362 = vpop.permute.xlu0 %2361
      %2365 = vset.pattern.permute.xlu0 0
      %2366 = vperm.xlu0 %2365, %v2082
      %v2367 = vpop.permute.xlu0 %2366
      %2370 = vset.pattern.permute.xlu0 0
      %2371 = vperm.xlu0 %2370, %v2083
      %v2372 = vpop.permute.xlu0 %2371
      %2375 = vset.pattern.permute.xlu0 0
      %2376 = vperm.xlu0 %2375, %v2084
      %v2377 = vpop.permute.xlu0 %2376
      %v2379 = vmul.f32 %v2281, %v2312
      %v2380 = vmul.f32 %v2282, %v2312
      %v2381 = vmul.f32 %v2283, %v2317
      %v2382 = vmul.f32 %v2284, %v2317
      %v2383 = vmul.f32 %v2285, %v2322
      %v2384 = vmul.f32 %v2286, %v2322
      %v2385 = vmul.f32 %v2287, %v2327
      %v2386 = vmul.f32 %v2288, %v2327
      %v2387 = vmul.f32 %v2289, %v2332
      %v2388 = vmul.f32 %v2290, %v2332
      %v2389 = vmul.f32 %v2291, %v2337
      %v2390 = vmul.f32 %v2292, %v2337
      %v2391 = vmul.f32 %v2293, %v2342
      %v2392 = vmul.f32 %v2294, %v2342
      %v2393 = vmul.f32 %v2295, %v2347
      %v2394 = vmul.f32 %v2296, %v2347
      %v2395 = vmul.f32 %v2297, %v2352
      %v2396 = vmul.f32 %v2298, %v2352
      %v2397 = vmul.f32 %v2299, %v2357
      %v2398 = vmul.f32 %v2300, %v2357
      %v2399 = vmul.f32 %v2301, %v2362
      %v2400 = vmul.f32 %v2302, %v2362
      %v2401 = vmul.f32 %v2303, %v2367
      %v2402 = vmul.f32 %v2304, %v2367
      %v2403 = vmul.f32 %v2305, %v2372
      %v2404 = vmul.f32 %v2306, %v2372
      %v2405 = vmul.f32 %v2307, %v2377
      %v2406 = vmul.f32 %v2308, %v2377
      %2408 = vset.pattern.permute.xlu0 0
      %2409 = vperm.xlu0 %2408, %v2085
      %v2410 = vpop.permute.xlu0 %2409
      %2413 = vset.pattern.permute.xlu0 0
      %2414 = vperm.xlu0 %2413, %v2086
      %v2415 = vpop.permute.xlu0 %2414
      %2418 = vset.pattern.permute.xlu0 0
      %2419 = vperm.xlu0 %2418, %v2087
      %v2420 = vpop.permute.xlu0 %2419
      %2423 = vset.pattern.permute.xlu0 0
      %2424 = vperm.xlu0 %2423, %v2088
      %v2425 = vpop.permute.xlu0 %2424
      %2428 = vset.pattern.permute.xlu0 0
      %2429 = vperm.xlu0 %2428, %v2089
      %v2430 = vpop.permute.xlu0 %2429
      %2433 = vset.pattern.permute.xlu0 0
      %2434 = vperm.xlu0 %2433, %v2090
      %v2435 = vpop.permute.xlu0 %2434
      %2438 = vset.pattern.permute.xlu0 0
      %2439 = vperm.xlu0 %2438, %v2091
      %v2440 = vpop.permute.xlu0 %2439
      %2443 = vset.pattern.permute.xlu0 0
      %2444 = vperm.xlu0 %2443, %v2092
      %v2445 = vpop.permute.xlu0 %2444
      %2448 = vset.pattern.permute.xlu0 0
      %2449 = vperm.xlu0 %2448, %v2093
      %v2450 = vpop.permute.xlu0 %2449
      %2453 = vset.pattern.permute.xlu0 0
      %2454 = vperm.xlu0 %2453, %v2094
      %v2455 = vpop.permute.xlu0 %2454
      %2458 = vset.pattern.permute.xlu0 0
      %2459 = vperm.xlu0 %2458, %v2095
      %v2460 = vpop.permute.xlu0 %2459
      %2463 = vset.pattern.permute.xlu0 0
      %2464 = vperm.xlu0 %2463, %v2096
      %v2465 = vpop.permute.xlu0 %2464
      %2468 = vset.pattern.permute.xlu0 0
      %2469 = vperm.xlu0 %2468, %v2097
      %v2470 = vpop.permute.xlu0 %2469
      %2473 = vset.pattern.permute.xlu0 0
      %2474 = vperm.xlu0 %2473, %v2098
      %v2475 = vpop.permute.xlu0 %2474
      %v2477 = vadd.f32 %v2379, %v2410
      %v2478 = vadd.f32 %v2380, %v2410
      %v2479 = vadd.f32 %v2381, %v2415
      %v2480 = vadd.f32 %v2382, %v2415
      %v2481 = vadd.f32 %v2383, %v2420
      %v2482 = vadd.f32 %v2384, %v2420
      %v2483 = vadd.f32 %v2385, %v2425
      %v2484 = vadd.f32 %v2386, %v2425
      %v2485 = vadd.f32 %v2387, %v2430
      %v2486 = vadd.f32 %v2388, %v2430
      %v2487 = vadd.f32 %v2389, %v2435
      %v2488 = vadd.f32 %v2390, %v2435
      %v2489 = vadd.f32 %v2391, %v2440
      %v2490 = vadd.f32 %v2392, %v2440
      %v2491 = vadd.f32 %v2393, %v2445
      %v2492 = vadd.f32 %v2394, %v2445
      %v2493 = vadd.f32 %v2395, %v2450
      %v2494 = vadd.f32 %v2396, %v2450
      %v2495 = vadd.f32 %v2397, %v2455
      %v2496 = vadd.f32 %v2398, %v2455
      %v2497 = vadd.f32 %v2399, %v2460
      %v2498 = vadd.f32 %v2400, %v2460
      %v2499 = vadd.f32 %v2401, %v2465
      %v2500 = vadd.f32 %v2402, %v2465
      %v2501 = vadd.f32 %v2403, %v2470
      %v2502 = vadd.f32 %v2404, %v2470
      %v2503 = vadd.f32 %v2405, %v2475
      %v2504 = vadd.f32 %v2406, %v2475
      %v2505 = vld [vmem:[%s194] sm:$0xff]
      %v2506 = vld [vmem:[%s194 + $0x8] sm:$0xff]
      %v2507 = vld [vmem:[%s194 + $0x10] sm:$0xff]
      %v2508 = vld [vmem:[%s194 + $0x18] sm:$0xff]
      %v2509 = vld [vmem:[%s194 + $0x20] sm:$0xff]
      %v2510 = vld [vmem:[%s194 + $0x28] sm:$0xff]
      %v2511 = vld [vmem:[%s194 + $0x30] sm:$0xff]
      %v2512 = vld [vmem:[%s194 + $0x38] sm:$0xff]
      %v2513 = vld [vmem:[%s194 + $0x40] sm:$0xff]
      %v2514 = vld [vmem:[%s194 + $0x48] sm:$0xff]
      %v2515 = vld [vmem:[%s194 + $0x50] sm:$0xff]
      %v2516 = vld [vmem:[%s194 + $0x58] sm:$0xff]
      %v2517 = vld [vmem:[%s194 + $0x60] sm:$0xff]
      %v2518 = vld [vmem:[%s194 + $0x68] sm:$0xff]
      %v2519 = vld [vmem:[%s194 + $0x70] sm:$0xff]
      %v2520 = vld [vmem:[%s194 + $0x78] sm:$0xff]
      %v2521 = vld [vmem:[%s194 + $0x80] sm:$0xff]
      %v2522 = vld [vmem:[%s194 + $0x88] sm:$0xff]
      %v2523 = vld [vmem:[%s194 + $0x90] sm:$0xff]
      %v2524 = vld [vmem:[%s194 + $0x98] sm:$0xff]
      %v2525 = vld [vmem:[%s194 + $0xa0] sm:$0xff]
      %v2526 = vld [vmem:[%s194 + $0xa8] sm:$0xff]
      %v2527 = vld [vmem:[%s194 + $0xb0] sm:$0xff]
      %v2528 = vld [vmem:[%s194 + $0xb8] sm:$0xff]
      %v2529 = vld [vmem:[%s194 + $0xc0] sm:$0xff]
      %v2530 = vld [vmem:[%s194 + $0xc8] sm:$0xff]
      %v2531 = vld [vmem:[%s194 + $0xd0] sm:$0xff]
      %v2532 = vld [vmem:[%s194 + $0xd8] sm:$0xff]
      %v2533 = vld [vmem:[%s194 + $0xe0] sm:$0xff]
      %v2534 = vld [vmem:[%s194 + $0xe8] sm:$0xff]
      %v2535 = vld [vmem:[%s194 + $0xf0] sm:$0xff]
      %v2536 = vld [vmem:[%s194 + $0xf8] sm:$0xff]
      %v2537 = vld [vmem:[%s194 + $0x100] sm:$0xff]
      %v2538 = vld [vmem:[%s194 + $0x108] sm:$0xff]
      %v2539 = vld [vmem:[%s194 + $0x110] sm:$0xff]
      %v2540 = vld [vmem:[%s194 + $0x118] sm:$0xff]
      %v2541 = vld [vmem:[%s194 + $0x120] sm:$0xff]
      %v2542 = vld [vmem:[%s194 + $0x128] sm:$0xff]
      %v2543 = vld [vmem:[%s194 + $0x130] sm:$0xff]
      %v2544 = vld [vmem:[%s194 + $0x138] sm:$0xff]
      %v2545 = vld [vmem:[%s194 + $0x140] sm:$0xff]
      %v2546 = vld [vmem:[%s194 + $0x148] sm:$0xff]
      %vm2547 = vcmask 916480
      %v2549 = vsel %vm2547, %v2505, 0
      %v2552 = vsel %vm2547, %v2506, 0
      %v2555 = vsel %vm2547, %v2507, 0
      %v2558 = vsel %vm2547, %v2508, 0
      %v2561 = vsel %vm2547, %v2509, 0
      %v2564 = vsel %vm2547, %v2510, 0
      %v2567 = vsel %vm2547, %v2511, 0
      %v2570 = vsel %vm2547, %v2512, 0
      %v2573 = vsel %vm2547, %v2513, 0
      %v2576 = vsel %vm2547, %v2514, 0
      %v2579 = vsel %vm2547, %v2515, 0
      %v2582 = vsel %vm2547, %v2516, 0
      %v2585 = vsel %vm2547, %v2517, 0
      %v2588 = vsel %vm2547, %v2518, 0
      %v2591 = vsel %vm2547, %v2519, 0
      %v2594 = vsel %vm2547, %v2520, 0
      %v2597 = vsel %vm2547, %v2521, 0
      %v2600 = vsel %vm2547, %v2522, 0
      %v2603 = vsel %vm2547, %v2523, 0
      %v2606 = vsel %vm2547, %v2524, 0
      %v2609 = vsel %vm2547, %v2525, 0
      %v2612 = vsel %vm2547, %v2526, 0
      %v2615 = vsel %vm2547, %v2527, 0
      %v2618 = vsel %vm2547, %v2528, 0
      %v2621 = vsel %vm2547, %v2529, 0
      %v2624 = vsel %vm2547, %v2530, 0
      %v2627 = vsel %vm2547, %v2531, 0
      %v2630 = vsel %vm2547, %v2532, 0
      %v2633 = vsel %vm2547, %v2533, 0
      %v2636 = vsel %vm2547, %v2534, 0
      %v2639 = vsel %vm2547, %v2535, 0
      %v2642 = vsel %vm2547, %v2536, 0
      %v2645 = vsel %vm2547, %v2537, 0
      %v2648 = vsel %vm2547, %v2538, 0
      %v2651 = vsel %vm2547, %v2539, 0
      %v2654 = vsel %vm2547, %v2540, 0
      %v2657 = vsel %vm2547, %v2541, 0
      %v2660 = vsel %vm2547, %v2542, 0
      %v2663 = vsel %vm2547, %v2543, 0
      %v2666 = vsel %vm2547, %v2544, 0
      %v2669 = vsel %vm2547, %v2545, 0
      %v2672 = vsel %vm2547, %v2546, 0
      %2674 = vmatpush.msra.mxu0 0.0
      %2675 = vmatpush.msra.mxu0 0.0
      %2676 = vmatpush.msra.mxu0 %v2503
      %2677 = vmatpush.msra.mxu0 %v2501
      %2678 = vmatpush.msra.mxu0 %v2499
      %2679 = vmatpush.msra.mxu0 %v2497
      %2680 = vmatpush.msra.mxu0 %v2495
      %2681 = vmatpush.msra.mxu0 %v2493
      %2682 = vmatpush.msra.mxu0 %v2491
      %2683 = vmatpush.msra.mxu0 %v2489
      %2684 = vmatpush.msra.mxu0 %v2487
      %2685 = vmatpush.msra.mxu0 %v2485
      %2686 = vmatpush.msra.mxu0 %v2483
      %2687 = vmatpush.msra.mxu0 %v2481
      %2688 = vmatpush.msra.mxu0 %v2479
      %2689 = vmatpush.msra.mxu0 %v2477
      %2690 = vmatmul.f32.gmra.mxu0 %v2549
      %v2691 = vpop.f32.mrf.mxu0
      %v2692 = vadd.f32 0.0, %v2691
      %2693 = vmatmul.f32.gmra.mxu0 %v2552
      %v2694 = vpop.f32.mrf.mxu0
      %v2695 = vadd.f32 0.0, %v2694
      %2696 = vmatmul.f32.gmra.mxu0 %v2555
      %v2697 = vpop.f32.mrf.mxu0
      %v2698 = vadd.f32 0.0, %v2697
      %2699 = vmatmul.f32.gmra.mxu0 %v2558
      %v2700 = vpop.f32.mrf.mxu0
      %v2701 = vadd.f32 0.0, %v2700
      %2702 = vmatmul.f32.gmra.mxu0 %v2561
      %v2703 = vpop.f32.mrf.mxu0
      %v2704 = vadd.f32 0.0, %v2703
      %2705 = vmatmul.f32.gmra.mxu0 %v2564
      %v2706 = vpop.f32.mrf.mxu0
      %v2707 = vadd.f32 0.0, %v2706
      %2708 = vmatmul.f32.gmra.mxu0 %v2567
      %v2709 = vpop.f32.mrf.mxu0
      %v2710 = vadd.f32 0.0, %v2709
      %2711 = vmatmul.f32.gmra.mxu0 %v2570
      %v2712 = vpop.f32.mrf.mxu0
      %v2713 = vadd.f32 0.0, %v2712
      %2714 = vmatmul.f32.gmra.mxu0 %v2573
      %v2715 = vpop.f32.mrf.mxu0
      %v2716 = vadd.f32 0.0, %v2715
      %2717 = vmatmul.f32.gmra.mxu0 %v2576
      %v2718 = vpop.f32.mrf.mxu0
      %v2719 = vadd.f32 0.0, %v2718
      %2720 = vmatmul.f32.gmra.mxu0 %v2579
      %v2721 = vpop.f32.mrf.mxu0
      %v2722 = vadd.f32 0.0, %v2721
      %2723 = vmatmul.f32.gmra.mxu0 %v2582
      %v2724 = vpop.f32.mrf.mxu0
      %v2725 = vadd.f32 0.0, %v2724
      %2726 = vmatmul.f32.gmra.mxu0 %v2585
      %v2727 = vpop.f32.mrf.mxu0
      %v2728 = vadd.f32 0.0, %v2727
      %2729 = vmatmul.f32.gmra.mxu0 %v2588
      %v2730 = vpop.f32.mrf.mxu0
      %v2731 = vadd.f32 0.0, %v2730
      %2732 = vmatmul.f32.gmra.mxu0 %v2591
      %v2733 = vpop.f32.mrf.mxu0
      %v2734 = vadd.f32 0.0, %v2733
      %2735 = vmatmul.f32.gmra.mxu0 %v2594
      %v2736 = vpop.f32.mrf.mxu0
      %v2737 = vadd.f32 0.0, %v2736
      %2738 = vmatmul.f32.gmra.mxu0 %v2597
      %v2739 = vpop.f32.mrf.mxu0
      %v2740 = vadd.f32 0.0, %v2739
      %2741 = vmatmul.f32.gmra.mxu0 %v2600
      %v2742 = vpop.f32.mrf.mxu0
      %v2743 = vadd.f32 0.0, %v2742
      %2744 = vmatmul.f32.gmra.mxu0 %v2603
      %v2745 = vpop.f32.mrf.mxu0
      %v2746 = vadd.f32 0.0, %v2745
      %2747 = vmatmul.f32.gmra.mxu0 %v2606
      %v2748 = vpop.f32.mrf.mxu0
      %v2749 = vadd.f32 0.0, %v2748
      %2750 = vmatmul.f32.gmra.mxu0 %v2609
      %v2751 = vpop.f32.mrf.mxu0
      %v2752 = vadd.f32 0.0, %v2751
      %2753 = vmatmul.f32.gmra.mxu0 %v2612
      %v2754 = vpop.f32.mrf.mxu0
      %v2755 = vadd.f32 0.0, %v2754
      %2756 = vmatmul.f32.gmra.mxu0 %v2615
      %v2757 = vpop.f32.mrf.mxu0
      %v2758 = vadd.f32 0.0, %v2757
      %2759 = vmatmul.f32.gmra.mxu0 %v2618
      %v2760 = vpop.f32.mrf.mxu0
      %v2761 = vadd.f32 0.0, %v2760
      %2762 = vmatmul.f32.gmra.mxu0 %v2621
      %v2763 = vpop.f32.mrf.mxu0
      %v2764 = vadd.f32 0.0, %v2763
      %2765 = vmatmul.f32.gmra.mxu0 %v2624
      %v2766 = vpop.f32.mrf.mxu0
      %v2767 = vadd.f32 0.0, %v2766
      %2768 = vmatmul.f32.gmra.mxu0 %v2627
      %v2769 = vpop.f32.mrf.mxu0
      %v2770 = vadd.f32 0.0, %v2769
      %2771 = vmatmul.f32.gmra.mxu0 %v2630
      %v2772 = vpop.f32.mrf.mxu0
      %v2773 = vadd.f32 0.0, %v2772
      %2774 = vmatmul.f32.gmra.mxu0 %v2633
      %v2775 = vpop.f32.mrf.mxu0
      %v2776 = vadd.f32 0.0, %v2775
      %2777 = vmatmul.f32.gmra.mxu0 %v2636
      %v2778 = vpop.f32.mrf.mxu0
      %v2779 = vadd.f32 0.0, %v2778
      %2780 = vmatmul.f32.gmra.mxu0 %v2639
      %v2781 = vpop.f32.mrf.mxu0
      %v2782 = vadd.f32 0.0, %v2781
      %2783 = vmatmul.f32.gmra.mxu0 %v2642
      %v2784 = vpop.f32.mrf.mxu0
      %v2785 = vadd.f32 0.0, %v2784
      %2786 = vmatmul.f32.gmra.mxu0 %v2645
      %v2787 = vpop.f32.mrf.mxu0
      %v2788 = vadd.f32 0.0, %v2787
      %2789 = vmatmul.f32.gmra.mxu0 %v2648
      %v2790 = vpop.f32.mrf.mxu0
      %v2791 = vadd.f32 0.0, %v2790
      %2792 = vmatmul.f32.gmra.mxu0 %v2651
      %v2793 = vpop.f32.mrf.mxu0
      %v2794 = vadd.f32 0.0, %v2793
      %2795 = vmatmul.f32.gmra.mxu0 %v2654
      %v2796 = vpop.f32.mrf.mxu0
      %v2797 = vadd.f32 0.0, %v2796
      %2798 = vmatmul.f32.gmra.mxu0 %v2657
      %v2799 = vpop.f32.mrf.mxu0
      %v2800 = vadd.f32 0.0, %v2799
      %2801 = vmatmul.f32.gmra.mxu0 %v2660
      %v2802 = vpop.f32.mrf.mxu0
      %v2803 = vadd.f32 0.0, %v2802
      %2804 = vmatmul.f32.gmra.mxu0 %v2663
      %v2805 = vpop.f32.mrf.mxu0
      %v2806 = vadd.f32 0.0, %v2805
      %2807 = vmatmul.f32.gmra.mxu0 %v2666
      %v2808 = vpop.f32.mrf.mxu0
      %v2809 = vadd.f32 0.0, %v2808
      %2810 = vmatmul.f32.gmra.mxu0 %v2669
      %v2811 = vpop.f32.mrf.mxu0
      %v2812 = vadd.f32 0.0, %v2811
      %2813 = vmatmul.f32.gmra.mxu0 %v2672
      %v2814 = vpop.f32.mrf.mxu0
      %v2815 = vadd.f32 0.0, %v2814
      %2816 = vdwg.mxu0
      %2817 = vmatpush.msra.mxu0 0.0
      %2818 = vmatpush.msra.mxu0 0.0
      %2819 = vmatpush.msra.mxu0 %v2504
      %2820 = vmatpush.msra.mxu0 %v2502
      %2821 = vmatpush.msra.mxu0 %v2500
      %2822 = vmatpush.msra.mxu0 %v2498
      %2823 = vmatpush.msra.mxu0 %v2496
      %2824 = vmatpush.msra.mxu0 %v2494
      %2825 = vmatpush.msra.mxu0 %v2492
      %2826 = vmatpush.msra.mxu0 %v2490
      %2827 = vmatpush.msra.mxu0 %v2488
      %2828 = vmatpush.msra.mxu0 %v2486
      %2829 = vmatpush.msra.mxu0 %v2484
      %2830 = vmatpush.msra.mxu0 %v2482
      %2831 = vmatpush.msra.mxu0 %v2480
      %2832 = vmatpush.msra.mxu0 %v2478
      %2833 = vmatmul.f32.gmra.mxu0 %v2549
      %v2834 = vpop.f32.mrf.mxu0
      %v2835 = vadd.f32 0.0, %v2834
      %2836 = vmatmul.f32.gmra.mxu0 %v2552
      %v2837 = vpop.f32.mrf.mxu0
      %v2838 = vadd.f32 0.0, %v2837
      %2839 = vmatmul.f32.gmra.mxu0 %v2555
      %v2840 = vpop.f32.mrf.mxu0
      %v2841 = vadd.f32 0.0, %v2840
      %2842 = vmatmul.f32.gmra.mxu0 %v2558
      %v2843 = vpop.f32.mrf.mxu0
      %v2844 = vadd.f32 0.0, %v2843
      %2845 = vmatmul.f32.gmra.mxu0 %v2561
      %v2846 = vpop.f32.mrf.mxu0
      %v2847 = vadd.f32 0.0, %v2846
      %2848 = vmatmul.f32.gmra.mxu0 %v2564
      %v2849 = vpop.f32.mrf.mxu0
      %v2850 = vadd.f32 0.0, %v2849
      %2851 = vmatmul.f32.gmra.mxu0 %v2567
      %v2852 = vpop.f32.mrf.mxu0
      %v2853 = vadd.f32 0.0, %v2852
      %2854 = vmatmul.f32.gmra.mxu0 %v2570
      %v2855 = vpop.f32.mrf.mxu0
      %v2856 = vadd.f32 0.0, %v2855
      %2857 = vmatmul.f32.gmra.mxu0 %v2573
      %v2858 = vpop.f32.mrf.mxu0
      %v2859 = vadd.f32 0.0, %v2858
      %2860 = vmatmul.f32.gmra.mxu0 %v2576
      %v2861 = vpop.f32.mrf.mxu0
      %v2862 = vadd.f32 0.0, %v2861
      %2863 = vmatmul.f32.gmra.mxu0 %v2579
      %v2864 = vpop.f32.mrf.mxu0
      %v2865 = vadd.f32 0.0, %v2864
      %2866 = vmatmul.f32.gmra.mxu0 %v2582
      %v2867 = vpop.f32.mrf.mxu0
      %v2868 = vadd.f32 0.0, %v2867
      %2869 = vmatmul.f32.gmra.mxu0 %v2585
      %v2870 = vpop.f32.mrf.mxu0
      %v2871 = vadd.f32 0.0, %v2870
      %2872 = vmatmul.f32.gmra.mxu0 %v2588
      %v2873 = vpop.f32.mrf.mxu0
      %v2874 = vadd.f32 0.0, %v2873
      %2875 = vmatmul.f32.gmra.mxu0 %v2591
      %v2876 = vpop.f32.mrf.mxu0
      %v2877 = vadd.f32 0.0, %v2876
      %2878 = vmatmul.f32.gmra.mxu0 %v2594
      %v2879 = vpop.f32.mrf.mxu0
      %v2880 = vadd.f32 0.0, %v2879
      %2881 = vmatmul.f32.gmra.mxu0 %v2597
      %v2882 = vpop.f32.mrf.mxu0
      %v2883 = vadd.f32 0.0, %v2882
      %2884 = vmatmul.f32.gmra.mxu0 %v2600
      %v2885 = vpop.f32.mrf.mxu0
      %v2886 = vadd.f32 0.0, %v2885
      %2887 = vmatmul.f32.gmra.mxu0 %v2603
      %v2888 = vpop.f32.mrf.mxu0
      %v2889 = vadd.f32 0.0, %v2888
      %2890 = vmatmul.f32.gmra.mxu0 %v2606
      %v2891 = vpop.f32.mrf.mxu0
      %v2892 = vadd.f32 0.0, %v2891
      %2893 = vmatmul.f32.gmra.mxu0 %v2609
      %v2894 = vpop.f32.mrf.mxu0
      %v2895 = vadd.f32 0.0, %v2894
      %2896 = vmatmul.f32.gmra.mxu0 %v2612
      %v2897 = vpop.f32.mrf.mxu0
      %v2898 = vadd.f32 0.0, %v2897
      %2899 = vmatmul.f32.gmra.mxu0 %v2615
      %v2900 = vpop.f32.mrf.mxu0
      %v2901 = vadd.f32 0.0, %v2900
      %2902 = vmatmul.f32.gmra.mxu0 %v2618
      %v2903 = vpop.f32.mrf.mxu0
      %v2904 = vadd.f32 0.0, %v2903
      %2905 = vmatmul.f32.gmra.mxu0 %v2621
      %v2906 = vpop.f32.mrf.mxu0
      %v2907 = vadd.f32 0.0, %v2906
      %2908 = vmatmul.f32.gmra.mxu0 %v2624
      %v2909 = vpop.f32.mrf.mxu0
      %v2910 = vadd.f32 0.0, %v2909
      %2911 = vmatmul.f32.gmra.mxu0 %v2627
      %v2912 = vpop.f32.mrf.mxu0
      %v2913 = vadd.f32 0.0, %v2912
      %2914 = vmatmul.f32.gmra.mxu0 %v2630
      %v2915 = vpop.f32.mrf.mxu0
      %v2916 = vadd.f32 0.0, %v2915
      %2917 = vmatmul.f32.gmra.mxu0 %v2633
      %v2918 = vpop.f32.mrf.mxu0
      %v2919 = vadd.f32 0.0, %v2918
      %2920 = vmatmul.f32.gmra.mxu0 %v2636
      %v2921 = vpop.f32.mrf.mxu0
      %v2922 = vadd.f32 0.0, %v2921
      %2923 = vmatmul.f32.gmra.mxu0 %v2639
      %v2924 = vpop.f32.mrf.mxu0
      %v2925 = vadd.f32 0.0, %v2924
      %2926 = vmatmul.f32.gmra.mxu0 %v2642
      %v2927 = vpop.f32.mrf.mxu0
      %v2928 = vadd.f32 0.0, %v2927
      %2929 = vmatmul.f32.gmra.mxu0 %v2645
      %v2930 = vpop.f32.mrf.mxu0
      %v2931 = vadd.f32 0.0, %v2930
      %2932 = vmatmul.f32.gmra.mxu0 %v2648
      %v2933 = vpop.f32.mrf.mxu0
      %v2934 = vadd.f32 0.0, %v2933
      %2935 = vmatmul.f32.gmra.mxu0 %v2651
      %v2936 = vpop.f32.mrf.mxu0
      %v2937 = vadd.f32 0.0, %v2936
      %2938 = vmatmul.f32.gmra.mxu0 %v2654
      %v2939 = vpop.f32.mrf.mxu0
      %v2940 = vadd.f32 0.0, %v2939
      %2941 = vmatmul.f32.gmra.mxu0 %v2657
      %v2942 = vpop.f32.mrf.mxu0
      %v2943 = vadd.f32 0.0, %v2942
      %2944 = vmatmul.f32.gmra.mxu0 %v2660
      %v2945 = vpop.f32.mrf.mxu0
      %v2946 = vadd.f32 0.0, %v2945
      %2947 = vmatmul.f32.gmra.mxu0 %v2663
      %v2948 = vpop.f32.mrf.mxu0
      %v2949 = vadd.f32 0.0, %v2948
      %2950 = vmatmul.f32.gmra.mxu0 %v2666
      %v2951 = vpop.f32.mrf.mxu0
      %v2952 = vadd.f32 0.0, %v2951
      %2953 = vmatmul.f32.gmra.mxu0 %v2669
      %v2954 = vpop.f32.mrf.mxu0
      %v2955 = vadd.f32 0.0, %v2954
      %2956 = vmatmul.f32.gmra.mxu0 %v2672
      %v2957 = vpop.f32.mrf.mxu0
      %v2958 = vadd.f32 0.0, %v2957
      %2959 = vdwg.mxu0
      %v2960 = vsel %vm1860, %v2835, 0.0
      %v2961 = vadd.f32 %v2692, %v2960
      %2962 = vadd.xlane.f32.xlu0 %v2961
      %v2963 = vpop.xlane.xlu0 %2962
      %v2964 = vsel %vm1860, %v2838, 0.0
      %v2965 = vadd.f32 %v2695, %v2964
      %2966 = vadd.xlane.f32.xlu0 %v2965
      %v2967 = vpop.xlane.xlu0 %2966
      %v2968 = vsel %vm1860, %v2841, 0.0
      %v2969 = vadd.f32 %v2698, %v2968
      %2970 = vadd.xlane.f32.xlu0 %v2969
      %v2971 = vpop.xlane.xlu0 %2970
      %v2972 = vsel %vm1860, %v2844, 0.0
      %v2973 = vadd.f32 %v2701, %v2972
      %2974 = vadd.xlane.f32.xlu0 %v2973
      %v2975 = vpop.xlane.xlu0 %2974
      %v2976 = vsel %vm1860, %v2847, 0.0
      %v2977 = vadd.f32 %v2704, %v2976
      %2978 = vadd.xlane.f32.xlu0 %v2977
      %v2979 = vpop.xlane.xlu0 %2978
      %v2980 = vsel %vm1860, %v2850, 0.0
      %v2981 = vadd.f32 %v2707, %v2980
      %2982 = vadd.xlane.f32.xlu0 %v2981
      %v2983 = vpop.xlane.xlu0 %2982
      %v2984 = vsel %vm1860, %v2853, 0.0
      %v2985 = vadd.f32 %v2710, %v2984
      %2986 = vadd.xlane.f32.xlu0 %v2985
      %v2987 = vpop.xlane.xlu0 %2986
      %v2988 = vsel %vm1860, %v2856, 0.0
      %v2989 = vadd.f32 %v2713, %v2988
      %2990 = vadd.xlane.f32.xlu0 %v2989
      %v2991 = vpop.xlane.xlu0 %2990
      %v2992 = vsel %vm1860, %v2859, 0.0
      %v2993 = vadd.f32 %v2716, %v2992
      %2994 = vadd.xlane.f32.xlu0 %v2993
      %v2995 = vpop.xlane.xlu0 %2994
      %v2996 = vsel %vm1860, %v2862, 0.0
      %v2997 = vadd.f32 %v2719, %v2996
      %2998 = vadd.xlane.f32.xlu0 %v2997
      %v2999 = vpop.xlane.xlu0 %2998
      %v3000 = vsel %vm1860, %v2865, 0.0
      %v3001 = vadd.f32 %v2722, %v3000
      %3002 = vadd.xlane.f32.xlu0 %v3001
      %v3003 = vpop.xlane.xlu0 %3002
      %v3004 = vsel %vm1860, %v2868, 0.0
      %v3005 = vadd.f32 %v2725, %v3004
      %3006 = vadd.xlane.f32.xlu0 %v3005
      %v3007 = vpop.xlane.xlu0 %3006
      %v3008 = vsel %vm1860, %v2871, 0.0
      %v3009 = vadd.f32 %v2728, %v3008
      %3010 = vadd.xlane.f32.xlu0 %v3009
      %v3011 = vpop.xlane.xlu0 %3010
      %v3012 = vsel %vm1860, %v2874, 0.0
      %v3013 = vadd.f32 %v2731, %v3012
      %3014 = vadd.xlane.f32.xlu0 %v3013
      %v3015 = vpop.xlane.xlu0 %3014
      %v3016 = vsel %vm1860, %v2877, 0.0
      %v3017 = vadd.f32 %v2734, %v3016
      %3018 = vadd.xlane.f32.xlu0 %v3017
      %v3019 = vpop.xlane.xlu0 %3018
      %v3020 = vsel %vm1860, %v2880, 0.0
      %v3021 = vadd.f32 %v2737, %v3020
      %3022 = vadd.xlane.f32.xlu0 %v3021
      %v3023 = vpop.xlane.xlu0 %3022
      %v3024 = vsel %vm1860, %v2883, 0.0
      %v3025 = vadd.f32 %v2740, %v3024
      %3026 = vadd.xlane.f32.xlu0 %v3025
      %v3027 = vpop.xlane.xlu0 %3026
      %v3028 = vsel %vm1860, %v2886, 0.0
      %v3029 = vadd.f32 %v2743, %v3028
      %3030 = vadd.xlane.f32.xlu0 %v3029
      %v3031 = vpop.xlane.xlu0 %3030
      %v3032 = vsel %vm1860, %v2889, 0.0
      %v3033 = vadd.f32 %v2746, %v3032
      %3034 = vadd.xlane.f32.xlu0 %v3033
      %v3035 = vpop.xlane.xlu0 %3034
      %v3036 = vsel %vm1860, %v2892, 0.0
      %v3037 = vadd.f32 %v2749, %v3036
      %3038 = vadd.xlane.f32.xlu0 %v3037
      %v3039 = vpop.xlane.xlu0 %3038
      %v3040 = vsel %vm1860, %v2895, 0.0
      %v3041 = vadd.f32 %v2752, %v3040
      %3042 = vadd.xlane.f32.xlu0 %v3041
      %v3043 = vpop.xlane.xlu0 %3042
      %v3044 = vsel %vm1860, %v2898, 0.0
      %v3045 = vadd.f32 %v2755, %v3044
      %3046 = vadd.xlane.f32.xlu0 %v3045
      %v3047 = vpop.xlane.xlu0 %3046
      %v3048 = vsel %vm1860, %v2901, 0.0
      %v3049 = vadd.f32 %v2758, %v3048
      %3050 = vadd.xlane.f32.xlu0 %v3049
      %v3051 = vpop.xlane.xlu0 %3050
      %v3052 = vsel %vm1860, %v2904, 0.0
      %v3053 = vadd.f32 %v2761, %v3052
      %3054 = vadd.xlane.f32.xlu0 %v3053
      %v3055 = vpop.xlane.xlu0 %3054
      %v3056 = vsel %vm1860, %v2907, 0.0
      %v3057 = vadd.f32 %v2764, %v3056
      %3058 = vadd.xlane.f32.xlu0 %v3057
      %v3059 = vpop.xlane.xlu0 %3058
      %v3060 = vsel %vm1860, %v2910, 0.0
      %v3061 = vadd.f32 %v2767, %v3060
      %3062 = vadd.xlane.f32.xlu0 %v3061
      %v3063 = vpop.xlane.xlu0 %3062
      %v3064 = vsel %vm1860, %v2913, 0.0
      %v3065 = vadd.f32 %v2770, %v3064
      %3066 = vadd.xlane.f32.xlu0 %v3065
      %v3067 = vpop.xlane.xlu0 %3066
      %v3068 = vsel %vm1860, %v2916, 0.0
      %v3069 = vadd.f32 %v2773, %v3068
      %3070 = vadd.xlane.f32.xlu0 %v3069
      %v3071 = vpop.xlane.xlu0 %3070
      %v3072 = vsel %vm1860, %v2919, 0.0
      %v3073 = vadd.f32 %v2776, %v3072
      %3074 = vadd.xlane.f32.xlu0 %v3073
      %v3075 = vpop.xlane.xlu0 %3074
      %v3076 = vsel %vm1860, %v2922, 0.0
      %v3077 = vadd.f32 %v2779, %v3076
      %3078 = vadd.xlane.f32.xlu0 %v3077
      %v3079 = vpop.xlane.xlu0 %3078
      %v3080 = vsel %vm1860, %v2925, 0.0
      %v3081 = vadd.f32 %v2782, %v3080
      %3082 = vadd.xlane.f32.xlu0 %v3081
      %v3083 = vpop.xlane.xlu0 %3082
      %v3084 = vsel %vm1860, %v2928, 0.0
      %v3085 = vadd.f32 %v2785, %v3084
      %3086 = vadd.xlane.f32.xlu0 %v3085
      %v3087 = vpop.xlane.xlu0 %3086
      %v3088 = vsel %vm1860, %v2931, 0.0
      %v3089 = vadd.f32 %v2788, %v3088
      %3090 = vadd.xlane.f32.xlu0 %v3089
      %v3091 = vpop.xlane.xlu0 %3090
      %v3092 = vsel %vm1860, %v2934, 0.0
      %v3093 = vadd.f32 %v2791, %v3092
      %3094 = vadd.xlane.f32.xlu0 %v3093
      %v3095 = vpop.xlane.xlu0 %3094
      %v3096 = vsel %vm1860, %v2937, 0.0
      %v3097 = vadd.f32 %v2794, %v3096
      %3098 = vadd.xlane.f32.xlu0 %v3097
      %v3099 = vpop.xlane.xlu0 %3098
      %v3100 = vsel %vm1860, %v2940, 0.0
      %v3101 = vadd.f32 %v2797, %v3100
      %3102 = vadd.xlane.f32.xlu0 %v3101
      %v3103 = vpop.xlane.xlu0 %3102
      %v3104 = vsel %vm1860, %v2943, 0.0
      %v3105 = vadd.f32 %v2800, %v3104
      %3106 = vadd.xlane.f32.xlu0 %v3105
      %v3107 = vpop.xlane.xlu0 %3106
      %v3108 = vsel %vm1860, %v2946, 0.0
      %v3109 = vadd.f32 %v2803, %v3108
      %3110 = vadd.xlane.f32.xlu0 %v3109
      %v3111 = vpop.xlane.xlu0 %3110
      %v3112 = vsel %vm1860, %v2949, 0.0
      %v3113 = vadd.f32 %v2806, %v3112
      %3114 = vadd.xlane.f32.xlu0 %v3113
      %v3115 = vpop.xlane.xlu0 %3114
      %v3116 = vsel %vm1860, %v2952, 0.0
      %v3117 = vadd.f32 %v2809, %v3116
      %3118 = vadd.xlane.f32.xlu0 %v3117
      %v3119 = vpop.xlane.xlu0 %3118
      %v3120 = vsel %vm1860, %v2955, 0.0
      %v3121 = vadd.f32 %v2812, %v3120
      %3122 = vadd.xlane.f32.xlu0 %v3121
      %v3123 = vpop.xlane.xlu0 %3122
      %v3124 = vsel %vm1860, %v2958, 0.0
      %v3125 = vadd.f32 %v2815, %v3124
      %3126 = vadd.xlane.f32.xlu0 %v3125
      %v3127 = vpop.xlane.xlu0 %3126
      %v3128 = vmul.f32 %v2963, 0.0051020407
      %v3129 = vmul.f32 %v2967, 0.0051020407
      %v3130 = vmul.f32 %v2971, 0.0051020407
      %v3131 = vmul.f32 %v2975, 0.0051020407
      %v3132 = vmul.f32 %v2979, 0.0051020407
      %v3133 = vmul.f32 %v2983, 0.0051020407
      %v3134 = vmul.f32 %v2987, 0.0051020407
      %v3135 = vmul.f32 %v2991, 0.0051020407
      %v3136 = vmul.f32 %v2995, 0.0051020407
      %v3137 = vmul.f32 %v2999, 0.0051020407
      %v3138 = vmul.f32 %v3003, 0.0051020407
      %v3139 = vmul.f32 %v3007, 0.0051020407
      %v3140 = vmul.f32 %v3011, 0.0051020407
      %v3141 = vmul.f32 %v3015, 0.0051020407
      %v3142 = vmul.f32 %v3019, 0.0051020407
      %v3143 = vmul.f32 %v3023, 0.0051020407
      %v3144 = vmul.f32 %v3027, 0.0051020407
      %v3145 = vmul.f32 %v3031, 0.0051020407
      %v3146 = vmul.f32 %v3035, 0.0051020407
      %v3147 = vmul.f32 %v3039, 0.0051020407
      %v3148 = vmul.f32 %v3043, 0.0051020407
      %v3149 = vmul.f32 %v3047, 0.0051020407
      %v3150 = vmul.f32 %v3051, 0.0051020407
      %v3151 = vmul.f32 %v3055, 0.0051020407
      %v3152 = vmul.f32 %v3059, 0.0051020407
      %v3153 = vmul.f32 %v3063, 0.0051020407
      %v3154 = vmul.f32 %v3067, 0.0051020407
      %v3155 = vmul.f32 %v3071, 0.0051020407
      %v3156 = vmul.f32 %v3075, 0.0051020407
      %v3157 = vmul.f32 %v3079, 0.0051020407
      %v3158 = vmul.f32 %v3083, 0.0051020407
      %v3159 = vmul.f32 %v3087, 0.0051020407
      %v3160 = vmul.f32 %v3091, 0.0051020407
      %v3161 = vmul.f32 %v3095, 0.0051020407
      %v3162 = vmul.f32 %v3099, 0.0051020407
      %v3163 = vmul.f32 %v3103, 0.0051020407
      %v3164 = vmul.f32 %v3107, 0.0051020407
      %v3165 = vmul.f32 %v3111, 0.0051020407
      %v3166 = vmul.f32 %v3115, 0.0051020407
      %v3167 = vmul.f32 %v3119, 0.0051020407
      %v3168 = vmul.f32 %v3123, 0.0051020407
      %v3169 = vmul.f32 %v3127, 0.0051020407
      %v3170 = vmul.f32 %v2692, %v2692
      %v3171 = vmul.f32 %v2835, %v2835
      %v3172 = vmul.f32 %v2695, %v2695
      %v3173 = vmul.f32 %v2838, %v2838
      %v3174 = vmul.f32 %v2698, %v2698
      %v3175 = vmul.f32 %v2841, %v2841
      %v3176 = vmul.f32 %v2701, %v2701
      %v3177 = vmul.f32 %v2844, %v2844
      %v3178 = vmul.f32 %v2704, %v2704
      %v3179 = vmul.f32 %v2847, %v2847
      %v3180 = vmul.f32 %v2707, %v2707
      %v3181 = vmul.f32 %v2850, %v2850
      %v3182 = vmul.f32 %v2710, %v2710
      %v3183 = vmul.f32 %v2853, %v2853
      %v3184 = vmul.f32 %v2713, %v2713
      %v3185 = vmul.f32 %v2856, %v2856
      %v3186 = vmul.f32 %v2716, %v2716
      %v3187 = vmul.f32 %v2859, %v2859
      %v3188 = vmul.f32 %v2719, %v2719
      %v3189 = vmul.f32 %v2862, %v2862
      %v3190 = vmul.f32 %v2722, %v2722
      %v3191 = vmul.f32 %v2865, %v2865
      %v3192 = vmul.f32 %v2725, %v2725
      %v3193 = vmul.f32 %v2868, %v2868
      %v3194 = vmul.f32 %v2728, %v2728
      %v3195 = vmul.f32 %v2871, %v2871
      %v3196 = vmul.f32 %v2731, %v2731
      %v3197 = vmul.f32 %v2874, %v2874
      %v3198 = vmul.f32 %v2734, %v2734
      %v3199 = vmul.f32 %v2877, %v2877
      %v3200 = vmul.f32 %v2737, %v2737
      %v3201 = vmul.f32 %v2880, %v2880
      %v3202 = vmul.f32 %v2740, %v2740
      %v3203 = vmul.f32 %v2883, %v2883
      %v3204 = vmul.f32 %v2743, %v2743
      %v3205 = vmul.f32 %v2886, %v2886
      %v3206 = vmul.f32 %v2746, %v2746
      %v3207 = vmul.f32 %v2889, %v2889
      %v3208 = vmul.f32 %v2749, %v2749
      %v3209 = vmul.f32 %v2892, %v2892
      %v3210 = vmul.f32 %v2752, %v2752
      %v3211 = vmul.f32 %v2895, %v2895
      %v3212 = vmul.f32 %v2755, %v2755
      %v3213 = vmul.f32 %v2898, %v2898
      %v3214 = vmul.f32 %v2758, %v2758
      %v3215 = vmul.f32 %v2901, %v2901
      %v3216 = vmul.f32 %v2761, %v2761
      %v3217 = vmul.f32 %v2904, %v2904
      %v3218 = vmul.f32 %v2764, %v2764
      %v3219 = vmul.f32 %v2907, %v2907
      %v3220 = vmul.f32 %v2767, %v2767
      %v3221 = vmul.f32 %v2910, %v2910
      %v3222 = vmul.f32 %v2770, %v2770
      %v3223 = vmul.f32 %v2913, %v2913
      %v3224 = vmul.f32 %v2773, %v2773
      %v3225 = vmul.f32 %v2916, %v2916
      %v3226 = vmul.f32 %v2776, %v2776
      %v3227 = vmul.f32 %v2919, %v2919
      %v3228 = vmul.f32 %v2779, %v2779
      %v3229 = vmul.f32 %v2922, %v2922
      %v3230 = vmul.f32 %v2782, %v2782
      %v3231 = vmul.f32 %v2925, %v2925
      %v3232 = vmul.f32 %v2785, %v2785
      %v3233 = vmul.f32 %v2928, %v2928
      %v3234 = vmul.f32 %v2788, %v2788
      %v3235 = vmul.f32 %v2931, %v2931
      %v3236 = vmul.f32 %v2791, %v2791
      %v3237 = vmul.f32 %v2934, %v2934
      %v3238 = vmul.f32 %v2794, %v2794
      %v3239 = vmul.f32 %v2937, %v2937
      %v3240 = vmul.f32 %v2797, %v2797
      %v3241 = vmul.f32 %v2940, %v2940
      %v3242 = vmul.f32 %v2800, %v2800
      %v3243 = vmul.f32 %v2943, %v2943
      %v3244 = vmul.f32 %v2803, %v2803
      %v3245 = vmul.f32 %v2946, %v2946
      %v3246 = vmul.f32 %v2806, %v2806
      %v3247 = vmul.f32 %v2949, %v2949
      %v3248 = vmul.f32 %v2809, %v2809
      %v3249 = vmul.f32 %v2952, %v2952
      %v3250 = vmul.f32 %v2812, %v2812
      %v3251 = vmul.f32 %v2955, %v2955
      %v3252 = vmul.f32 %v2815, %v2815
      %v3253 = vmul.f32 %v2958, %v2958
      %v3254 = vsel %vm1860, %v3171, 0.0
      %v3255 = vadd.f32 %v3170, %v3254
      %3256 = vadd.xlane.f32.xlu0 %v3255
      %v3257 = vpop.xlane.xlu0 %3256
      %v3258 = vsel %vm1860, %v3173, 0.0
      %v3259 = vadd.f32 %v3172, %v3258
      %3260 = vadd.xlane.f32.xlu0 %v3259
      %v3261 = vpop.xlane.xlu0 %3260
      %v3262 = vsel %vm1860, %v3175, 0.0
      %v3263 = vadd.f32 %v3174, %v3262
      %3264 = vadd.xlane.f32.xlu0 %v3263
      %v3265 = vpop.xlane.xlu0 %3264
      %v3266 = vsel %vm1860, %v3177, 0.0
      %v3267 = vadd.f32 %v3176, %v3266
      %3268 = vadd.xlane.f32.xlu0 %v3267
      %v3269 = vpop.xlane.xlu0 %3268
      %v3270 = vsel %vm1860, %v3179, 0.0
      %v3271 = vadd.f32 %v3178, %v3270
      %3272 = vadd.xlane.f32.xlu0 %v3271
      %v3273 = vpop.xlane.xlu0 %3272
      %v3274 = vsel %vm1860, %v3181, 0.0
      %v3275 = vadd.f32 %v3180, %v3274
      %3276 = vadd.xlane.f32.xlu0 %v3275
      %v3277 = vpop.xlane.xlu0 %3276
      %v3278 = vsel %vm1860, %v3183, 0.0
      %v3279 = vadd.f32 %v3182, %v3278
      %3280 = vadd.xlane.f32.xlu0 %v3279
      %v3281 = vpop.xlane.xlu0 %3280
      %v3282 = vsel %vm1860, %v3185, 0.0
      %v3283 = vadd.f32 %v3184, %v3282
      %3284 = vadd.xlane.f32.xlu0 %v3283
      %v3285 = vpop.xlane.xlu0 %3284
      %v3286 = vsel %vm1860, %v3187, 0.0
      %v3287 = vadd.f32 %v3186, %v3286
      %3288 = vadd.xlane.f32.xlu0 %v3287
      %v3289 = vpop.xlane.xlu0 %3288
      %v3290 = vsel %vm1860, %v3189, 0.0
      %v3291 = vadd.f32 %v3188, %v3290
      %3292 = vadd.xlane.f32.xlu0 %v3291
      %v3293 = vpop.xlane.xlu0 %3292
      %v3294 = vsel %vm1860, %v3191, 0.0
      %v3295 = vadd.f32 %v3190, %v3294
      %3296 = vadd.xlane.f32.xlu0 %v3295
      %v3297 = vpop.xlane.xlu0 %3296
      %v3298 = vsel %vm1860, %v3193, 0.0
      %v3299 = vadd.f32 %v3192, %v3298
      %3300 = vadd.xlane.f32.xlu0 %v3299
      %v3301 = vpop.xlane.xlu0 %3300
      %v3302 = vsel %vm1860, %v3195, 0.0
      %v3303 = vadd.f32 %v3194, %v3302
      %3304 = vadd.xlane.f32.xlu0 %v3303
      %v3305 = vpop.xlane.xlu0 %3304
      %v3306 = vsel %vm1860, %v3197, 0.0
      %v3307 = vadd.f32 %v3196, %v3306
      %3308 = vadd.xlane.f32.xlu0 %v3307
      %v3309 = vpop.xlane.xlu0 %3308
      %v3310 = vsel %vm1860, %v3199, 0.0
      %v3311 = vadd.f32 %v3198, %v3310
      %3312 = vadd.xlane.f32.xlu0 %v3311
      %v3313 = vpop.xlane.xlu0 %3312
      %v3314 = vsel %vm1860, %v3201, 0.0
      %v3315 = vadd.f32 %v3200, %v3314
      %3316 = vadd.xlane.f32.xlu0 %v3315
      %v3317 = vpop.xlane.xlu0 %3316
      %v3318 = vsel %vm1860, %v3203, 0.0
      %v3319 = vadd.f32 %v3202, %v3318
      %3320 = vadd.xlane.f32.xlu0 %v3319
      %v3321 = vpop.xlane.xlu0 %3320
      %v3322 = vsel %vm1860, %v3205, 0.0
      %v3323 = vadd.f32 %v3204, %v3322
      %3324 = vadd.xlane.f32.xlu0 %v3323
      %v3325 = vpop.xlane.xlu0 %3324
      %v3326 = vsel %vm1860, %v3207, 0.0
      %v3327 = vadd.f32 %v3206, %v3326
      %3328 = vadd.xlane.f32.xlu0 %v3327
      %v3329 = vpop.xlane.xlu0 %3328
      %v3330 = vsel %vm1860, %v3209, 0.0
      %v3331 = vadd.f32 %v3208, %v3330
      %3332 = vadd.xlane.f32.xlu0 %v3331
      %v3333 = vpop.xlane.xlu0 %3332
      %v3334 = vsel %vm1860, %v3211, 0.0
      %v3335 = vadd.f32 %v3210, %v3334
      %3336 = vadd.xlane.f32.xlu0 %v3335
      %v3337 = vpop.xlane.xlu0 %3336
      %v3338 = vsel %vm1860, %v3213, 0.0
      %v3339 = vadd.f32 %v3212, %v3338
      %3340 = vadd.xlane.f32.xlu0 %v3339
      %v3341 = vpop.xlane.xlu0 %3340
      %v3342 = vsel %vm1860, %v3215, 0.0
      %v3343 = vadd.f32 %v3214, %v3342
      %3344 = vadd.xlane.f32.xlu0 %v3343
      %v3345 = vpop.xlane.xlu0 %3344
      %v3346 = vsel %vm1860, %v3217, 0.0
      %v3347 = vadd.f32 %v3216, %v3346
      %3348 = vadd.xlane.f32.xlu0 %v3347
      %v3349 = vpop.xlane.xlu0 %3348
      %v3350 = vsel %vm1860, %v3219, 0.0
      %v3351 = vadd.f32 %v3218, %v3350
      %3352 = vadd.xlane.f32.xlu0 %v3351
      %v3353 = vpop.xlane.xlu0 %3352
      %v3354 = vsel %vm1860, %v3221, 0.0
      %v3355 = vadd.f32 %v3220, %v3354
      %3356 = vadd.xlane.f32.xlu0 %v3355
      %v3357 = vpop.xlane.xlu0 %3356
      %v3358 = vsel %vm1860, %v3223, 0.0
      %v3359 = vadd.f32 %v3222, %v3358
      %3360 = vadd.xlane.f32.xlu0 %v3359
      %v3361 = vpop.xlane.xlu0 %3360
      %v3362 = vsel %vm1860, %v3225, 0.0
      %v3363 = vadd.f32 %v3224, %v3362
      %3364 = vadd.xlane.f32.xlu0 %v3363
      %v3365 = vpop.xlane.xlu0 %3364
      %v3366 = vsel %vm1860, %v3227, 0.0
      %v3367 = vadd.f32 %v3226, %v3366
      %3368 = vadd.xlane.f32.xlu0 %v3367
      %v3369 = vpop.xlane.xlu0 %3368
      %v3370 = vsel %vm1860, %v3229, 0.0
      %v3371 = vadd.f32 %v3228, %v3370
      %3372 = vadd.xlane.f32.xlu0 %v3371
      %v3373 = vpop.xlane.xlu0 %3372
      %v3374 = vsel %vm1860, %v3231, 0.0
      %v3375 = vadd.f32 %v3230, %v3374
      %3376 = vadd.xlane.f32.xlu0 %v3375
      %v3377 = vpop.xlane.xlu0 %3376
      %v3378 = vsel %vm1860, %v3233, 0.0
      %v3379 = vadd.f32 %v3232, %v3378
      %3380 = vadd.xlane.f32.xlu0 %v3379
      %v3381 = vpop.xlane.xlu0 %3380
      %v3382 = vsel %vm1860, %v3235, 0.0
      %v3383 = vadd.f32 %v3234, %v3382
      %3384 = vadd.xlane.f32.xlu0 %v3383
      %v3385 = vpop.xlane.xlu0 %3384
      %v3386 = vsel %vm1860, %v3237, 0.0
      %v3387 = vadd.f32 %v3236, %v3386
      %3388 = vadd.xlane.f32.xlu0 %v3387
      %v3389 = vpop.xlane.xlu0 %3388
      %v3390 = vsel %vm1860, %v3239, 0.0
      %v3391 = vadd.f32 %v3238, %v3390
      %3392 = vadd.xlane.f32.xlu0 %v3391
      %v3393 = vpop.xlane.xlu0 %3392
      %v3394 = vsel %vm1860, %v3241, 0.0
      %v3395 = vadd.f32 %v3240, %v3394
      %3396 = vadd.xlane.f32.xlu0 %v3395
      %v3397 = vpop.xlane.xlu0 %3396
      %v3398 = vsel %vm1860, %v3243, 0.0
      %v3399 = vadd.f32 %v3242, %v3398
      %3400 = vadd.xlane.f32.xlu0 %v3399
      %v3401 = vpop.xlane.xlu0 %3400
      %v3402 = vsel %vm1860, %v3245, 0.0
      %v3403 = vadd.f32 %v3244, %v3402
      %3404 = vadd.xlane.f32.xlu0 %v3403
      %v3405 = vpop.xlane.xlu0 %3404
      %v3406 = vsel %vm1860, %v3247, 0.0
      %v3407 = vadd.f32 %v3246, %v3406
      %3408 = vadd.xlane.f32.xlu0 %v3407
      %v3409 = vpop.xlane.xlu0 %3408
      %v3410 = vsel %vm1860, %v3249, 0.0
      %v3411 = vadd.f32 %v3248, %v3410
      %3412 = vadd.xlane.f32.xlu0 %v3411
      %v3413 = vpop.xlane.xlu0 %3412
      %v3414 = vsel %vm1860, %v3251, 0.0
      %v3415 = vadd.f32 %v3250, %v3414
      %3416 = vadd.xlane.f32.xlu0 %v3415
      %v3417 = vpop.xlane.xlu0 %3416
      %v3418 = vsel %vm1860, %v3253, 0.0
      %v3419 = vadd.f32 %v3252, %v3418
      %3420 = vadd.xlane.f32.xlu0 %v3419
      %v3421 = vpop.xlane.xlu0 %3420
      %v3422 = vmul.f32 %v3257, 0.0051020407
      %v3423 = vmul.f32 %v3261, 0.0051020407
      %v3424 = vmul.f32 %v3265, 0.0051020407
      %v3425 = vmul.f32 %v3269, 0.0051020407
      %v3426 = vmul.f32 %v3273, 0.0051020407
      %v3427 = vmul.f32 %v3277, 0.0051020407
      %v3428 = vmul.f32 %v3281, 0.0051020407
      %v3429 = vmul.f32 %v3285, 0.0051020407
      %v3430 = vmul.f32 %v3289, 0.0051020407
      %v3431 = vmul.f32 %v3293, 0.0051020407
      %v3432 = vmul.f32 %v3297, 0.0051020407
      %v3433 = vmul.f32 %v3301, 0.0051020407
      %v3434 = vmul.f32 %v3305, 0.0051020407
      %v3435 = vmul.f32 %v3309, 0.0051020407
      %v3436 = vmul.f32 %v3313, 0.0051020407
      %v3437 = vmul.f32 %v3317, 0.0051020407
      %v3438 = vmul.f32 %v3321, 0.0051020407
      %v3439 = vmul.f32 %v3325, 0.0051020407
      %v3440 = vmul.f32 %v3329, 0.0051020407
      %v3441 = vmul.f32 %v3333, 0.0051020407
      %v3442 = vmul.f32 %v3337, 0.0051020407
      %v3443 = vmul.f32 %v3341, 0.0051020407
      %v3444 = vmul.f32 %v3345, 0.0051020407
      %v3445 = vmul.f32 %v3349, 0.0051020407
      %v3446 = vmul.f32 %v3353, 0.0051020407
      %v3447 = vmul.f32 %v3357, 0.0051020407
      %v3448 = vmul.f32 %v3361, 0.0051020407
      %v3449 = vmul.f32 %v3365, 0.0051020407
      %v3450 = vmul.f32 %v3369, 0.0051020407
      %v3451 = vmul.f32 %v3373, 0.0051020407
      %v3452 = vmul.f32 %v3377, 0.0051020407
      %v3453 = vmul.f32 %v3381, 0.0051020407
      %v3454 = vmul.f32 %v3385, 0.0051020407
      %v3455 = vmul.f32 %v3389, 0.0051020407
      %v3456 = vmul.f32 %v3393, 0.0051020407
      %v3457 = vmul.f32 %v3397, 0.0051020407
      %v3458 = vmul.f32 %v3401, 0.0051020407
      %v3459 = vmul.f32 %v3405, 0.0051020407
      %v3460 = vmul.f32 %v3409, 0.0051020407
      %v3461 = vmul.f32 %v3413, 0.0051020407
      %v3462 = vmul.f32 %v3417, 0.0051020407
      %v3463 = vmul.f32 %v3421, 0.0051020407
      %v3464 = vmul.f32 %v3128, %v3128
      %v3465 = vmul.f32 %v3129, %v3129
      %v3466 = vmul.f32 %v3130, %v3130
      %v3467 = vmul.f32 %v3131, %v3131
      %v3468 = vmul.f32 %v3132, %v3132
      %v3469 = vmul.f32 %v3133, %v3133
      %v3470 = vmul.f32 %v3134, %v3134
      %v3471 = vmul.f32 %v3135, %v3135
      %v3472 = vmul.f32 %v3136, %v3136
      %v3473 = vmul.f32 %v3137, %v3137
      %v3474 = vmul.f32 %v3138, %v3138
      %v3475 = vmul.f32 %v3139, %v3139
      %v3476 = vmul.f32 %v3140, %v3140
      %v3477 = vmul.f32 %v3141, %v3141
      %v3478 = vmul.f32 %v3142, %v3142
      %v3479 = vmul.f32 %v3143, %v3143
      %v3480 = vmul.f32 %v3144, %v3144
      %v3481 = vmul.f32 %v3145, %v3145
      %v3482 = vmul.f32 %v3146, %v3146
      %v3483 = vmul.f32 %v3147, %v3147
      %v3484 = vmul.f32 %v3148, %v3148
      %v3485 = vmul.f32 %v3149, %v3149
      %v3486 = vmul.f32 %v3150, %v3150
      %v3487 = vmul.f32 %v3151, %v3151
      %v3488 = vmul.f32 %v3152, %v3152
      %v3489 = vmul.f32 %v3153, %v3153
      %v3490 = vmul.f32 %v3154, %v3154
      %v3491 = vmul.f32 %v3155, %v3155
      %v3492 = vmul.f32 %v3156, %v3156
      %v3493 = vmul.f32 %v3157, %v3157
      %v3494 = vmul.f32 %v3158, %v3158
      %v3495 = vmul.f32 %v3159, %v3159
      %v3496 = vmul.f32 %v3160, %v3160
      %v3497 = vmul.f32 %v3161, %v3161
      %v3498 = vmul.f32 %v3162, %v3162
      %v3499 = vmul.f32 %v3163, %v3163
      %v3500 = vmul.f32 %v3164, %v3164
      %v3501 = vmul.f32 %v3165, %v3165
      %v3502 = vmul.f32 %v3166, %v3166
      %v3503 = vmul.f32 %v3167, %v3167
      %v3504 = vmul.f32 %v3168, %v3168
      %v3505 = vmul.f32 %v3169, %v3169
      %v3506 = vsub.f32 %v3422, %v3464
      %v3507 = vsub.f32 %v3423, %v3465
      %v3508 = vsub.f32 %v3424, %v3466
      %v3509 = vsub.f32 %v3425, %v3467
      %v3510 = vsub.f32 %v3426, %v3468
      %v3511 = vsub.f32 %v3427, %v3469
      %v3512 = vsub.f32 %v3428, %v3470
      %v3513 = vsub.f32 %v3429, %v3471
      %v3514 = vsub.f32 %v3430, %v3472
      %v3515 = vsub.f32 %v3431, %v3473
      %v3516 = vsub.f32 %v3432, %v3474
      %v3517 = vsub.f32 %v3433, %v3475
      %v3518 = vsub.f32 %v3434, %v3476
      %v3519 = vsub.f32 %v3435, %v3477
      %v3520 = vsub.f32 %v3436, %v3478
      %v3521 = vsub.f32 %v3437, %v3479
      %v3522 = vsub.f32 %v3438, %v3480
      %v3523 = vsub.f32 %v3439, %v3481
      %v3524 = vsub.f32 %v3440, %v3482
      %v3525 = vsub.f32 %v3441, %v3483
      %v3526 = vsub.f32 %v3442, %v3484
      %v3527 = vsub.f32 %v3443, %v3485
      %v3528 = vsub.f32 %v3444, %v3486
      %v3529 = vsub.f32 %v3445, %v3487
      %v3530 = vsub.f32 %v3446, %v3488
      %v3531 = vsub.f32 %v3447, %v3489
      %v3532 = vsub.f32 %v3448, %v3490
      %v3533 = vsub.f32 %v3449, %v3491
      %v3534 = vsub.f32 %v3450, %v3492
      %v3535 = vsub.f32 %v3451, %v3493
      %v3536 = vsub.f32 %v3452, %v3494
      %v3537 = vsub.f32 %v3453, %v3495
      %v3538 = vsub.f32 %v3454, %v3496
      %v3539 = vsub.f32 %v3455, %v3497
      %v3540 = vsub.f32 %v3456, %v3498
      %v3541 = vsub.f32 %v3457, %v3499
      %v3542 = vsub.f32 %v3458, %v3500
      %v3543 = vsub.f32 %v3459, %v3501
      %v3544 = vsub.f32 %v3460, %v3502
      %v3545 = vsub.f32 %v3461, %v3503
      %v3546 = vsub.f32 %v3462, %v3504
      %v3547 = vsub.f32 %v3463, %v3505
      %v3548 = vmax.f32 %v3506, 0.0
      %v3549 = vmax.f32 %v3507, 0.0
      %v3550 = vmax.f32 %v3508, 0.0
      %v3551 = vmax.f32 %v3509, 0.0
      %v3552 = vmax.f32 %v3510, 0.0
      %v3553 = vmax.f32 %v3511, 0.0
      %v3554 = vmax.f32 %v3512, 0.0
      %v3555 = vmax.f32 %v3513, 0.0
      %v3556 = vmax.f32 %v3514, 0.0
      %v3557 = vmax.f32 %v3515, 0.0
      %v3558 = vmax.f32 %v3516, 0.0
      %v3559 = vmax.f32 %v3517, 0.0
      %v3560 = vmax.f32 %v3518, 0.0
      %v3561 = vmax.f32 %v3519, 0.0
      %v3562 = vmax.f32 %v3520, 0.0
      %v3563 = vmax.f32 %v3521, 0.0
      %v3564 = vmax.f32 %v3522, 0.0
      %v3565 = vmax.f32 %v3523, 0.0
      %v3566 = vmax.f32 %v3524, 0.0
      %v3567 = vmax.f32 %v3525, 0.0
      %v3568 = vmax.f32 %v3526, 0.0
      %v3569 = vmax.f32 %v3527, 0.0
      %v3570 = vmax.f32 %v3528, 0.0
      %v3571 = vmax.f32 %v3529, 0.0
      %v3572 = vmax.f32 %v3530, 0.0
      %v3573 = vmax.f32 %v3531, 0.0
      %v3574 = vmax.f32 %v3532, 0.0
      %v3575 = vmax.f32 %v3533, 0.0
      %v3576 = vmax.f32 %v3534, 0.0
      %v3577 = vmax.f32 %v3535, 0.0
      %v3578 = vmax.f32 %v3536, 0.0
      %v3579 = vmax.f32 %v3537, 0.0
      %v3580 = vmax.f32 %v3538, 0.0
      %v3581 = vmax.f32 %v3539, 0.0
      %v3582 = vmax.f32 %v3540, 0.0
      %v3583 = vmax.f32 %v3541, 0.0
      %v3584 = vmax.f32 %v3542, 0.0
      %v3585 = vmax.f32 %v3543, 0.0
      %v3586 = vmax.f32 %v3544, 0.0
      %v3587 = vmax.f32 %v3545, 0.0
      %v3588 = vmax.f32 %v3546, 0.0
      %v3589 = vmax.f32 %v3547, 0.0
      %s3590 = smul.u32 %s15, 336
      %s3591 = sadd.s32 %s3590, 560
      %s3592 = scalar_lea.vmem %s0, %s3591
      %v3593 = vld [vmem:[%s3592] sm:$0xff]
      %v3594 = vld [vmem:[%s3592 + $0x8] sm:$0xff]
      %v3595 = vld [vmem:[%s3592 + $0x10] sm:$0xff]
      %v3596 = vld [vmem:[%s3592 + $0x18] sm:$0xff]
      %v3597 = vld [vmem:[%s3592 + $0x20] sm:$0xff]
      %v3598 = vld [vmem:[%s3592 + $0x28] sm:$0xff]
      %v3599 = vld [vmem:[%s3592 + $0x30] sm:$0xff]
      %v3600 = vld [vmem:[%s3592 + $0x38] sm:$0xff]
      %v3601 = vld [vmem:[%s3592 + $0x40] sm:$0xff]
      %v3602 = vld [vmem:[%s3592 + $0x48] sm:$0xff]
      %v3603 = vld [vmem:[%s3592 + $0x50] sm:$0xff]
      %v3604 = vld [vmem:[%s3592 + $0x58] sm:$0xff]
      %v3605 = vld [vmem:[%s3592 + $0x60] sm:$0xff]
      %v3606 = vld [vmem:[%s3592 + $0x68] sm:$0xff]
      %v3607 = vld [vmem:[%s3592 + $0x70] sm:$0xff]
      %v3608 = vld [vmem:[%s3592 + $0x78] sm:$0xff]
      %v3609 = vld [vmem:[%s3592 + $0x80] sm:$0xff]
      %v3610 = vld [vmem:[%s3592 + $0x88] sm:$0xff]
      %v3611 = vld [vmem:[%s3592 + $0x90] sm:$0xff]
      %v3612 = vld [vmem:[%s3592 + $0x98] sm:$0xff]
      %v3613 = vld [vmem:[%s3592 + $0xa0] sm:$0xff]
      %v3614 = vld [vmem:[%s3592 + $0xa8] sm:$0xff]
      %v3615 = vld [vmem:[%s3592 + $0xb0] sm:$0xff]
      %v3616 = vld [vmem:[%s3592 + $0xb8] sm:$0xff]
      %v3617 = vld [vmem:[%s3592 + $0xc0] sm:$0xff]
      %v3618 = vld [vmem:[%s3592 + $0xc8] sm:$0xff]
      %v3619 = vld [vmem:[%s3592 + $0xd0] sm:$0xff]
      %v3620 = vld [vmem:[%s3592 + $0xd8] sm:$0xff]
      %v3621 = vld [vmem:[%s3592 + $0xe0] sm:$0xff]
      %v3622 = vld [vmem:[%s3592 + $0xe8] sm:$0xff]
      %v3623 = vld [vmem:[%s3592 + $0xf0] sm:$0xff]
      %v3624 = vld [vmem:[%s3592 + $0xf8] sm:$0xff]
      %v3625 = vld [vmem:[%s3592 + $0x100] sm:$0xff]
      %v3626 = vld [vmem:[%s3592 + $0x108] sm:$0xff]
      %v3627 = vld [vmem:[%s3592 + $0x110] sm:$0xff]
      %v3628 = vld [vmem:[%s3592 + $0x118] sm:$0xff]
      %v3629 = vld [vmem:[%s3592 + $0x120] sm:$0xff]
      %v3630 = vld [vmem:[%s3592 + $0x128] sm:$0xff]
      %v3631 = vld [vmem:[%s3592 + $0x130] sm:$0xff]
      %v3632 = vld [vmem:[%s3592 + $0x138] sm:$0xff]
      %v3633 = vld [vmem:[%s3592 + $0x140] sm:$0xff]
      %v3634 = vld [vmem:[%s3592 + $0x148] sm:$0xff]
      %s3635 = sadd.s32 %s3590, 1232
      %s3636 = scalar_lea.vmem %s0, %s3635
      %v3637 = vld [vmem:[%s3636] sm:$0xff]
      %v3638 = vld [vmem:[%s3636 + $0x8] sm:$0xff]
      %v3639 = vld [vmem:[%s3636 + $0x10] sm:$0xff]
      %v3640 = vld [vmem:[%s3636 + $0x18] sm:$0xff]
      %v3641 = vld [vmem:[%s3636 + $0x20] sm:$0xff]
      %v3642 = vld [vmem:[%s3636 + $0x28] sm:$0xff]
      %v3643 = vld [vmem:[%s3636 + $0x30] sm:$0xff]
      %v3644 = vld [vmem:[%s3636 + $0x38] sm:$0xff]
      %v3645 = vld [vmem:[%s3636 + $0x40] sm:$0xff]
      %v3646 = vld [vmem:[%s3636 + $0x48] sm:$0xff]
      %v3647 = vld [vmem:[%s3636 + $0x50] sm:$0xff]
      %v3648 = vld [vmem:[%s3636 + $0x58] sm:$0xff]
      %v3649 = vld [vmem:[%s3636 + $0x60] sm:$0xff]
      %v3650 = vld [vmem:[%s3636 + $0x68] sm:$0xff]
      %v3651 = vld [vmem:[%s3636 + $0x70] sm:$0xff]
      %v3652 = vld [vmem:[%s3636 + $0x78] sm:$0xff]
      %v3653 = vld [vmem:[%s3636 + $0x80] sm:$0xff]
      %v3654 = vld [vmem:[%s3636 + $0x88] sm:$0xff]
      %v3655 = vld [vmem:[%s3636 + $0x90] sm:$0xff]
      %v3656 = vld [vmem:[%s3636 + $0x98] sm:$0xff]
      %v3657 = vld [vmem:[%s3636 + $0xa0] sm:$0xff]
      %v3658 = vld [vmem:[%s3636 + $0xa8] sm:$0xff]
      %v3659 = vld [vmem:[%s3636 + $0xb0] sm:$0xff]
      %v3660 = vld [vmem:[%s3636 + $0xb8] sm:$0xff]
      %v3661 = vld [vmem:[%s3636 + $0xc0] sm:$0xff]
      %v3662 = vld [vmem:[%s3636 + $0xc8] sm:$0xff]
      %v3663 = vld [vmem:[%s3636 + $0xd0] sm:$0xff]
      %v3664 = vld [vmem:[%s3636 + $0xd8] sm:$0xff]
      %v3665 = vld [vmem:[%s3636 + $0xe0] sm:$0xff]
      %v3666 = vld [vmem:[%s3636 + $0xe8] sm:$0xff]
      %v3667 = vld [vmem:[%s3636 + $0xf0] sm:$0xff]
      %v3668 = vld [vmem:[%s3636 + $0xf8] sm:$0xff]
      %v3669 = vld [vmem:[%s3636 + $0x100] sm:$0xff]
      %v3670 = vld [vmem:[%s3636 + $0x108] sm:$0xff]
      %v3671 = vld [vmem:[%s3636 + $0x110] sm:$0xff]
      %v3672 = vld [vmem:[%s3636 + $0x118] sm:$0xff]
      %v3673 = vld [vmem:[%s3636 + $0x120] sm:$0xff]
      %v3674 = vld [vmem:[%s3636 + $0x128] sm:$0xff]
      %v3675 = vld [vmem:[%s3636 + $0x130] sm:$0xff]
      %v3676 = vld [vmem:[%s3636 + $0x138] sm:$0xff]
      %v3677 = vld [vmem:[%s3636 + $0x140] sm:$0xff]
      %v3678 = vld [vmem:[%s3636 + $0x148] sm:$0xff]
      %v3679 = vsub.f32 %v2692, %v3128
      %v3680 = vsub.f32 %v2835, %v3128
      %v3681 = vsub.f32 %v2695, %v3129
      %v3682 = vsub.f32 %v2838, %v3129
      %v3683 = vsub.f32 %v2698, %v3130
      %v3684 = vsub.f32 %v2841, %v3130
      %v3685 = vsub.f32 %v2701, %v3131
      %v3686 = vsub.f32 %v2844, %v3131
      %v3687 = vsub.f32 %v2704, %v3132
      %v3688 = vsub.f32 %v2847, %v3132
      %v3689 = vsub.f32 %v2707, %v3133
      %v3690 = vsub.f32 %v2850, %v3133
      %v3691 = vsub.f32 %v2710, %v3134
      %v3692 = vsub.f32 %v2853, %v3134
      %v3693 = vsub.f32 %v2713, %v3135
      %v3694 = vsub.f32 %v2856, %v3135
      %v3695 = vsub.f32 %v2716, %v3136
      %v3696 = vsub.f32 %v2859, %v3136
      %v3697 = vsub.f32 %v2719, %v3137
      %v3698 = vsub.f32 %v2862, %v3137
      %v3699 = vsub.f32 %v2722, %v3138
      %v3700 = vsub.f32 %v2865, %v3138
      %v3701 = vsub.f32 %v2725, %v3139
      %v3702 = vsub.f32 %v2868, %v3139
      %v3703 = vsub.f32 %v2728, %v3140
      %v3704 = vsub.f32 %v2871, %v3140
      %v3705 = vsub.f32 %v2731, %v3141
      %v3706 = vsub.f32 %v2874, %v3141
      %v3707 = vsub.f32 %v2734, %v3142
      %v3708 = vsub.f32 %v2877, %v3142
      %v3709 = vsub.f32 %v2737, %v3143
      %v3710 = vsub.f32 %v2880, %v3143
      %v3711 = vsub.f32 %v2740, %v3144
      %v3712 = vsub.f32 %v2883, %v3144
      %v3713 = vsub.f32 %v2743, %v3145
      %v3714 = vsub.f32 %v2886, %v3145
      %v3715 = vsub.f32 %v2746, %v3146
      %v3716 = vsub.f32 %v2889, %v3146
      %v3717 = vsub.f32 %v2749, %v3147
      %v3718 = vsub.f32 %v2892, %v3147
      %v3719 = vsub.f32 %v2752, %v3148
      %v3720 = vsub.f32 %v2895, %v3148
      %v3721 = vsub.f32 %v2755, %v3149
      %v3722 = vsub.f32 %v2898, %v3149
      %v3723 = vsub.f32 %v2758, %v3150
      %v3724 = vsub.f32 %v2901, %v3150
      %v3725 = vsub.f32 %v2761, %v3151
      %v3726 = vsub.f32 %v2904, %v3151
      %v3727 = vsub.f32 %v2764, %v3152
      %v3728 = vsub.f32 %v2907, %v3152
      %v3729 = vsub.f32 %v2767, %v3153
      %v3730 = vsub.f32 %v2910, %v3153
      %v3731 = vsub.f32 %v2770, %v3154
      %v3732 = vsub.f32 %v2913, %v3154
      %v3733 = vsub.f32 %v2773, %v3155
      %v3734 = vsub.f32 %v2916, %v3155
      %v3735 = vsub.f32 %v2776, %v3156
      %v3736 = vsub.f32 %v2919, %v3156
      %v3737 = vsub.f32 %v2779, %v3157
      %v3738 = vsub.f32 %v2922, %v3157
      %v3739 = vsub.f32 %v2782, %v3158
      %v3740 = vsub.f32 %v2925, %v3158
      %v3741 = vsub.f32 %v2785, %v3159
      %v3742 = vsub.f32 %v2928, %v3159
      %v3743 = vsub.f32 %v2788, %v3160
      %v3744 = vsub.f32 %v2931, %v3160
      %v3745 = vsub.f32 %v2791, %v3161
      %v3746 = vsub.f32 %v2934, %v3161
      %v3747 = vsub.f32 %v2794, %v3162
      %v3748 = vsub.f32 %v2937, %v3162
      %v3749 = vsub.f32 %v2797, %v3163
      %v3750 = vsub.f32 %v2940, %v3163
      %v3751 = vsub.f32 %v2800, %v3164
      %v3752 = vsub.f32 %v2943, %v3164
      %v3753 = vsub.f32 %v2803, %v3165
      %v3754 = vsub.f32 %v2946, %v3165
      %v3755 = vsub.f32 %v2806, %v3166
      %v3756 = vsub.f32 %v2949, %v3166
      %v3757 = vsub.f32 %v2809, %v3167
      %v3758 = vsub.f32 %v2952, %v3167
      %v3759 = vsub.f32 %v2812, %v3168
      %v3760 = vsub.f32 %v2955, %v3168
      %v3761 = vsub.f32 %v2815, %v3169
      %v3762 = vsub.f32 %v2958, %v3169
      %v3763 = vadd.f32 %v3548, 1e-05
      %v3764 = vadd.f32 %v3549, 1e-05
      %v3765 = vadd.f32 %v3550, 1e-05
      %v3766 = vadd.f32 %v3551, 1e-05
      %v3767 = vadd.f32 %v3552, 1e-05
      %v3768 = vadd.f32 %v3553, 1e-05
      %v3769 = vadd.f32 %v3554, 1e-05
      %v3770 = vadd.f32 %v3555, 1e-05
      %v3771 = vadd.f32 %v3556, 1e-05
      %v3772 = vadd.f32 %v3557, 1e-05
      %v3773 = vadd.f32 %v3558, 1e-05
      %v3774 = vadd.f32 %v3559, 1e-05
      %v3775 = vadd.f32 %v3560, 1e-05
      %v3776 = vadd.f32 %v3561, 1e-05
      %v3777 = vadd.f32 %v3562, 1e-05
      %v3778 = vadd.f32 %v3563, 1e-05
      %v3779 = vadd.f32 %v3564, 1e-05
      %v3780 = vadd.f32 %v3565, 1e-05
      %v3781 = vadd.f32 %v3566, 1e-05
      %v3782 = vadd.f32 %v3567, 1e-05
      %v3783 = vadd.f32 %v3568, 1e-05
      %v3784 = vadd.f32 %v3569, 1e-05
      %v3785 = vadd.f32 %v3570, 1e-05
      %v3786 = vadd.f32 %v3571, 1e-05
      %v3787 = vadd.f32 %v3572, 1e-05
      %v3788 = vadd.f32 %v3573, 1e-05
      %v3789 = vadd.f32 %v3574, 1e-05
      %v3790 = vadd.f32 %v3575, 1e-05
      %v3791 = vadd.f32 %v3576, 1e-05
      %v3792 = vadd.f32 %v3577, 1e-05
      %v3793 = vadd.f32 %v3578, 1e-05
      %v3794 = vadd.f32 %v3579, 1e-05
      %v3795 = vadd.f32 %v3580, 1e-05
      %v3796 = vadd.f32 %v3581, 1e-05
      %v3797 = vadd.f32 %v3582, 1e-05
      %v3798 = vadd.f32 %v3583, 1e-05
      %v3799 = vadd.f32 %v3584, 1e-05
      %v3800 = vadd.f32 %v3585, 1e-05
      %v3801 = vadd.f32 %v3586, 1e-05
      %v3802 = vadd.f32 %v3587, 1e-05
      %v3803 = vadd.f32 %v3588, 1e-05
      %v3804 = vadd.f32 %v3589, 1e-05
      %v3805 = vrsqrt.pop %v3763
      %v3806 = vmul.f32 %v3805, %v3763
      %v3807 = vmul.f32 %v3806, %v3805
      %v3808 = vmul.f32 0.5, %v3807
      %v3809 = vsub.f32 1.5, %v3808
      %v3810 = vmul.f32 %v3805, %v3809
      %vm3811 = vweird.f32 %v3763
      %vm3812 = vweird.f32 %v3805
      %vm3813 = vmor %vm3811, %vm3812
      %v3814 = vsel %vm3813, %v3805, %v3810
      %v3815 = vrsqrt.pop %v3764
      %v3816 = vmul.f32 %v3815, %v3764
      %v3817 = vmul.f32 %v3816, %v3815
      %v3818 = vmul.f32 0.5, %v3817
      %v3819 = vsub.f32 1.5, %v3818
      %v3820 = vmul.f32 %v3815, %v3819
      %vm3821 = vweird.f32 %v3764
      %vm3822 = vweird.f32 %v3815
      %vm3823 = vmor %vm3821, %vm3822
      %v3824 = vsel %vm3823, %v3815, %v3820
      %v3825 = vrsqrt.pop %v3765
      %v3826 = vmul.f32 %v3825, %v3765
      %v3827 = vmul.f32 %v3826, %v3825
      %v3828 = vmul.f32 0.5, %v3827
      %v3829 = vsub.f32 1.5, %v3828
      %v3830 = vmul.f32 %v3825, %v3829
      %vm3831 = vweird.f32 %v3765
      %vm3832 = vweird.f32 %v3825
      %vm3833 = vmor %vm3831, %vm3832
      %v3834 = vsel %vm3833, %v3825, %v3830
      %v3835 = vrsqrt.pop %v3766
      %v3836 = vmul.f32 %v3835, %v3766
      %v3837 = vmul.f32 %v3836, %v3835
      %v3838 = vmul.f32 0.5, %v3837
      %v3839 = vsub.f32 1.5, %v3838
      %v3840 = vmul.f32 %v3835, %v3839
      %vm3841 = vweird.f32 %v3766
      %vm3842 = vweird.f32 %v3835
      %vm3843 = vmor %vm3841, %vm3842
      %v3844 = vsel %vm3843, %v3835, %v3840
      %v3845 = vrsqrt.pop %v3767
      %v3846 = vmul.f32 %v3845, %v3767
      %v3847 = vmul.f32 %v3846, %v3845
      %v3848 = vmul.f32 0.5, %v3847
      %v3849 = vsub.f32 1.5, %v3848
      %v3850 = vmul.f32 %v3845, %v3849
      %vm3851 = vweird.f32 %v3767
      %vm3852 = vweird.f32 %v3845
      %vm3853 = vmor %vm3851, %vm3852
      %v3854 = vsel %vm3853, %v3845, %v3850
      %v3855 = vrsqrt.pop %v3768
      %v3856 = vmul.f32 %v3855, %v3768
      %v3857 = vmul.f32 %v3856, %v3855
      %v3858 = vmul.f32 0.5, %v3857
      %v3859 = vsub.f32 1.5, %v3858
      %v3860 = vmul.f32 %v3855, %v3859
      %vm3861 = vweird.f32 %v3768
      %vm3862 = vweird.f32 %v3855
      %vm3863 = vmor %vm3861, %vm3862
      %v3864 = vsel %vm3863, %v3855, %v3860
      %v3865 = vrsqrt.pop %v3769
      %v3866 = vmul.f32 %v3865, %v3769
      %v3867 = vmul.f32 %v3866, %v3865
      %v3868 = vmul.f32 0.5, %v3867
      %v3869 = vsub.f32 1.5, %v3868
      %v3870 = vmul.f32 %v3865, %v3869
      %vm3871 = vweird.f32 %v3769
      %vm3872 = vweird.f32 %v3865
      %vm3873 = vmor %vm3871, %vm3872
      %v3874 = vsel %vm3873, %v3865, %v3870
      %v3875 = vrsqrt.pop %v3770
      %v3876 = vmul.f32 %v3875, %v3770
      %v3877 = vmul.f32 %v3876, %v3875
      %v3878 = vmul.f32 0.5, %v3877
      %v3879 = vsub.f32 1.5, %v3878
      %v3880 = vmul.f32 %v3875, %v3879
      %vm3881 = vweird.f32 %v3770
      %vm3882 = vweird.f32 %v3875
      %vm3883 = vmor %vm3881, %vm3882
      %v3884 = vsel %vm3883, %v3875, %v3880
      %v3885 = vrsqrt.pop %v3771
      %v3886 = vmul.f32 %v3885, %v3771
      %v3887 = vmul.f32 %v3886, %v3885
      %v3888 = vmul.f32 0.5, %v3887
      %v3889 = vsub.f32 1.5, %v3888
      %v3890 = vmul.f32 %v3885, %v3889
      %vm3891 = vweird.f32 %v3771
      %vm3892 = vweird.f32 %v3885
      %vm3893 = vmor %vm3891, %vm3892
      %v3894 = vsel %vm3893, %v3885, %v3890
      %v3895 = vrsqrt.pop %v3772
      %v3896 = vmul.f32 %v3895, %v3772
      %v3897 = vmul.f32 %v3896, %v3895
      %v3898 = vmul.f32 0.5, %v3897
      %v3899 = vsub.f32 1.5, %v3898
      %v3900 = vmul.f32 %v3895, %v3899
      %vm3901 = vweird.f32 %v3772
      %vm3902 = vweird.f32 %v3895
      %vm3903 = vmor %vm3901, %vm3902
      %v3904 = vsel %vm3903, %v3895, %v3900
      %v3905 = vrsqrt.pop %v3773
      %v3906 = vmul.f32 %v3905, %v3773
      %v3907 = vmul.f32 %v3906, %v3905
      %v3908 = vmul.f32 0.5, %v3907
      %v3909 = vsub.f32 1.5, %v3908
      %v3910 = vmul.f32 %v3905, %v3909
      %vm3911 = vweird.f32 %v3773
      %vm3912 = vweird.f32 %v3905
      %vm3913 = vmor %vm3911, %vm3912
      %v3914 = vsel %vm3913, %v3905, %v3910
      %v3915 = vrsqrt.pop %v3774
      %v3916 = vmul.f32 %v3915, %v3774
      %v3917 = vmul.f32 %v3916, %v3915
      %v3918 = vmul.f32 0.5, %v3917
      %v3919 = vsub.f32 1.5, %v3918
      %v3920 = vmul.f32 %v3915, %v3919
      %vm3921 = vweird.f32 %v3774
      %vm3922 = vweird.f32 %v3915
      %vm3923 = vmor %vm3921, %vm3922
      %v3924 = vsel %vm3923, %v3915, %v3920
      %v3925 = vrsqrt.pop %v3775
      %v3926 = vmul.f32 %v3925, %v3775
      %v3927 = vmul.f32 %v3926, %v3925
      %v3928 = vmul.f32 0.5, %v3927
      %v3929 = vsub.f32 1.5, %v3928
      %v3930 = vmul.f32 %v3925, %v3929
      %vm3931 = vweird.f32 %v3775
      %vm3932 = vweird.f32 %v3925
      %vm3933 = vmor %vm3931, %vm3932
      %v3934 = vsel %vm3933, %v3925, %v3930
      %v3935 = vrsqrt.pop %v3776
      %v3936 = vmul.f32 %v3935, %v3776
      %v3937 = vmul.f32 %v3936, %v3935
      %v3938 = vmul.f32 0.5, %v3937
      %v3939 = vsub.f32 1.5, %v3938
      %v3940 = vmul.f32 %v3935, %v3939
      %vm3941 = vweird.f32 %v3776
      %vm3942 = vweird.f32 %v3935
      %vm3943 = vmor %vm3941, %vm3942
      %v3944 = vsel %vm3943, %v3935, %v3940
      %v3945 = vrsqrt.pop %v3777
      %v3946 = vmul.f32 %v3945, %v3777
      %v3947 = vmul.f32 %v3946, %v3945
      %v3948 = vmul.f32 0.5, %v3947
      %v3949 = vsub.f32 1.5, %v3948
      %v3950 = vmul.f32 %v3945, %v3949
      %vm3951 = vweird.f32 %v3777
      %vm3952 = vweird.f32 %v3945
      %vm3953 = vmor %vm3951, %vm3952
      %v3954 = vsel %vm3953, %v3945, %v3950
      %v3955 = vrsqrt.pop %v3778
      %v3956 = vmul.f32 %v3955, %v3778
      %v3957 = vmul.f32 %v3956, %v3955
      %v3958 = vmul.f32 0.5, %v3957
      %v3959 = vsub.f32 1.5, %v3958
      %v3960 = vmul.f32 %v3955, %v3959
      %vm3961 = vweird.f32 %v3778
      %vm3962 = vweird.f32 %v3955
      %vm3963 = vmor %vm3961, %vm3962
      %v3964 = vsel %vm3963, %v3955, %v3960
      %v3965 = vrsqrt.pop %v3779
      %v3966 = vmul.f32 %v3965, %v3779
      %v3967 = vmul.f32 %v3966, %v3965
      %v3968 = vmul.f32 0.5, %v3967
      %v3969 = vsub.f32 1.5, %v3968
      %v3970 = vmul.f32 %v3965, %v3969
      %vm3971 = vweird.f32 %v3779
      %vm3972 = vweird.f32 %v3965
      %vm3973 = vmor %vm3971, %vm3972
      %v3974 = vsel %vm3973, %v3965, %v3970
      %v3975 = vrsqrt.pop %v3780
      %v3976 = vmul.f32 %v3975, %v3780
      %v3977 = vmul.f32 %v3976, %v3975
      %v3978 = vmul.f32 0.5, %v3977
      %v3979 = vsub.f32 1.5, %v3978
      %v3980 = vmul.f32 %v3975, %v3979
      %vm3981 = vweird.f32 %v3780
      %vm3982 = vweird.f32 %v3975
      %vm3983 = vmor %vm3981, %vm3982
      %v3984 = vsel %vm3983, %v3975, %v3980
      %v3985 = vrsqrt.pop %v3781
      %v3986 = vmul.f32 %v3985, %v3781
      %v3987 = vmul.f32 %v3986, %v3985
      %v3988 = vmul.f32 0.5, %v3987
      %v3989 = vsub.f32 1.5, %v3988
      %v3990 = vmul.f32 %v3985, %v3989
      %vm3991 = vweird.f32 %v3781
      %vm3992 = vweird.f32 %v3985
      %vm3993 = vmor %vm3991, %vm3992
      %v3994 = vsel %vm3993, %v3985, %v3990
      %v3995 = vrsqrt.pop %v3782
      %v3996 = vmul.f32 %v3995, %v3782
      %v3997 = vmul.f32 %v3996, %v3995
      %v3998 = vmul.f32 0.5, %v3997
      %v3999 = vsub.f32 1.5, %v3998
      %v4000 = vmul.f32 %v3995, %v3999
      %vm4001 = vweird.f32 %v3782
      %vm4002 = vweird.f32 %v3995
      %vm4003 = vmor %vm4001, %vm4002
      %v4004 = vsel %vm4003, %v3995, %v4000
      %v4005 = vrsqrt.pop %v3783
      %v4006 = vmul.f32 %v4005, %v3783
      %v4007 = vmul.f32 %v4006, %v4005
      %v4008 = vmul.f32 0.5, %v4007
      %v4009 = vsub.f32 1.5, %v4008
      %v4010 = vmul.f32 %v4005, %v4009
      %vm4011 = vweird.f32 %v3783
      %vm4012 = vweird.f32 %v4005
      %vm4013 = vmor %vm4011, %vm4012
      %v4014 = vsel %vm4013, %v4005, %v4010
      %v4015 = vrsqrt.pop %v3784
      %v4016 = vmul.f32 %v4015, %v3784
      %v4017 = vmul.f32 %v4016, %v4015
      %v4018 = vmul.f32 0.5, %v4017
      %v4019 = vsub.f32 1.5, %v4018
      %v4020 = vmul.f32 %v4015, %v4019
      %vm4021 = vweird.f32 %v3784
      %vm4022 = vweird.f32 %v4015
      %vm4023 = vmor %vm4021, %vm4022
      %v4024 = vsel %vm4023, %v4015, %v4020
      %v4025 = vrsqrt.pop %v3785
      %v4026 = vmul.f32 %v4025, %v3785
      %v4027 = vmul.f32 %v4026, %v4025
      %v4028 = vmul.f32 0.5, %v4027
      %v4029 = vsub.f32 1.5, %v4028
      %v4030 = vmul.f32 %v4025, %v4029
      %vm4031 = vweird.f32 %v3785
      %vm4032 = vweird.f32 %v4025
      %vm4033 = vmor %vm4031, %vm4032
      %v4034 = vsel %vm4033, %v4025, %v4030
      %v4035 = vrsqrt.pop %v3786
      %v4036 = vmul.f32 %v4035, %v3786
      %v4037 = vmul.f32 %v4036, %v4035
      %v4038 = vmul.f32 0.5, %v4037
      %v4039 = vsub.f32 1.5, %v4038
      %v4040 = vmul.f32 %v4035, %v4039
      %vm4041 = vweird.f32 %v3786
      %vm4042 = vweird.f32 %v4035
      %vm4043 = vmor %vm4041, %vm4042
      %v4044 = vsel %vm4043, %v4035, %v4040
      %v4045 = vrsqrt.pop %v3787
      %v4046 = vmul.f32 %v4045, %v3787
      %v4047 = vmul.f32 %v4046, %v4045
      %v4048 = vmul.f32 0.5, %v4047
      %v4049 = vsub.f32 1.5, %v4048
      %v4050 = vmul.f32 %v4045, %v4049
      %vm4051 = vweird.f32 %v3787
      %vm4052 = vweird.f32 %v4045
      %vm4053 = vmor %vm4051, %vm4052
      %v4054 = vsel %vm4053, %v4045, %v4050
      %v4055 = vrsqrt.pop %v3788
      %v4056 = vmul.f32 %v4055, %v3788
      %v4057 = vmul.f32 %v4056, %v4055
      %v4058 = vmul.f32 0.5, %v4057
      %v4059 = vsub.f32 1.5, %v4058
      %v4060 = vmul.f32 %v4055, %v4059
      %vm4061 = vweird.f32 %v3788
      %vm4062 = vweird.f32 %v4055
      %vm4063 = vmor %vm4061, %vm4062
      %v4064 = vsel %vm4063, %v4055, %v4060
      %v4065 = vrsqrt.pop %v3789
      %v4066 = vmul.f32 %v4065, %v3789
      %v4067 = vmul.f32 %v4066, %v4065
      %v4068 = vmul.f32 0.5, %v4067
      %v4069 = vsub.f32 1.5, %v4068
      %v4070 = vmul.f32 %v4065, %v4069
      %vm4071 = vweird.f32 %v3789
      %vm4072 = vweird.f32 %v4065
      %vm4073 = vmor %vm4071, %vm4072
      %v4074 = vsel %vm4073, %v4065, %v4070
      %v4075 = vrsqrt.pop %v3790
      %v4076 = vmul.f32 %v4075, %v3790
      %v4077 = vmul.f32 %v4076, %v4075
      %v4078 = vmul.f32 0.5, %v4077
      %v4079 = vsub.f32 1.5, %v4078
      %v4080 = vmul.f32 %v4075, %v4079
      %vm4081 = vweird.f32 %v3790
      %vm4082 = vweird.f32 %v4075
      %vm4083 = vmor %vm4081, %vm4082
      %v4084 = vsel %vm4083, %v4075, %v4080
      %v4085 = vrsqrt.pop %v3791
      %v4086 = vmul.f32 %v4085, %v3791
      %v4087 = vmul.f32 %v4086, %v4085
      %v4088 = vmul.f32 0.5, %v4087
      %v4089 = vsub.f32 1.5, %v4088
      %v4090 = vmul.f32 %v4085, %v4089
      %vm4091 = vweird.f32 %v3791
      %vm4092 = vweird.f32 %v4085
      %vm4093 = vmor %vm4091, %vm4092
      %v4094 = vsel %vm4093, %v4085, %v4090
      %v4095 = vrsqrt.pop %v3792
      %v4096 = vmul.f32 %v4095, %v3792
      %v4097 = vmul.f32 %v4096, %v4095
      %v4098 = vmul.f32 0.5, %v4097
      %v4099 = vsub.f32 1.5, %v4098
      %v4100 = vmul.f32 %v4095, %v4099
      %vm4101 = vweird.f32 %v3792
      %vm4102 = vweird.f32 %v4095
      %vm4103 = vmor %vm4101, %vm4102
      %v4104 = vsel %vm4103, %v4095, %v4100
      %v4105 = vrsqrt.pop %v3793
      %v4106 = vmul.f32 %v4105, %v3793
      %v4107 = vmul.f32 %v4106, %v4105
      %v4108 = vmul.f32 0.5, %v4107
      %v4109 = vsub.f32 1.5, %v4108
      %v4110 = vmul.f32 %v4105, %v4109
      %vm4111 = vweird.f32 %v3793
      %vm4112 = vweird.f32 %v4105
      %vm4113 = vmor %vm4111, %vm4112
      %v4114 = vsel %vm4113, %v4105, %v4110
      %v4115 = vrsqrt.pop %v3794
      %v4116 = vmul.f32 %v4115, %v3794
      %v4117 = vmul.f32 %v4116, %v4115
      %v4118 = vmul.f32 0.5, %v4117
      %v4119 = vsub.f32 1.5, %v4118
      %v4120 = vmul.f32 %v4115, %v4119
      %vm4121 = vweird.f32 %v3794
      %vm4122 = vweird.f32 %v4115
      %vm4123 = vmor %vm4121, %vm4122
      %v4124 = vsel %vm4123, %v4115, %v4120
      %v4125 = vrsqrt.pop %v3795
      %v4126 = vmul.f32 %v4125, %v3795
      %v4127 = vmul.f32 %v4126, %v4125
      %v4128 = vmul.f32 0.5, %v4127
      %v4129 = vsub.f32 1.5, %v4128
      %v4130 = vmul.f32 %v4125, %v4129
      %vm4131 = vweird.f32 %v3795
      %vm4132 = vweird.f32 %v4125
      %vm4133 = vmor %vm4131, %vm4132
      %v4134 = vsel %vm4133, %v4125, %v4130
      %v4135 = vrsqrt.pop %v3796
      %v4136 = vmul.f32 %v4135, %v3796
      %v4137 = vmul.f32 %v4136, %v4135
      %v4138 = vmul.f32 0.5, %v4137
      %v4139 = vsub.f32 1.5, %v4138
      %v4140 = vmul.f32 %v4135, %v4139
      %vm4141 = vweird.f32 %v3796
      %vm4142 = vweird.f32 %v4135
      %vm4143 = vmor %vm4141, %vm4142
      %v4144 = vsel %vm4143, %v4135, %v4140
      %v4145 = vrsqrt.pop %v3797
      %v4146 = vmul.f32 %v4145, %v3797
      %v4147 = vmul.f32 %v4146, %v4145
      %v4148 = vmul.f32 0.5, %v4147
      %v4149 = vsub.f32 1.5, %v4148
      %v4150 = vmul.f32 %v4145, %v4149
      %vm4151 = vweird.f32 %v3797
      %vm4152 = vweird.f32 %v4145
      %vm4153 = vmor %vm4151, %vm4152
      %v4154 = vsel %vm4153, %v4145, %v4150
      %v4155 = vrsqrt.pop %v3798
      %v4156 = vmul.f32 %v4155, %v3798
      %v4157 = vmul.f32 %v4156, %v4155
      %v4158 = vmul.f32 0.5, %v4157
      %v4159 = vsub.f32 1.5, %v4158
      %v4160 = vmul.f32 %v4155, %v4159
      %vm4161 = vweird.f32 %v3798
      %vm4162 = vweird.f32 %v4155
      %vm4163 = vmor %vm4161, %vm4162
      %v4164 = vsel %vm4163, %v4155, %v4160
      %v4165 = vrsqrt.pop %v3799
      %v4166 = vmul.f32 %v4165, %v3799
      %v4167 = vmul.f32 %v4166, %v4165
      %v4168 = vmul.f32 0.5, %v4167
      %v4169 = vsub.f32 1.5, %v4168
      %v4170 = vmul.f32 %v4165, %v4169
      %vm4171 = vweird.f32 %v3799
      %vm4172 = vweird.f32 %v4165
      %vm4173 = vmor %vm4171, %vm4172
      %v4174 = vsel %vm4173, %v4165, %v4170
      %v4175 = vrsqrt.pop %v3800
      %v4176 = vmul.f32 %v4175, %v3800
      %v4177 = vmul.f32 %v4176, %v4175
      %v4178 = vmul.f32 0.5, %v4177
      %v4179 = vsub.f32 1.5, %v4178
      %v4180 = vmul.f32 %v4175, %v4179
      %vm4181 = vweird.f32 %v3800
      %vm4182 = vweird.f32 %v4175
      %vm4183 = vmor %vm4181, %vm4182
      %v4184 = vsel %vm4183, %v4175, %v4180
      %v4185 = vrsqrt.pop %v3801
      %v4186 = vmul.f32 %v4185, %v3801
      %v4187 = vmul.f32 %v4186, %v4185
      %v4188 = vmul.f32 0.5, %v4187
      %v4189 = vsub.f32 1.5, %v4188
      %v4190 = vmul.f32 %v4185, %v4189
      %vm4191 = vweird.f32 %v3801
      %vm4192 = vweird.f32 %v4185
      %vm4193 = vmor %vm4191, %vm4192
      %v4194 = vsel %vm4193, %v4185, %v4190
      %v4195 = vrsqrt.pop %v3802
      %v4196 = vmul.f32 %v4195, %v3802
      %v4197 = vmul.f32 %v4196, %v4195
      %v4198 = vmul.f32 0.5, %v4197
      %v4199 = vsub.f32 1.5, %v4198
      %v4200 = vmul.f32 %v4195, %v4199
      %vm4201 = vweird.f32 %v3802
      %vm4202 = vweird.f32 %v4195
      %vm4203 = vmor %vm4201, %vm4202
      %v4204 = vsel %vm4203, %v4195, %v4200
      %v4205 = vrsqrt.pop %v3803
      %v4206 = vmul.f32 %v4205, %v3803
      %v4207 = vmul.f32 %v4206, %v4205
      %v4208 = vmul.f32 0.5, %v4207
      %v4209 = vsub.f32 1.5, %v4208
      %v4210 = vmul.f32 %v4205, %v4209
      %vm4211 = vweird.f32 %v3803
      %vm4212 = vweird.f32 %v4205
      %vm4213 = vmor %vm4211, %vm4212
      %v4214 = vsel %vm4213, %v4205, %v4210
      %v4215 = vrsqrt.pop %v3804
      %v4216 = vmul.f32 %v4215, %v3804
      %v4217 = vmul.f32 %v4216, %v4215
      %v4218 = vmul.f32 0.5, %v4217
      %v4219 = vsub.f32 1.5, %v4218
      %v4220 = vmul.f32 %v4215, %v4219
      %vm4221 = vweird.f32 %v3804
      %vm4222 = vweird.f32 %v4215
      %vm4223 = vmor %vm4221, %vm4222
      %v4224 = vsel %vm4223, %v4215, %v4220
      %v4225 = vmul.f32 %v3679, %v3814
      %v4226 = vmul.f32 %v3680, %v3814
      %v4227 = vmul.f32 %v3681, %v3824
      %v4228 = vmul.f32 %v3682, %v3824
      %v4229 = vmul.f32 %v3683, %v3834
      %v4230 = vmul.f32 %v3684, %v3834
      %v4231 = vmul.f32 %v3685, %v3844
      %v4232 = vmul.f32 %v3686, %v3844
      %v4233 = vmul.f32 %v3687, %v3854
      %v4234 = vmul.f32 %v3688, %v3854
      %v4235 = vmul.f32 %v3689, %v3864
      %v4236 = vmul.f32 %v3690, %v3864
      %v4237 = vmul.f32 %v3691, %v3874
      %v4238 = vmul.f32 %v3692, %v3874
      %v4239 = vmul.f32 %v3693, %v3884
      %v4240 = vmul.f32 %v3694, %v3884
      %v4241 = vmul.f32 %v3695, %v3894
      %v4242 = vmul.f32 %v3696, %v3894
      %v4243 = vmul.f32 %v3697, %v3904
      %v4244 = vmul.f32 %v3698, %v3904
      %v4245 = vmul.f32 %v3699, %v3914
      %v4246 = vmul.f32 %v3700, %v3914
      %v4247 = vmul.f32 %v3701, %v3924
      %v4248 = vmul.f32 %v3702, %v3924
      %v4249 = vmul.f32 %v3703, %v3934
      %v4250 = vmul.f32 %v3704, %v3934
      %v4251 = vmul.f32 %v3705, %v3944
      %v4252 = vmul.f32 %v3706, %v3944
      %v4253 = vmul.f32 %v3707, %v3954
      %v4254 = vmul.f32 %v3708, %v3954
      %v4255 = vmul.f32 %v3709, %v3964
      %v4256 = vmul.f32 %v3710, %v3964
      %v4257 = vmul.f32 %v3711, %v3974
      %v4258 = vmul.f32 %v3712, %v3974
      %v4259 = vmul.f32 %v3713, %v3984
      %v4260 = vmul.f32 %v3714, %v3984
      %v4261 = vmul.f32 %v3715, %v3994
      %v4262 = vmul.f32 %v3716, %v3994
      %v4263 = vmul.f32 %v3717, %v4004
      %v4264 = vmul.f32 %v3718, %v4004
      %v4265 = vmul.f32 %v3719, %v4014
      %v4266 = vmul.f32 %v3720, %v4014
      %v4267 = vmul.f32 %v3721, %v4024
      %v4268 = vmul.f32 %v3722, %v4024
      %v4269 = vmul.f32 %v3723, %v4034
      %v4270 = vmul.f32 %v3724, %v4034
      %v4271 = vmul.f32 %v3725, %v4044
      %v4272 = vmul.f32 %v3726, %v4044
      %v4273 = vmul.f32 %v3727, %v4054
      %v4274 = vmul.f32 %v3728, %v4054
      %v4275 = vmul.f32 %v3729, %v4064
      %v4276 = vmul.f32 %v3730, %v4064
      %v4277 = vmul.f32 %v3731, %v4074
      %v4278 = vmul.f32 %v3732, %v4074
      %v4279 = vmul.f32 %v3733, %v4084
      %v4280 = vmul.f32 %v3734, %v4084
      %v4281 = vmul.f32 %v3735, %v4094
      %v4282 = vmul.f32 %v3736, %v4094
      %v4283 = vmul.f32 %v3737, %v4104
      %v4284 = vmul.f32 %v3738, %v4104
      %v4285 = vmul.f32 %v3739, %v4114
      %v4286 = vmul.f32 %v3740, %v4114
      %v4287 = vmul.f32 %v3741, %v4124
      %v4288 = vmul.f32 %v3742, %v4124
      %v4289 = vmul.f32 %v3743, %v4134
      %v4290 = vmul.f32 %v3744, %v4134
      %v4291 = vmul.f32 %v3745, %v4144
      %v4292 = vmul.f32 %v3746, %v4144
      %v4293 = vmul.f32 %v3747, %v4154
      %v4294 = vmul.f32 %v3748, %v4154
      %v4295 = vmul.f32 %v3749, %v4164
      %v4296 = vmul.f32 %v3750, %v4164
      %v4297 = vmul.f32 %v3751, %v4174
      %v4298 = vmul.f32 %v3752, %v4174
      %v4299 = vmul.f32 %v3753, %v4184
      %v4300 = vmul.f32 %v3754, %v4184
      %v4301 = vmul.f32 %v3755, %v4194
      %v4302 = vmul.f32 %v3756, %v4194
      %v4303 = vmul.f32 %v3757, %v4204
      %v4304 = vmul.f32 %v3758, %v4204
      %v4305 = vmul.f32 %v3759, %v4214
      %v4306 = vmul.f32 %v3760, %v4214
      %v4307 = vmul.f32 %v3761, %v4224
      %v4308 = vmul.f32 %v3762, %v4224
      %4310 = vset.pattern.permute.xlu0 0
      %4311 = vperm.xlu0 %4310, %v3593
      %v4312 = vpop.permute.xlu0 %4311
      %4315 = vset.pattern.permute.xlu0 0
      %4316 = vperm.xlu0 %4315, %v3594
      %v4317 = vpop.permute.xlu0 %4316
      %4320 = vset.pattern.permute.xlu0 0
      %4321 = vperm.xlu0 %4320, %v3595
      %v4322 = vpop.permute.xlu0 %4321
      %4325 = vset.pattern.permute.xlu0 0
      %4326 = vperm.xlu0 %4325, %v3596
      %v4327 = vpop.permute.xlu0 %4326
      %4330 = vset.pattern.permute.xlu0 0
      %4331 = vperm.xlu0 %4330, %v3597
      %v4332 = vpop.permute.xlu0 %4331
      %4335 = vset.pattern.permute.xlu0 0
      %4336 = vperm.xlu0 %4335, %v3598
      %v4337 = vpop.permute.xlu0 %4336
      %4340 = vset.pattern.permute.xlu0 0
      %4341 = vperm.xlu0 %4340, %v3599
      %v4342 = vpop.permute.xlu0 %4341
      %4345 = vset.pattern.permute.xlu0 0
      %4346 = vperm.xlu0 %4345, %v3600
      %v4347 = vpop.permute.xlu0 %4346
      %4350 = vset.pattern.permute.xlu0 0
      %4351 = vperm.xlu0 %4350, %v3601
      %v4352 = vpop.permute.xlu0 %4351
      %4355 = vset.pattern.permute.xlu0 0
      %4356 = vperm.xlu0 %4355, %v3602
      %v4357 = vpop.permute.xlu0 %4356
      %4360 = vset.pattern.permute.xlu0 0
      %4361 = vperm.xlu0 %4360, %v3603
      %v4362 = vpop.permute.xlu0 %4361
      %4365 = vset.pattern.permute.xlu0 0
      %4366 = vperm.xlu0 %4365, %v3604
      %v4367 = vpop.permute.xlu0 %4366
      %4370 = vset.pattern.permute.xlu0 0
      %4371 = vperm.xlu0 %4370, %v3605
      %v4372 = vpop.permute.xlu0 %4371
      %4375 = vset.pattern.permute.xlu0 0
      %4376 = vperm.xlu0 %4375, %v3606
      %v4377 = vpop.permute.xlu0 %4376
      %4380 = vset.pattern.permute.xlu0 0
      %4381 = vperm.xlu0 %4380, %v3607
      %v4382 = vpop.permute.xlu0 %4381
      %4385 = vset.pattern.permute.xlu0 0
      %4386 = vperm.xlu0 %4385, %v3608
      %v4387 = vpop.permute.xlu0 %4386
      %4390 = vset.pattern.permute.xlu0 0
      %4391 = vperm.xlu0 %4390, %v3609
      %v4392 = vpop.permute.xlu0 %4391
      %4395 = vset.pattern.permute.xlu0 0
      %4396 = vperm.xlu0 %4395, %v3610
      %v4397 = vpop.permute.xlu0 %4396
      %4400 = vset.pattern.permute.xlu0 0
      %4401 = vperm.xlu0 %4400, %v3611
      %v4402 = vpop.permute.xlu0 %4401
      %4405 = vset.pattern.permute.xlu0 0
      %4406 = vperm.xlu0 %4405, %v3612
      %v4407 = vpop.permute.xlu0 %4406
      %4410 = vset.pattern.permute.xlu0 0
      %4411 = vperm.xlu0 %4410, %v3613
      %v4412 = vpop.permute.xlu0 %4411
      %4415 = vset.pattern.permute.xlu0 0
      %4416 = vperm.xlu0 %4415, %v3614
      %v4417 = vpop.permute.xlu0 %4416
      %4420 = vset.pattern.permute.xlu0 0
      %4421 = vperm.xlu0 %4420, %v3615
      %v4422 = vpop.permute.xlu0 %4421
      %4425 = vset.pattern.permute.xlu0 0
      %4426 = vperm.xlu0 %4425, %v3616
      %v4427 = vpop.permute.xlu0 %4426
      %4430 = vset.pattern.permute.xlu0 0
      %4431 = vperm.xlu0 %4430, %v3617
      %v4432 = vpop.permute.xlu0 %4431
      %4435 = vset.pattern.permute.xlu0 0
      %4436 = vperm.xlu0 %4435, %v3618
      %v4437 = vpop.permute.xlu0 %4436
      %4440 = vset.pattern.permute.xlu0 0
      %4441 = vperm.xlu0 %4440, %v3619
      %v4442 = vpop.permute.xlu0 %4441
      %4445 = vset.pattern.permute.xlu0 0
      %4446 = vperm.xlu0 %4445, %v3620
      %v4447 = vpop.permute.xlu0 %4446
      %4450 = vset.pattern.permute.xlu0 0
      %4451 = vperm.xlu0 %4450, %v3621
      %v4452 = vpop.permute.xlu0 %4451
      %4455 = vset.pattern.permute.xlu0 0
      %4456 = vperm.xlu0 %4455, %v3622
      %v4457 = vpop.permute.xlu0 %4456
      %4460 = vset.pattern.permute.xlu0 0
      %4461 = vperm.xlu0 %4460, %v3623
      %v4462 = vpop.permute.xlu0 %4461
      %4465 = vset.pattern.permute.xlu0 0
      %4466 = vperm.xlu0 %4465, %v3624
      %v4467 = vpop.permute.xlu0 %4466
      %4470 = vset.pattern.permute.xlu0 0
      %4471 = vperm.xlu0 %4470, %v3625
      %v4472 = vpop.permute.xlu0 %4471
      %4475 = vset.pattern.permute.xlu0 0
      %4476 = vperm.xlu0 %4475, %v3626
      %v4477 = vpop.permute.xlu0 %4476
      %4480 = vset.pattern.permute.xlu0 0
      %4481 = vperm.xlu0 %4480, %v3627
      %v4482 = vpop.permute.xlu0 %4481
      %4485 = vset.pattern.permute.xlu0 0
      %4486 = vperm.xlu0 %4485, %v3628
      %v4487 = vpop.permute.xlu0 %4486
      %4490 = vset.pattern.permute.xlu0 0
      %4491 = vperm.xlu0 %4490, %v3629
      %v4492 = vpop.permute.xlu0 %4491
      %4495 = vset.pattern.permute.xlu0 0
      %4496 = vperm.xlu0 %4495, %v3630
      %v4497 = vpop.permute.xlu0 %4496
      %4500 = vset.pattern.permute.xlu0 0
      %4501 = vperm.xlu0 %4500, %v3631
      %v4502 = vpop.permute.xlu0 %4501
      %4505 = vset.pattern.permute.xlu0 0
      %4506 = vperm.xlu0 %4505, %v3632
      %v4507 = vpop.permute.xlu0 %4506
      %4510 = vset.pattern.permute.xlu0 0
      %4511 = vperm.xlu0 %4510, %v3633
      %v4512 = vpop.permute.xlu0 %4511
      %4515 = vset.pattern.permute.xlu0 0
      %4516 = vperm.xlu0 %4515, %v3634
      %v4517 = vpop.permute.xlu0 %4516
      %v4519 = vmul.f32 %v4225, %v4312
      %v4520 = vmul.f32 %v4226, %v4312
      %v4521 = vmul.f32 %v4227, %v4317
      %v4522 = vmul.f32 %v4228, %v4317
      %v4523 = vmul.f32 %v4229, %v4322
      %v4524 = vmul.f32 %v4230, %v4322
      %v4525 = vmul.f32 %v4231, %v4327
      %v4526 = vmul.f32 %v4232, %v4327
      %v4527 = vmul.f32 %v4233, %v4332
      %v4528 = vmul.f32 %v4234, %v4332
      %v4529 = vmul.f32 %v4235, %v4337
      %v4530 = vmul.f32 %v4236, %v4337
      %v4531 = vmul.f32 %v4237, %v4342
      %v4532 = vmul.f32 %v4238, %v4342
      %v4533 = vmul.f32 %v4239, %v4347
      %v4534 = vmul.f32 %v4240, %v4347
      %v4535 = vmul.f32 %v4241, %v4352
      %v4536 = vmul.f32 %v4242, %v4352
      %v4537 = vmul.f32 %v4243, %v4357
      %v4538 = vmul.f32 %v4244, %v4357
      %v4539 = vmul.f32 %v4245, %v4362
      %v4540 = vmul.f32 %v4246, %v4362
      %v4541 = vmul.f32 %v4247, %v4367
      %v4542 = vmul.f32 %v4248, %v4367
      %v4543 = vmul.f32 %v4249, %v4372
      %v4544 = vmul.f32 %v4250, %v4372
      %v4545 = vmul.f32 %v4251, %v4377
      %v4546 = vmul.f32 %v4252, %v4377
      %v4547 = vmul.f32 %v4253, %v4382
      %v4548 = vmul.f32 %v4254, %v4382
      %v4549 = vmul.f32 %v4255, %v4387
      %v4550 = vmul.f32 %v4256, %v4387
      %v4551 = vmul.f32 %v4257, %v4392
      %v4552 = vmul.f32 %v4258, %v4392
      %v4553 = vmul.f32 %v4259, %v4397
      %v4554 = vmul.f32 %v4260, %v4397
      %v4555 = vmul.f32 %v4261, %v4402
      %v4556 = vmul.f32 %v4262, %v4402
      %v4557 = vmul.f32 %v4263, %v4407
      %v4558 = vmul.f32 %v4264, %v4407
      %v4559 = vmul.f32 %v4265, %v4412
      %v4560 = vmul.f32 %v4266, %v4412
      %v4561 = vmul.f32 %v4267, %v4417
      %v4562 = vmul.f32 %v4268, %v4417
      %v4563 = vmul.f32 %v4269, %v4422
      %v4564 = vmul.f32 %v4270, %v4422
      %v4565 = vmul.f32 %v4271, %v4427
      %v4566 = vmul.f32 %v4272, %v4427
      %v4567 = vmul.f32 %v4273, %v4432
      %v4568 = vmul.f32 %v4274, %v4432
      %v4569 = vmul.f32 %v4275, %v4437
      %v4570 = vmul.f32 %v4276, %v4437
      %v4571 = vmul.f32 %v4277, %v4442
      %v4572 = vmul.f32 %v4278, %v4442
      %v4573 = vmul.f32 %v4279, %v4447
      %v4574 = vmul.f32 %v4280, %v4447
      %v4575 = vmul.f32 %v4281, %v4452
      %v4576 = vmul.f32 %v4282, %v4452
      %v4577 = vmul.f32 %v4283, %v4457
      %v4578 = vmul.f32 %v4284, %v4457
      %v4579 = vmul.f32 %v4285, %v4462
      %v4580 = vmul.f32 %v4286, %v4462
      %v4581 = vmul.f32 %v4287, %v4467
      %v4582 = vmul.f32 %v4288, %v4467
      %v4583 = vmul.f32 %v4289, %v4472
      %v4584 = vmul.f32 %v4290, %v4472
      %v4585 = vmul.f32 %v4291, %v4477
      %v4586 = vmul.f32 %v4292, %v4477
      %v4587 = vmul.f32 %v4293, %v4482
      %v4588 = vmul.f32 %v4294, %v4482
      %v4589 = vmul.f32 %v4295, %v4487
      %v4590 = vmul.f32 %v4296, %v4487
      %v4591 = vmul.f32 %v4297, %v4492
      %v4592 = vmul.f32 %v4298, %v4492
      %v4593 = vmul.f32 %v4299, %v4497
      %v4594 = vmul.f32 %v4300, %v4497
      %v4595 = vmul.f32 %v4301, %v4502
      %v4596 = vmul.f32 %v4302, %v4502
      %v4597 = vmul.f32 %v4303, %v4507
      %v4598 = vmul.f32 %v4304, %v4507
      %v4599 = vmul.f32 %v4305, %v4512
      %v4600 = vmul.f32 %v4306, %v4512
      %v4601 = vmul.f32 %v4307, %v4517
      %v4602 = vmul.f32 %v4308, %v4517
      %4604 = vset.pattern.permute.xlu0 0
      %4605 = vperm.xlu0 %4604, %v3637
      %v4606 = vpop.permute.xlu0 %4605
      %4609 = vset.pattern.permute.xlu0 0
      %4610 = vperm.xlu0 %4609, %v3638
      %v4611 = vpop.permute.xlu0 %4610
      %4614 = vset.pattern.permute.xlu0 0
      %4615 = vperm.xlu0 %4614, %v3639
      %v4616 = vpop.permute.xlu0 %4615
      %4619 = vset.pattern.permute.xlu0 0
      %4620 = vperm.xlu0 %4619, %v3640
      %v4621 = vpop.permute.xlu0 %4620
      %4624 = vset.pattern.permute.xlu0 0
      %4625 = vperm.xlu0 %4624, %v3641
      %v4626 = vpop.permute.xlu0 %4625
      %4629 = vset.pattern.permute.xlu0 0
      %4630 = vperm.xlu0 %4629, %v3642
      %v4631 = vpop.permute.xlu0 %4630
      %4634 = vset.pattern.permute.xlu0 0
      %4635 = vperm.xlu0 %4634, %v3643
      %v4636 = vpop.permute.xlu0 %4635
      %4639 = vset.pattern.permute.xlu0 0
      %4640 = vperm.xlu0 %4639, %v3644
      %v4641 = vpop.permute.xlu0 %4640
      %4644 = vset.pattern.permute.xlu0 0
      %4645 = vperm.xlu0 %4644, %v3645
      %v4646 = vpop.permute.xlu0 %4645
      %4649 = vset.pattern.permute.xlu0 0
      %4650 = vperm.xlu0 %4649, %v3646
      %v4651 = vpop.permute.xlu0 %4650
      %4654 = vset.pattern.permute.xlu0 0
      %4655 = vperm.xlu0 %4654, %v3647
      %v4656 = vpop.permute.xlu0 %4655
      %4659 = vset.pattern.permute.xlu0 0
      %4660 = vperm.xlu0 %4659, %v3648
      %v4661 = vpop.permute.xlu0 %4660
      %4664 = vset.pattern.permute.xlu0 0
      %4665 = vperm.xlu0 %4664, %v3649
      %v4666 = vpop.permute.xlu0 %4665
      %4669 = vset.pattern.permute.xlu0 0
      %4670 = vperm.xlu0 %4669, %v3650
      %v4671 = vpop.permute.xlu0 %4670
      %4674 = vset.pattern.permute.xlu0 0
      %4675 = vperm.xlu0 %4674, %v3651
      %v4676 = vpop.permute.xlu0 %4675
      %4679 = vset.pattern.permute.xlu0 0
      %4680 = vperm.xlu0 %4679, %v3652
      %v4681 = vpop.permute.xlu0 %4680
      %4684 = vset.pattern.permute.xlu0 0
      %4685 = vperm.xlu0 %4684, %v3653
      %v4686 = vpop.permute.xlu0 %4685
      %4689 = vset.pattern.permute.xlu0 0
      %4690 = vperm.xlu0 %4689, %v3654
      %v4691 = vpop.permute.xlu0 %4690
      %4694 = vset.pattern.permute.xlu0 0
      %4695 = vperm.xlu0 %4694, %v3655
      %v4696 = vpop.permute.xlu0 %4695
      %4699 = vset.pattern.permute.xlu0 0
      %4700 = vperm.xlu0 %4699, %v3656
      %v4701 = vpop.permute.xlu0 %4700
      %4704 = vset.pattern.permute.xlu0 0
      %4705 = vperm.xlu0 %4704, %v3657
      %v4706 = vpop.permute.xlu0 %4705
      %4709 = vset.pattern.permute.xlu0 0
      %4710 = vperm.xlu0 %4709, %v3658
      %v4711 = vpop.permute.xlu0 %4710
      %4714 = vset.pattern.permute.xlu0 0
      %4715 = vperm.xlu0 %4714, %v3659
      %v4716 = vpop.permute.xlu0 %4715
      %4719 = vset.pattern.permute.xlu0 0
      %4720 = vperm.xlu0 %4719, %v3660
      %v4721 = vpop.permute.xlu0 %4720
      %4724 = vset.pattern.permute.xlu0 0
      %4725 = vperm.xlu0 %4724, %v3661
      %v4726 = vpop.permute.xlu0 %4725
      %4729 = vset.pattern.permute.xlu0 0
      %4730 = vperm.xlu0 %4729, %v3662
      %v4731 = vpop.permute.xlu0 %4730
      %4734 = vset.pattern.permute.xlu0 0
      %4735 = vperm.xlu0 %4734, %v3663
      %v4736 = vpop.permute.xlu0 %4735
      %4739 = vset.pattern.permute.xlu0 0
      %4740 = vperm.xlu0 %4739, %v3664
      %v4741 = vpop.permute.xlu0 %4740
      %4744 = vset.pattern.permute.xlu0 0
      %4745 = vperm.xlu0 %4744, %v3665
      %v4746 = vpop.permute.xlu0 %4745
      %4749 = vset.pattern.permute.xlu0 0
      %4750 = vperm.xlu0 %4749, %v3666
      %v4751 = vpop.permute.xlu0 %4750
      %4754 = vset.pattern.permute.xlu0 0
      %4755 = vperm.xlu0 %4754, %v3667
      %v4756 = vpop.permute.xlu0 %4755
      %4759 = vset.pattern.permute.xlu0 0
      %4760 = vperm.xlu0 %4759, %v3668
      %v4761 = vpop.permute.xlu0 %4760
      %4764 = vset.pattern.permute.xlu0 0
      %4765 = vperm.xlu0 %4764, %v3669
      %v4766 = vpop.permute.xlu0 %4765
      %4769 = vset.pattern.permute.xlu0 0
      %4770 = vperm.xlu0 %4769, %v3670
      %v4771 = vpop.permute.xlu0 %4770
      %4774 = vset.pattern.permute.xlu0 0
      %4775 = vperm.xlu0 %4774, %v3671
      %v4776 = vpop.permute.xlu0 %4775
      %4779 = vset.pattern.permute.xlu0 0
      %4780 = vperm.xlu0 %4779, %v3672
      %v4781 = vpop.permute.xlu0 %4780
      %4784 = vset.pattern.permute.xlu0 0
      %4785 = vperm.xlu0 %4784, %v3673
      %v4786 = vpop.permute.xlu0 %4785
      %4789 = vset.pattern.permute.xlu0 0
      %4790 = vperm.xlu0 %4789, %v3674
      %v4791 = vpop.permute.xlu0 %4790
      %4794 = vset.pattern.permute.xlu0 0
      %4795 = vperm.xlu0 %4794, %v3675
      %v4796 = vpop.permute.xlu0 %4795
      %4799 = vset.pattern.permute.xlu0 0
      %4800 = vperm.xlu0 %4799, %v3676
      %v4801 = vpop.permute.xlu0 %4800
      %4804 = vset.pattern.permute.xlu0 0
      %4805 = vperm.xlu0 %4804, %v3677
      %v4806 = vpop.permute.xlu0 %4805
      %4809 = vset.pattern.permute.xlu0 0
      %4810 = vperm.xlu0 %4809, %v3678
      %v4811 = vpop.permute.xlu0 %4810
      %v4813 = vadd.f32 %v4519, %v4606
      %v4814 = vadd.f32 %v4520, %v4606
      %v4815 = vadd.f32 %v4521, %v4611
      %v4816 = vadd.f32 %v4522, %v4611
      %v4817 = vadd.f32 %v4523, %v4616
      %v4818 = vadd.f32 %v4524, %v4616
      %v4819 = vadd.f32 %v4525, %v4621
      %v4820 = vadd.f32 %v4526, %v4621
      %v4821 = vadd.f32 %v4527, %v4626
      %v4822 = vadd.f32 %v4528, %v4626
      %v4823 = vadd.f32 %v4529, %v4631
      %v4824 = vadd.f32 %v4530, %v4631
      %v4825 = vadd.f32 %v4531, %v4636
      %v4826 = vadd.f32 %v4532, %v4636
      %v4827 = vadd.f32 %v4533, %v4641
      %v4828 = vadd.f32 %v4534, %v4641
      %v4829 = vadd.f32 %v4535, %v4646
      %v4830 = vadd.f32 %v4536, %v4646
      %v4831 = vadd.f32 %v4537, %v4651
      %v4832 = vadd.f32 %v4538, %v4651
      %v4833 = vadd.f32 %v4539, %v4656
      %v4834 = vadd.f32 %v4540, %v4656
      %v4835 = vadd.f32 %v4541, %v4661
      %v4836 = vadd.f32 %v4542, %v4661
      %v4837 = vadd.f32 %v4543, %v4666
      %v4838 = vadd.f32 %v4544, %v4666
      %v4839 = vadd.f32 %v4545, %v4671
      %v4840 = vadd.f32 %v4546, %v4671
      %v4841 = vadd.f32 %v4547, %v4676
      %v4842 = vadd.f32 %v4548, %v4676
      %v4843 = vadd.f32 %v4549, %v4681
      %v4844 = vadd.f32 %v4550, %v4681
      %v4845 = vadd.f32 %v4551, %v4686
      %v4846 = vadd.f32 %v4552, %v4686
      %v4847 = vadd.f32 %v4553, %v4691
      %v4848 = vadd.f32 %v4554, %v4691
      %v4849 = vadd.f32 %v4555, %v4696
      %v4850 = vadd.f32 %v4556, %v4696
      %v4851 = vadd.f32 %v4557, %v4701
      %v4852 = vadd.f32 %v4558, %v4701
      %v4853 = vadd.f32 %v4559, %v4706
      %v4854 = vadd.f32 %v4560, %v4706
      %v4855 = vadd.f32 %v4561, %v4711
      %v4856 = vadd.f32 %v4562, %v4711
      %v4857 = vadd.f32 %v4563, %v4716
      %v4858 = vadd.f32 %v4564, %v4716
      %v4859 = vadd.f32 %v4565, %v4721
      %v4860 = vadd.f32 %v4566, %v4721
      %v4861 = vadd.f32 %v4567, %v4726
      %v4862 = vadd.f32 %v4568, %v4726
      %v4863 = vadd.f32 %v4569, %v4731
      %v4864 = vadd.f32 %v4570, %v4731
      %v4865 = vadd.f32 %v4571, %v4736
      %v4866 = vadd.f32 %v4572, %v4736
      %v4867 = vadd.f32 %v4573, %v4741
      %v4868 = vadd.f32 %v4574, %v4741
      %v4869 = vadd.f32 %v4575, %v4746
      %v4870 = vadd.f32 %v4576, %v4746
      %v4871 = vadd.f32 %v4577, %v4751
      %v4872 = vadd.f32 %v4578, %v4751
      %v4873 = vadd.f32 %v4579, %v4756
      %v4874 = vadd.f32 %v4580, %v4756
      %v4875 = vadd.f32 %v4581, %v4761
      %v4876 = vadd.f32 %v4582, %v4761
      %v4877 = vadd.f32 %v4583, %v4766
      %v4878 = vadd.f32 %v4584, %v4766
      %v4879 = vadd.f32 %v4585, %v4771
      %v4880 = vadd.f32 %v4586, %v4771
      %v4881 = vadd.f32 %v4587, %v4776
      %v4882 = vadd.f32 %v4588, %v4776
      %v4883 = vadd.f32 %v4589, %v4781
      %v4884 = vadd.f32 %v4590, %v4781
      %v4885 = vadd.f32 %v4591, %v4786
      %v4886 = vadd.f32 %v4592, %v4786
      %v4887 = vadd.f32 %v4593, %v4791
      %v4888 = vadd.f32 %v4594, %v4791
      %v4889 = vadd.f32 %v4595, %v4796
      %v4890 = vadd.f32 %v4596, %v4796
      %v4891 = vadd.f32 %v4597, %v4801
      %v4892 = vadd.f32 %v4598, %v4801
      %v4893 = vadd.f32 %v4599, %v4806
      %v4894 = vadd.f32 %v4600, %v4806
      %v4895 = vadd.f32 %v4601, %v4811
      %v4896 = vadd.f32 %v4602, %v4811
      %4897 = vst [vmem:[%s201] sm:$0xff] %v4813
      %4898 = vst.msk [vmem:[%s201 + $0x8] sm:$0xff] %vm1860, %v4814
      %4899 = vst [vmem:[%s201 + $0x10] sm:$0xff] %v4815
      %4900 = vst.msk [vmem:[%s201 + $0x18] sm:$0xff] %vm1860, %v4816
      %4901 = vst [vmem:[%s201 + $0x20] sm:$0xff] %v4817
      %4902 = vst.msk [vmem:[%s201 + $0x28] sm:$0xff] %vm1860, %v4818
      %4903 = vst [vmem:[%s201 + $0x30] sm:$0xff] %v4819
      %4904 = vst.msk [vmem:[%s201 + $0x38] sm:$0xff] %vm1860, %v4820
      %4905 = vst [vmem:[%s201 + $0x40] sm:$0xff] %v4821
      %4906 = vst.msk [vmem:[%s201 + $0x48] sm:$0xff] %vm1860, %v4822
      %4907 = vst [vmem:[%s201 + $0x50] sm:$0xff] %v4823
      %4908 = vst.msk [vmem:[%s201 + $0x58] sm:$0xff] %vm1860, %v4824
      %4909 = vst [vmem:[%s201 + $0x60] sm:$0xff] %v4825
      %4910 = vst.msk [vmem:[%s201 + $0x68] sm:$0xff] %vm1860, %v4826
      %4911 = vst [vmem:[%s201 + $0x70] sm:$0xff] %v4827
      %4912 = vst.msk [vmem:[%s201 + $0x78] sm:$0xff] %vm1860, %v4828
      %4913 = vst [vmem:[%s201 + $0x80] sm:$0xff] %v4829
      %4914 = vst.msk [vmem:[%s201 + $0x88] sm:$0xff] %vm1860, %v4830
      %4915 = vst [vmem:[%s201 + $0x90] sm:$0xff] %v4831
      %4916 = vst.msk [vmem:[%s201 + $0x98] sm:$0xff] %vm1860, %v4832
      %4917 = vst [vmem:[%s201 + $0xa0] sm:$0xff] %v4833
      %4918 = vst.msk [vmem:[%s201 + $0xa8] sm:$0xff] %vm1860, %v4834
      %4919 = vst [vmem:[%s201 + $0xb0] sm:$0xff] %v4835
      %4920 = vst.msk [vmem:[%s201 + $0xb8] sm:$0xff] %vm1860, %v4836
      %4921 = vst [vmem:[%s201 + $0xc0] sm:$0xff] %v4837
      %4922 = vst.msk [vmem:[%s201 + $0xc8] sm:$0xff] %vm1860, %v4838
      %4923 = vst [vmem:[%s201 + $0xd0] sm:$0xff] %v4839
      %4924 = vst.msk [vmem:[%s201 + $0xd8] sm:$0xff] %vm1860, %v4840
      %4925 = vst [vmem:[%s201 + $0xe0] sm:$0xff] %v4841
      %4926 = vst.msk [vmem:[%s201 + $0xe8] sm:$0xff] %vm1860, %v4842
      %4927 = vst [vmem:[%s201 + $0xf0] sm:$0xff] %v4843
      %4928 = vst.msk [vmem:[%s201 + $0xf8] sm:$0xff] %vm1860, %v4844
      %4929 = vst [vmem:[%s201 + $0x100] sm:$0xff] %v4845
      %4930 = vst.msk [vmem:[%s201 + $0x108] sm:$0xff] %vm1860, %v4846
      %4931 = vst [vmem:[%s201 + $0x110] sm:$0xff] %v4847
      %4932 = vst.msk [vmem:[%s201 + $0x118] sm:$0xff] %vm1860, %v4848
      %4933 = vst [vmem:[%s201 + $0x120] sm:$0xff] %v4849
      %4934 = vst.msk [vmem:[%s201 + $0x128] sm:$0xff] %vm1860, %v4850
      %4935 = vst [vmem:[%s201 + $0x130] sm:$0xff] %v4851
      %4936 = vst.msk [vmem:[%s201 + $0x138] sm:$0xff] %vm1860, %v4852
      %4937 = vst [vmem:[%s201 + $0x140] sm:$0xff] %v4853
      %4938 = vst.msk [vmem:[%s201 + $0x148] sm:$0xff] %vm1860, %v4854
      %4939 = vst [vmem:[%s201 + $0x150] sm:$0xff] %v4855
      %4940 = vst.msk [vmem:[%s201 + $0x158] sm:$0xff] %vm1860, %v4856
      %4941 = vst [vmem:[%s201 + $0x160] sm:$0xff] %v4857
      %4942 = vst.msk [vmem:[%s201 + $0x168] sm:$0xff] %vm1860, %v4858
      %4943 = vst [vmem:[%s201 + $0x170] sm:$0xff] %v4859
      %4944 = vst.msk [vmem:[%s201 + $0x178] sm:$0xff] %vm1860, %v4860
      %4945 = vst [vmem:[%s201 + $0x180] sm:$0xff] %v4861
      %4946 = vst.msk [vmem:[%s201 + $0x188] sm:$0xff] %vm1860, %v4862
      %4947 = vst [vmem:[%s201 + $0x190] sm:$0xff] %v4863
      %4948 = vst.msk [vmem:[%s201 + $0x198] sm:$0xff] %vm1860, %v4864
      %4949 = vst [vmem:[%s201 + $0x1a0] sm:$0xff] %v4865
      %4950 = vst.msk [vmem:[%s201 + $0x1a8] sm:$0xff] %vm1860, %v4866
      %4951 = vst [vmem:[%s201 + $0x1b0] sm:$0xff] %v4867
      %4952 = vst.msk [vmem:[%s201 + $0x1b8] sm:$0xff] %vm1860, %v4868
      %4953 = vst [vmem:[%s201 + $0x1c0] sm:$0xff] %v4869
      %4954 = vst.msk [vmem:[%s201 + $0x1c8] sm:$0xff] %vm1860, %v4870
      %4955 = vst [vmem:[%s201 + $0x1d0] sm:$0xff] %v4871
      %4956 = vst.msk [vmem:[%s201 + $0x1d8] sm:$0xff] %vm1860, %v4872
      %4957 = vst [vmem:[%s201 + $0x1e0] sm:$0xff] %v4873
      %4958 = vst.msk [vmem:[%s201 + $0x1e8] sm:$0xff] %vm1860, %v4874
      %4959 = vst [vmem:[%s201 + $0x1f0] sm:$0xff] %v4875
      %4960 = vst.msk [vmem:[%s201 + $0x1f8] sm:$0xff] %vm1860, %v4876
      %4961 = vst [vmem:[%s201 + $0x200] sm:$0xff] %v4877
      %4962 = vst.msk [vmem:[%s201 + $0x208] sm:$0xff] %vm1860, %v4878
      %4963 = vst [vmem:[%s201 + $0x210] sm:$0xff] %v4879
      %4964 = vst.msk [vmem:[%s201 + $0x218] sm:$0xff] %vm1860, %v4880
      %4965 = vst [vmem:[%s201 + $0x220] sm:$0xff] %v4881
      %4966 = vst.msk [vmem:[%s201 + $0x228] sm:$0xff] %vm1860, %v4882
      %4967 = vst [vmem:[%s201 + $0x230] sm:$0xff] %v4883
      %4968 = vst.msk [vmem:[%s201 + $0x238] sm:$0xff] %vm1860, %v4884
      %4969 = vst [vmem:[%s201 + $0x240] sm:$0xff] %v4885
      %4970 = vst.msk [vmem:[%s201 + $0x248] sm:$0xff] %vm1860, %v4886
      %4971 = vst [vmem:[%s201 + $0x250] sm:$0xff] %v4887
      %4972 = vst.msk [vmem:[%s201 + $0x258] sm:$0xff] %vm1860, %v4888
      %4973 = vst [vmem:[%s201 + $0x260] sm:$0xff] %v4889
      %4974 = vst.msk [vmem:[%s201 + $0x268] sm:$0xff] %vm1860, %v4890
      %4975 = vst [vmem:[%s201 + $0x270] sm:$0xff] %v4891
      %4976 = vst.msk [vmem:[%s201 + $0x278] sm:$0xff] %vm1860, %v4892
      %4977 = vst [vmem:[%s201 + $0x280] sm:$0xff] %v4893
      %4978 = vst.msk [vmem:[%s201 + $0x288] sm:$0xff] %vm1860, %v4894
      %4979 = vst [vmem:[%s201 + $0x290] sm:$0xff] %v4895
      %4980 = vst.msk [vmem:[%s201 + $0x298] sm:$0xff] %vm1860, %v4896
      %s4981 = smul.u32 42, %s15
      %p4982 = scmp.lt.s32.totalorder %s4981, 83
      %s4983 = scalar_select %p4982, %s4981, 83
      %s4984 = smul.addr %s4983, 2
      %s4985 = smul.addr %s4984, 8
      %s4986 = scalar_lea.vmem %s4, %s4985
      // Predicated region
      $region37: #{tpu_custom_call.1} parent=35 // pred_check
        %p4987 = pneg %p122
      $region38: #{tpu_custom_call.1} parent=35 // pred_check_branch
        %4989 = sbr.rel (%p4987) target = $region40
      $region39: #{tpu_custom_call.1} parent=35 // pred_region
        %s4990 = smul.u32 42, %s15
      $region40: #{tpu_custom_call.1} parent=35 // pred_fallthru
        _
    $region36: #{tpu_custom_call.1} parent=5 // pred_fallthru
      _
    %p4991 = scmp.le.s32.totalorder 2, %s10
    // Predicated region
    $region41: #{tpu_custom_call.1} parent=5 // pred_check
      %p4992 = pneg %p4991
    $region42: #{tpu_custom_call.1} parent=5 // pred_check_branch
      %4994 = sbr.rel (%p4992) target = $region44
    $region43: #{tpu_custom_call.1} parent=5 // pred_region
      %s4995 = ssub.s32 %s10, 2
      // Predicated region
      $region45: #{tpu_custom_call.1} parent=43 // pred_check
        %p4996 = pneg %p128
      $region46: #{tpu_custom_call.1} parent=43 // pred_check_branch
        %4998 = sbr.rel (%p4996) target = $region48
      $region47: #{tpu_custom_call.1} parent=43 // pred_region
        %s4999 = smul.u32 42, %s16
        %p5000 = scmp.lt.s32.totalorder %s4999, 83
        %s5001 = scalar_select %p5000, %s4999, 83
        %s5002 = smul.addr %s5001, 2
        %s5003 = smul.addr %s5002, 8
        %s5004 = scalar_lea.vmem %s4, %s5003
      $region48: #{tpu_custom_call.1} parent=43 // pred_fallthru
        _
    $region44: #{tpu_custom_call.1} parent=5 // pred_fallthru
      _
  $region6: #{tpu_custom_call.1} parent=0 // loop_footer
    %s14 = sadd.s32 1, %s10
  $region7: #{tpu_custom_call.1} parent=0 // loop_footer_branch
    %9 = sbr.rel target = $region3
  $region8: #{tpu_custom_call.1} parent=0 // loop_exit
    _

</llo_original>
